<compile_context>
chip_gen: v5e
topology: v5e:2x2
jax: 0.10.0
libtpu: 0.0.40
codegen_flags: <defaults>
</compile_context>

<pallas_src>
import functools

import jax
import jax.numpy as jnp
from jax.experimental import pallas as pl
from jax.experimental.pallas import tpu as pltpu

CPAD = 128  # lane-dense channel padding (vreg lane width)

# Older jax releases exposed this as TPUCompilerParams; be tolerant.
_CompilerParams = getattr(pltpu, "CompilerParams", None) or getattr(
    pltpu, "TPUCompilerParams")


def _round_up(x, m):
    return ((x + m - 1) // m) * m


# ----------------------------- Pallas kernels ------------------------------

def _gemm_bn_act_kernel(a_ref, w_ref, b_ref, o_ref, acc_ref, *, relu):
    """out = maybe_relu(A @ W + bias); tiled over (M, N, K), acc in f32 VMEM."""
    k = pl.program_id(2)

    @pl.when(k == 0)
    def _init():
        acc_ref[...] = jnp.zeros_like(acc_ref)

    acc_ref[...] += jnp.dot(a_ref[...], w_ref[...],
                            preferred_element_type=jnp.float32)

    @pl.when(k == pl.num_programs(2) - 1)
    def _finalize():
        out = acc_ref[...] + b_ref[...]
        if relu:
            out = jnp.maximum(out, 0.0)
        o_ref[...] = out.astype(o_ref.dtype)          # single lane-dense store


def _gemm_bn_res_act_kernel(a_ref, w_ref, b_ref, r_ref, o_ref, acc_ref, *, relu):
    """out = maybe_relu(A @ W + bias + residual); residual added in f32 epilogue."""
    k = pl.program_id(2)

    @pl.when(k == 0)
    def _init():
        acc_ref[...] = jnp.zeros_like(acc_ref)

    acc_ref[...] += jnp.dot(a_ref[...], w_ref[...],
                            preferred_element_type=jnp.float32)

    @pl.when(k == pl.num_programs(2) - 1)
    def _finalize():
        out = acc_ref[...] + b_ref[...] + r_ref[...].astype(jnp.float32)
        if relu:
            out = jnp.maximum(out, 0.0)
        o_ref[...] = out.astype(o_ref.dtype)


# --------------------------- GEMM launch wrapper ----------------------------

def _pick_tk(K):
    for t in (512, 384, 256, 128):
        if K % t == 0:
            return t
    return K


def fused_conv_gemm(patches, w, bias, residual=None, relu=True,
                    out_dtype=jnp.bfloat16):
    """conv-as-GEMM + folded BN bias + optional residual + optional ReLU.

    patches: [M, K]  bf16 (K already a multiple of 128)
    w:       [K, Np] bf16 (Np = channel-padded C_out, multiple of 128)
    bias:    [Np]    f32
    residual:[M, Np] bf16 or None
    """
    M, K = patches.shape
    Kw, Npad = w.shape
    assert K == Kw and K % 128 == 0 and Npad % 128 == 0

    # ---- M tiling (sublane dim must be a multiple of 8) ----
    if M <= 128:
        tm = _round_up(M, 8)
        M_pad = tm
    else:
        tm = 128
        M_pad = _round_up(M, tm)
    if M_pad > M:
        patches = jnp.pad(patches, ((0, M_pad - M), (0, 0)))
        if residual is not None:
            residual = jnp.pad(residual, ((0, M_pad - M), (0, 0)))

    tn = 128
    tk = _pick_tk(K)
    grid = (M_pad // tm, Npad // tn, K // tk)

    bias2 = bias.reshape(1, Npad).astype(jnp.float32)

    a_spec = pl.BlockSpec((tm, tk), lambda i, j, k: (i, k))
    w_spec = pl.BlockSpec((tk, tn), lambda i, j, k: (k, j))
    b_spec = pl.BlockSpec((1, tn), lambda i, j, k: (0, j))
    o_spec = pl.BlockSpec((tm, tn), lambda i, j, k: (i, j))

    if residual is None:
        kernel = functools.partial(_gemm_bn_act_kernel, relu=relu)
        in_specs = [a_spec, w_spec, b_spec]
        args = (patches, w, bias2)
    else:
        r_spec = pl.BlockSpec((tm, tn), lambda i, j, k: (i, j))
        kernel = functools.partial(_gemm_bn_res_act_kernel, relu=relu)
        in_specs = [a_spec, w_spec, b_spec, r_spec]
        args = (patches, w, bias2, residual)

    out = pl.pallas_call(
        kernel,
        out_shape=jax.ShapeDtypeStruct((M_pad, Npad), out_dtype),
        grid_spec=pltpu.PrefetchScalarGridSpec(
            num_scalar_prefetch=0,
            grid=grid,
            in_specs=in_specs,
            out_specs=o_spec,
            scratch_shapes=[pltpu.VMEM((tm, tn), jnp.float32)]),
        compiler_params=_CompilerParams(
            dimension_semantics=("parallel", "parallel", "arbitrary"),
            vmem_limit_bytes=32 * 1024 * 1024),
    )(*args)

    return out[:M] if M_pad > M else out


# ------------------------------- JAX glue -----------------------------------

def im2col(x, k, stride, pad, k_pad):
    """x: NHWC -> bf16 patches [N*Ho*Wo, k_pad] (kernel-pos-major, channel-minor,
    zero-padded along K to k_pad, a multiple of 128)."""
    N, H, W, C = x.shape
    Ho = (H + 2 * pad - k) // stride + 1
    Wo = (W + 2 * pad - k) // stride + 1
    xp = jnp.pad(x, ((0, 0), (pad, pad), (pad, pad), (0, 0)))
    cols = []
    for i in range(k):
        for j in range(k):
            cols.append(xp[:, i:i + stride * (Ho - 1) + 1:stride,
                           j:j + stride * (Wo - 1) + 1:stride, :])
    patches = jnp.stack(cols, axis=3).reshape(N * Ho * Wo, k * k * C)
    if k_pad > k * k * C:
        patches = jnp.pad(patches, ((0, 0), (0, k_pad - k * k * C)))
    # TODO(synk): build patches in-kernel from a pl.ANY NHWC ref for large shapes.
    return patches.astype(jnp.bfloat16), Ho, Wo


def conv_bn(x, p, stride, relu=True, residual=None):
    """Conv2d(no bias) + BatchNorm(eval) [+ residual] [+ ReLU] via Pallas GEMM."""
    N = x.shape[0]
    patches, Ho, Wo = im2col(x, p["k"], stride, p["pad"], p["w"].shape[0])
    M = N * Ho * Wo
    cout_pad = p["w"].shape[1]
    res_flat = None
    if residual is not None:
        res_flat = residual.reshape(M, cout_pad).astype(jnp.bfloat16)
    out = fused_conv_gemm(patches, p["w"], p["b"], residual=res_flat, relu=relu)
    return out.reshape(N, Ho, Wo, cout_pad)


def maxpool_3x3_s2_p1(x):
    """MaxPool2d(kernel=3, stride=2, padding=1) on NHWC input.

    Done as a fused plain-JAX 9-view max (perf review: avoids a 9x HBM
    materialization + an extra sub-128-lane Pallas kernel launch)."""
    N, H, W, C = x.shape
    Ho = (H + 2 - 3) // 2 + 1
    Wo = (W + 2 - 3) // 2 + 1
    xp = jnp.pad(x, ((0, 0), (1, 1), (1, 1), (0, 0)),
                 constant_values=-jnp.inf)
    out = None
    for i in range(3):
        for j in range(3):
            v = xp[:, i:i + 2 * (Ho - 1) + 1:2, j:j + 2 * (Wo - 1) + 1:2, :]
            out = v if out is None else jnp.maximum(out, v)
    return out


def basic_block(x, p):
    """torchvision BasicBlock: conv3x3-bn-relu, conv3x3-bn, +identity, relu."""
    s = p["stride"]
    out = conv_bn(x, p["conv1"], s, relu=True)
    if p["down"] is not None:
        identity = conv_bn(x, p["down"], s, relu=False)
    else:
        identity = x
    # conv2 + bn2 + residual add + final relu fused in one tiled kernel
    out = conv_bn(out, p["conv2"], 1, relu=True, residual=identity)
    return out


# ------------------------- deterministic parameters -------------------------

def init_conv_bn(key, cin, cout, k, pad, cin_pad=CPAD, cout_pad=CPAD):
    """Conv+BN folded into a zero-padded, lane-dense GEMM weight matrix.

    Layout: rows = (ki*k + kj)*cin_pad + c (zero rows for padded input channels
    and for K padding up to a multiple of 128), cols = cout padded to cout_pad.
    Padded output channels have zero weight and zero bias, so they stay exactly
    zero through the whole network."""
    kw, kg, kb, km, kv = jax.random.split(key, 5)
    fan_in = cin * k * k
    w = jax.random.normal(kw, (cout, cin, k, k), jnp.float32) / jnp.sqrt(fan_in)
    gamma = 1.0 + 0.1 * jax.random.normal(kg, (cout,), jnp.float32)
    beta = 0.1 * jax.random.normal(kb, (cout,), jnp.float32)
    mean = 0.1 * jax.random.normal(km, (cout,), jnp.float32)
    var = 1.0 + 0.1 * jax.random.uniform(kv, (cout,), jnp.float32)
    eps = 1e-5
    scale = gamma / jnp.sqrt(var + eps)
    bias = beta - mean * scale

    w_scaled = jnp.transpose(w, (2, 3, 1, 0)) * scale[None, None, None, :]  # [k,k,cin,cout]
    w_full = jnp.zeros((k, k, cin_pad, cout_pad), jnp.float32)
    w_full = w_full.at[:, :, :cin, :cout].set(w_scaled)
    K = k * k * cin_pad
    K_pad = _round_up(K, 128)
    w_mat = w_full.reshape(K, cout_pad)
    if K_pad > K:
        w_mat = jnp.pad(w_mat, ((0, K_pad - K), (0, 0)))
    bias_full = jnp.zeros((cout_pad,), jnp.float32).at[:cout].set(bias)
    return {"w": w_mat.astype(jnp.bfloat16), "b": bias_full,
            "k": k, "pad": pad, "cout": cout}


def init_resnet_params(key, in_ch=3, widths=(8, 16, 32, 64), blocks=(2, 2, 2, 2)):
    """Small ResNet-18-style backbone (BasicBlock x2 per layer, reduced widths)."""
    keys = iter(jax.random.split(key, 64))
    params = {"conv1": init_conv_bn(next(keys), in_ch, widths[0], 7, 3,
                                    cin_pad=in_ch),
              "layers": [], "widths": widths}
    cin = widths[0]
    for li, (w, nb) in enumerate(zip(widths, blocks)):
        layer = []
        for bi in range(nb):
            s = (1 if li == 0 else 2) if bi == 0 else 1
            c_in = cin if bi == 0 else w
            need_down = (s != 1) or (c_in != w)
            layer.append({
                "conv1": init_conv_bn(next(keys), c_in, w, 3, 1),
                "conv2": init_conv_bn(next(keys), w, w, 3, 1),
                "down": init_conv_bn(next(keys), c_in, w, 1, 0) if need_down else None,
                "stride": s,
            })
        params["layers"].append(layer)
        cin = w
    return params


# ------------------------------ forward pass --------------------------------

def resnet_with_features(params, x_nchw):
    """Returns [f1, f2, f3, f4_penultimate, f4_last] in NCHW f32 (PyTorch order)."""
    widths = params["widths"]
    x = jnp.transpose(x_nchw, (0, 2, 3, 1)).astype(jnp.float32)   # NCHW -> NHWC (C=3)
    # layer0: conv1(7x7,s2) + bn1 + relu + maxpool(3x3,s2,p1)
    x = conv_bn(x, params["conv1"], stride=2, relu=True)          # bf16, C padded to 128
    x = maxpool_3x3_s2_p1(x)

    feats = []   # (tensor_NHWC_padded, logical_channels)
    for li, layer in enumerate(params["layers"]):
        layer_outs = []
        for block in layer:
            x = basic_block(x, block)
            layer_outs.append(x)
        if li < 3:
            feats.append((x, widths[li]))                 # f1, f2, f3
        else:
            feats.append((layer_outs[-2], widths[li]))    # f4_penultimate
            feats.append((layer_outs[-1], widths[li]))    # f4_last
    # strip channel padding, NHWC -> NCHW, back to f32 to match the PyTorch module
    return [jnp.transpose(f[..., :c], (0, 3, 1, 2)).astype(jnp.float32)
            for f, c in feats]


if __name__ == "__main__":
    key = jax.random.PRNGKey(0)
    kp, kx = jax.random.split(key)
    params = init_resnet_params(kp)
    x = jax.random.normal(kx, (2, 3, 32, 32), jnp.float32)         # NCHW input
    fwd = jax.jit(lambda inp: resnet_with_features(params, inp))
    outs = jax.block_until_ready(fwd(x))
    expected = [(2, 8, 8, 8), (2, 16, 4, 4), (2, 32, 2, 2),
                (2, 64, 1, 1), (2, 64, 1, 1)]
    assert [tuple(o.shape) for o in outs] == expected, \
        [tuple(o.shape) for o in outs]
    assert all(o.dtype == jnp.float32 for o in outs)
    print("KERNEL_OK")
</pallas_src>

<mosaic_0001>
module attributes {stable_mosaic.version = 11 : i64} {
  func.func @_gemm_bn_act_kernel(%arg0: i32, %arg1: i32, %arg2: i32, %arg3: memref<128x256xbf16, #tpu.memory_space<vmem>>, %arg4: memref<256x128xbf16, #tpu.memory_space<vmem>>, %arg5: memref<1x128xf32, #tpu.memory_space<vmem>>, %arg6: memref<128x128xbf16, #tpu.memory_space<vmem>>, %arg7: memref<128x128xf32, #tpu.memory_space<vmem>>) attributes {dimension_semantics = [#tpu.dimension_semantics<parallel>, #tpu.dimension_semantics<parallel>, #tpu.dimension_semantics<arbitrary>], iteration_bounds = array<i64: 4, 1, 1>, scalar_prefetch = 0 : i64, scratch_operands = 1 : i64, tpu.core_type = #tpu.core_type<tc>, window_params = [{transform_indices = @transform_0, window_bounds = array<i64: 128, 256>}, {transform_indices = @transform_1, window_bounds = array<i64: 256, 128>}, {transform_indices = @transform_2, window_bounds = array<i64: 1, 128>}, {transform_indices = @transform_3, window_bounds = array<i64: 128, 128>}]} {
    %c0_i32 = arith.constant 0 : i32
    %0 = arith.cmpi eq, %arg2, %c0_i32 : i32
    %1 = arith.extui %0 : i1 to i32
    %c0_i32_0 = arith.constant 0 : i32
    %2 = arith.cmpi ne, %1, %c0_i32_0 : i32
    scf.if %2 {
      %cst_10 = arith.constant 0.000000e+00 : f32
      %12 = vector.broadcast %cst_10 : f32 to vector<128x128xf32>
      %c0_11 = arith.constant 0 : index
      %c0_12 = arith.constant 0 : index
      %13 = vector.load %arg7[%c0_11, %c0_12] : memref<128x128xf32, #tpu.memory_space<vmem>>, vector<128x128xf32>
      tpu.vector_store %arg7[%c0_11, %c0_12], %12 {strides = array<i32>} : memref<128x128xf32, #tpu.memory_space<vmem>>, vector<128x128xf32>,
    } else {
    }
    %c0 = arith.constant 0 : index
    %c0_1 = arith.constant 0 : index
    %3 = vector.load %arg7[%c0, %c0_1] : memref<128x128xf32, #tpu.memory_space<vmem>>, vector<128x128xf32>
    %c0_2 = arith.constant 0 : index
    %c0_3 = arith.constant 0 : index
    %4 = vector.load %arg3[%c0_2, %c0_3] : memref<128x256xbf16, #tpu.memory_space<vmem>>, vector<128x256xbf16>
    %c0_4 = arith.constant 0 : index
    %c0_5 = arith.constant 0 : index
    %5 = vector.load %arg4[%c0_4, %c0_5] : memref<256x128xbf16, #tpu.memory_space<vmem>>, vector<256x128xbf16>
    %cst = arith.constant dense<0.000000e+00> : vector<128x128xf32>
    %6 = tpu.matmul %4, %5, %cst {dimension_numbers = #tpu.dot_dimension_numbers<[1], [0], [0], [1], [0, 0, 1, 1], [], []>} : vector<128x256xbf16>, vector<256x128xbf16>, vector<128x128xf32> -> vector<128x128xf32>
    %7 = arith.addf %3, %6 : vector<128x128xf32>
    %c0_6 = arith.constant 0 : index
    %c0_7 = arith.constant 0 : index
    %8 = vector.load %arg7[%c0_6, %c0_7] : memref<128x128xf32, #tpu.memory_space<vmem>>, vector<128x128xf32>
    tpu.vector_store %arg7[%c0_6, %c0_7], %7 {strides = array<i32>} : memref<128x128xf32, #tpu.memory_space<vmem>>, vector<128x128xf32>,
    %c0_i32_8 = arith.constant 0 : i32
    %9 = arith.cmpi eq, %arg2, %c0_i32_8 : i32
    %10 = arith.extui %9 : i1 to i32
    %c0_i32_9 = arith.constant 0 : i32
    %11 = arith.cmpi ne, %10, %c0_i32_9 : i32
    scf.if %11 {
      %c0_10 = arith.constant 0 : index
      %c0_11 = arith.constant 0 : index
      %12 = vector.load %arg7[%c0_10, %c0_11] : memref<128x128xf32, #tpu.memory_space<vmem>>, vector<128x128xf32>
      %c0_12 = arith.constant 0 : index
      %c0_13 = arith.constant 0 : index
      %13 = vector.load %arg5[%c0_12, %c0_13] : memref<1x128xf32, #tpu.memory_space<vmem>>, vector<1x128xf32>
      %14 = vector.broadcast %13 : vector<1x128xf32> to vector<128x128xf32>
      %15 = arith.addf %12, %14 : vector<128x128xf32>
      %cst_14 = arith.constant 0.000000e+00 : f32
      %16 = vector.broadcast %cst_14 : f32 to vector<128x128xf32>
      %17 = arith.maximumf %15, %16 : vector<128x128xf32>
      %18 = arith.truncf %17 : vector<128x128xf32> to vector<128x128xbf16>
      %c0_15 = arith.constant 0 : index
      %c0_16 = arith.constant 0 : index
      %19 = vector.load %arg6[%c0_15, %c0_16] : memref<128x128xbf16, #tpu.memory_space<vmem>>, vector<128x128xbf16>
      tpu.vector_store %arg6[%c0_15, %c0_16], %18 {strides = array<i32>} : memref<128x128xbf16, #tpu.memory_space<vmem>>, vector<128x128xbf16>,
    } else {
    }
    return
  }
  func.func @transform_0(%arg0: i32, %arg1: i32, %arg2: i32) -> (i32, i32) {
    %c0_i32 = arith.constant 0 : i32
    return %arg0, %arg2 : i32, i32
  }
  func.func @transform_1(%arg0: i32, %arg1: i32, %arg2: i32) -> (i32, i32) {
    %c0_i32 = arith.constant 0 : i32
    return %arg2, %arg1 : i32, i32
  }
  func.func @transform_2(%arg0: i32, %arg1: i32, %arg2: i32) -> (i32, i32) {
    %c0_i32 = arith.constant 0 : i32
    %c0_i32_0 = arith.constant 0 : i32
    return %c0_i32, %arg1 : i32, i32
  }
  func.func @transform_3(%arg0: i32, %arg1: i32, %arg2: i32) -> (i32, i32) {
    %c0_i32 = arith.constant 0 : i32
    return %arg0, %arg1 : i32, i32
  }
}

module attributes {stable_mosaic.version = 11 : i64} {
  func.func @_gemm_bn_act_kernel(%arg0: i32, %arg1: i32, %arg2: i32, %arg3: memref<128x384xbf16, #tpu.memory_space<vmem>>, %arg4: memref<384x128xbf16, #tpu.memory_space<vmem>>, %arg5: memref<1x128xf32, #tpu.memory_space<vmem>>, %arg6: memref<128x128xbf16, #tpu.memory_space<vmem>>, %arg7: memref<128x128xf32, #tpu.memory_space<vmem>>) attributes {dimension_semantics = [#tpu.dimension_semantics<parallel>, #tpu.dimension_semantics<parallel>, #tpu.dimension_semantics<arbitrary>], iteration_bounds = array<i64: 1, 1, 3>, scalar_prefetch = 0 : i64, scratch_operands = 1 : i64, tpu.core_type = #tpu.core_type<tc>, window_params = [{transform_indices = @transform_0, window_bounds = array<i64: 128, 384>}, {transform_indices = @transform_1, window_bounds = array<i64: 384, 128>}, {transform_indices = @transform_2, window_bounds = array<i64: 1, 128>}, {transform_indices = @transform_3, window_bounds = array<i64: 128, 128>}]} {
    %c0_i32 = arith.constant 0 : i32
    %0 = arith.cmpi eq, %arg2, %c0_i32 : i32
    %1 = arith.extui %0 : i1 to i32
    %c0_i32_0 = arith.constant 0 : i32
    %2 = arith.cmpi ne, %1, %c0_i32_0 : i32
    scf.if %2 {
      %cst_9 = arith.constant 0.000000e+00 : f32
      %12 = vector.broadcast %cst_9 : f32 to vector<128x128xf32>
      %c0_10 = arith.constant 0 : index
      %c0_11 = arith.constant 0 : index
      %13 = vector.load %arg7[%c0_10, %c0_11] : memref<128x128xf32, #tpu.memory_space<vmem>>, vector<128x128xf32>
      tpu.vector_store %arg7[%c0_10, %c0_11], %12 {strides = array<i32>} : memref<128x128xf32, #tpu.memory_space<vmem>>, vector<128x128xf32>,
    } else {
    }
    %c0 = arith.constant 0 : index
    %c0_1 = arith.constant 0 : index
    %3 = vector.load %arg7[%c0, %c0_1] : memref<128x128xf32, #tpu.memory_space<vmem>>, vector<128x128xf32>
    %c0_2 = arith.constant 0 : index
    %c0_3 = arith.constant 0 : index
    %4 = vector.load %arg3[%c0_2, %c0_3] : memref<128x384xbf16, #tpu.memory_space<vmem>>, vector<128x384xbf16>
    %c0_4 = arith.constant 0 : index
    %c0_5 = arith.constant 0 : index
    %5 = vector.load %arg4[%c0_4, %c0_5] : memref<384x128xbf16, #tpu.memory_space<vmem>>, vector<384x128xbf16>
    %cst = arith.constant dense<0.000000e+00> : vector<128x128xf32>
    %6 = tpu.matmul %4, %5, %cst {dimension_numbers = #tpu.dot_dimension_numbers<[1], [0], [0], [1], [0, 0, 1, 1], [], []>} : vector<128x384xbf16>, vector<384x128xbf16>, vector<128x128xf32> -> vector<128x128xf32>
    %7 = arith.addf %3, %6 : vector<128x128xf32>
    %c0_6 = arith.constant 0 : index
    %c0_7 = arith.constant 0 : index
    %8 = vector.load %arg7[%c0_6, %c0_7] : memref<128x128xf32, #tpu.memory_space<vmem>>, vector<128x128xf32>
    tpu.vector_store %arg7[%c0_6, %c0_7], %7 {strides = array<i32>} : memref<128x128xf32, #tpu.memory_space<vmem>>, vector<128x128xf32>,
    %c2_i32 = arith.constant 2 : i32
    %9 = arith.cmpi eq, %arg2, %c2_i32 : i32
    %10 = arith.extui %9 : i1 to i32
    %c0_i32_8 = arith.constant 0 : i32
    %11 = arith.cmpi ne, %10, %c0_i32_8 : i32
    scf.if %11 {
      %c0_9 = arith.constant 0 : index
      %c0_10 = arith.constant 0 : index
      %12 = vector.load %arg7[%c0_9, %c0_10] : memref<128x128xf32, #tpu.memory_space<vmem>>, vector<128x128xf32>
      %c0_11 = arith.constant 0 : index
      %c0_12 = arith.constant 0 : index
      %13 = vector.load %arg5[%c0_11, %c0_12] : memref<1x128xf32, #tpu.memory_space<vmem>>, vector<1x128xf32>
      %14 = vector.broadcast %13 : vector<1x128xf32> to vector<128x128xf32>
      %15 = arith.addf %12, %14 : vector<128x128xf32>
      %cst_13 = arith.constant 0.000000e+00 : f32
      %16 = vector.broadcast %cst_13 : f32 to vector<128x128xf32>
      %17 = arith.maximumf %15, %16 : vector<128x128xf32>
      %18 = arith.truncf %17 : vector<128x128xf32> to vector<128x128xbf16>
      %c0_14 = arith.constant 0 : index
      %c0_15 = arith.constant 0 : index
      %19 = vector.load %arg6[%c0_14, %c0_15] : memref<128x128xbf16, #tpu.memory_space<vmem>>, vector<128x128xbf16>
      tpu.vector_store %arg6[%c0_14, %c0_15], %18 {strides = array<i32>} : memref<128x128xbf16, #tpu.memory_space<vmem>>, vector<128x128xbf16>,
    } else {
    }
    return
  }
  func.func @transform_0(%arg0: i32, %arg1: i32, %arg2: i32) -> (i32, i32) {
    %c0_i32 = arith.constant 0 : i32
    return %arg0, %arg2 : i32, i32
  }
  func.func @transform_1(%arg0: i32, %arg1: i32, %arg2: i32) -> (i32, i32) {
    %c0_i32 = arith.constant 0 : i32
    return %arg2, %arg1 : i32, i32
  }
  func.func @transform_2(%arg0: i32, %arg1: i32, %arg2: i32) -> (i32, i32) {
    %c0_i32 = arith.constant 0 : i32
    %c0_i32_0 = arith.constant 0 : i32
    return %c0_i32, %arg1 : i32, i32
  }
  func.func @transform_3(%arg0: i32, %arg1: i32, %arg2: i32) -> (i32, i32) {
    %c0_i32 = arith.constant 0 : i32
    return %arg0, %arg1 : i32, i32
  }
}

module attributes {stable_mosaic.version = 11 : i64} {
  func.func @_gemm_bn_res_act_kernel(%arg0: i32, %arg1: i32, %arg2: i32, %arg3: memref<128x384xbf16, #tpu.memory_space<vmem>>, %arg4: memref<384x128xbf16, #tpu.memory_space<vmem>>, %arg5: memref<1x128xf32, #tpu.memory_space<vmem>>, %arg6: memref<128x128xbf16, #tpu.memory_space<vmem>>, %arg7: memref<128x128xbf16, #tpu.memory_space<vmem>>, %arg8: memref<128x128xf32, #tpu.memory_space<vmem>>) attributes {dimension_semantics = [#tpu.dimension_semantics<parallel>, #tpu.dimension_semantics<parallel>, #tpu.dimension_semantics<arbitrary>], iteration_bounds = array<i64: 1, 1, 3>, scalar_prefetch = 0 : i64, scratch_operands = 1 : i64, tpu.core_type = #tpu.core_type<tc>, window_params = [{transform_indices = @transform_0, window_bounds = array<i64: 128, 384>}, {transform_indices = @transform_1, window_bounds = array<i64: 384, 128>}, {transform_indices = @transform_2, window_bounds = array<i64: 1, 128>}, {transform_indices = @transform_3, window_bounds = array<i64: 128, 128>}, {transform_indices = @transform_4, window_bounds = array<i64: 128, 128>}]} {
    %c0_i32 = arith.constant 0 : i32
    %0 = arith.cmpi eq, %arg2, %c0_i32 : i32
    %1 = arith.extui %0 : i1 to i32
    %c0_i32_0 = arith.constant 0 : i32
    %2 = arith.cmpi ne, %1, %c0_i32_0 : i32
    scf.if %2 {
      %cst_9 = arith.constant 0.000000e+00 : f32
      %12 = vector.broadcast %cst_9 : f32 to vector<128x128xf32>
      %c0_10 = arith.constant 0 : index
      %c0_11 = arith.constant 0 : index
      %13 = vector.load %arg8[%c0_10, %c0_11] : memref<128x128xf32, #tpu.memory_space<vmem>>, vector<128x128xf32>
      tpu.vector_store %arg8[%c0_10, %c0_11], %12 {strides = array<i32>} : memref<128x128xf32, #tpu.memory_space<vmem>>, vector<128x128xf32>,
    } else {
    }
    %c0 = arith.constant 0 : index
    %c0_1 = arith.constant 0 : index
    %3 = vector.load %arg8[%c0, %c0_1] : memref<128x128xf32, #tpu.memory_space<vmem>>, vector<128x128xf32>
    %c0_2 = arith.constant 0 : index
    %c0_3 = arith.constant 0 : index
    %4 = vector.load %arg3[%c0_2, %c0_3] : memref<128x384xbf16, #tpu.memory_space<vmem>>, vector<128x384xbf16>
    %c0_4 = arith.constant 0 : index
    %c0_5 = arith.constant 0 : index
    %5 = vector.load %arg4[%c0_4, %c0_5] : memref<384x128xbf16, #tpu.memory_space<vmem>>, vector<384x128xbf16>
    %cst = arith.constant dense<0.000000e+00> : vector<128x128xf32>
    %6 = tpu.matmul %4, %5, %cst {dimension_numbers = #tpu.dot_dimension_numbers<[1], [0], [0], [1], [0, 0, 1, 1], [], []>} : vector<128x384xbf16>, vector<384x128xbf16>, vector<128x128xf32> -> vector<128x128xf32>
    %7 = arith.addf %3, %6 : vector<128x128xf32>
    %c0_6 = arith.constant 0 : index
    %c0_7 = arith.constant 0 : index
    %8 = vector.load %arg8[%c0_6, %c0_7] : memref<128x128xf32, #tpu.memory_space<vmem>>, vector<128x128xf32>
    tpu.vector_store %arg8[%c0_6, %c0_7], %7 {strides = array<i32>} : memref<128x128xf32, #tpu.memory_space<vmem>>, vector<128x128xf32>,
    %c2_i32 = arith.constant 2 : i32
    %9 = arith.cmpi eq, %arg2, %c2_i32 : i32
    %10 = arith.extui %9 : i1 to i32
    %c0_i32_8 = arith.constant 0 : i32
    %11 = arith.cmpi ne, %10, %c0_i32_8 : i32
    scf.if %11 {
      %c0_9 = arith.constant 0 : index
      %c0_10 = arith.constant 0 : index
      %12 = vector.load %arg8[%c0_9, %c0_10] : memref<128x128xf32, #tpu.memory_space<vmem>>, vector<128x128xf32>
      %c0_11 = arith.constant 0 : index
      %c0_12 = arith.constant 0 : index
      %13 = vector.load %arg5[%c0_11, %c0_12] : memref<1x128xf32, #tpu.memory_space<vmem>>, vector<1x128xf32>
      %14 = vector.broadcast %13 : vector<1x128xf32> to vector<128x128xf32>
      %15 = arith.addf %12, %14 : vector<128x128xf32>
      %c0_13 = arith.constant 0 : index
      %c0_14 = arith.constant 0 : index
      %16 = vector.load %arg6[%c0_13, %c0_14] : memref<128x128xbf16, #tpu.memory_space<vmem>>, vector<128x128xbf16>
      %17 = arith.extf %16 : vector<128x128xbf16> to vector<128x128xf32>
      %18 = arith.addf %15, %17 : vector<128x128xf32>
      %cst_15 = arith.constant 0.000000e+00 : f32
      %19 = vector.broadcast %cst_15 : f32 to vector<128x128xf32>
      %20 = arith.maximumf %18, %19 : vector<128x128xf32>
      %21 = arith.truncf %20 : vector<128x128xf32> to vector<128x128xbf16>
      %c0_16 = arith.constant 0 : index
      %c0_17 = arith.constant 0 : index
      %22 = vector.load %arg7[%c0_16, %c0_17] : memref<128x128xbf16, #tpu.memory_space<vmem>>, vector<128x128xbf16>
      tpu.vector_store %arg7[%c0_16, %c0_17], %21 {strides = array<i32>} : memref<128x128xbf16, #tpu.memory_space<vmem>>, vector<128x128xbf16>,
    } else {
    }
    return
  }
  func.func @transform_0(%arg0: i32, %arg1: i32, %arg2: i32) -> (i32, i32) {
    %c0_i32 = arith.constant 0 : i32
    return %arg0, %arg2 : i32, i32
  }
  func.func @transform_1(%arg0: i32, %arg1: i32, %arg2: i32) -> (i32, i32) {
    %c0_i32 = arith.constant 0 : i32
    return %arg2, %arg1 : i32, i32
  }
  func.func @transform_2(%arg0: i32, %arg1: i32, %arg2: i32) -> (i32, i32) {
    %c0_i32 = arith.constant 0 : i32
    %c0_i32_0 = arith.constant 0 : i32
    return %c0_i32, %arg1 : i32, i32
  }
  func.func @transform_3(%arg0: i32, %arg1: i32, %arg2: i32) -> (i32, i32) {
    %c0_i32 = arith.constant 0 : i32
    return %arg0, %arg1 : i32, i32
  }
  func.func @transform_4(%arg0: i32, %arg1: i32, %arg2: i32) -> (i32, i32) {
    %c0_i32 = arith.constant 0 : i32
    return %arg0, %arg1 : i32, i32
  }
}

module attributes {stable_mosaic.version = 11 : i64} {
  func.func @_gemm_bn_act_kernel(%arg0: i32, %arg1: i32, %arg2: i32, %arg3: memref<32x384xbf16, #tpu.memory_space<vmem>>, %arg4: memref<384x128xbf16, #tpu.memory_space<vmem>>, %arg5: memref<1x128xf32, #tpu.memory_space<vmem>>, %arg6: memref<32x128xbf16, #tpu.memory_space<vmem>>, %arg7: memref<32x128xf32, #tpu.memory_space<vmem>>) attributes {dimension_semantics = [#tpu.dimension_semantics<parallel>, #tpu.dimension_semantics<parallel>, #tpu.dimension_semantics<arbitrary>], iteration_bounds = array<i64: 1, 1, 3>, scalar_prefetch = 0 : i64, scratch_operands = 1 : i64, tpu.core_type = #tpu.core_type<tc>, window_params = [{transform_indices = @transform_0, window_bounds = array<i64: 32, 384>}, {transform_indices = @transform_1, window_bounds = array<i64: 384, 128>}, {transform_indices = @transform_2, window_bounds = array<i64: 1, 128>}, {transform_indices = @transform_3, window_bounds = array<i64: 32, 128>}]} {
    %c0_i32 = arith.constant 0 : i32
    %0 = arith.cmpi eq, %arg2, %c0_i32 : i32
    %1 = arith.extui %0 : i1 to i32
    %c0_i32_0 = arith.constant 0 : i32
    %2 = arith.cmpi ne, %1, %c0_i32_0 : i32
    scf.if %2 {
      %cst_9 = arith.constant 0.000000e+00 : f32
      %12 = vector.broadcast %cst_9 : f32 to vector<32x128xf32>
      %c0_10 = arith.constant 0 : index
      %c0_11 = arith.constant 0 : index
      %13 = vector.load %arg7[%c0_10, %c0_11] : memref<32x128xf32, #tpu.memory_space<vmem>>, vector<32x128xf32>
      tpu.vector_store %arg7[%c0_10, %c0_11], %12 {strides = array<i32>} : memref<32x128xf32, #tpu.memory_space<vmem>>, vector<32x128xf32>,
    } else {
    }
    %c0 = arith.constant 0 : index
    %c0_1 = arith.constant 0 : index
    %3 = vector.load %arg7[%c0, %c0_1] : memref<32x128xf32, #tpu.memory_space<vmem>>, vector<32x128xf32>
    %c0_2 = arith.constant 0 : index
    %c0_3 = arith.constant 0 : index
    %4 = vector.load %arg3[%c0_2, %c0_3] : memref<32x384xbf16, #tpu.memory_space<vmem>>, vector<32x384xbf16>
    %c0_4 = arith.constant 0 : index
    %c0_5 = arith.constant 0 : index
    %5 = vector.load %arg4[%c0_4, %c0_5] : memref<384x128xbf16, #tpu.memory_space<vmem>>, vector<384x128xbf16>
    %cst = arith.constant dense<0.000000e+00> : vector<32x128xf32>
    %6 = tpu.matmul %4, %5, %cst {dimension_numbers = #tpu.dot_dimension_numbers<[1], [0], [0], [1], [0, 0, 1, 1], [], []>} : vector<32x384xbf16>, vector<384x128xbf16>, vector<32x128xf32> -> vector<32x128xf32>
    %7 = arith.addf %3, %6 : vector<32x128xf32>
    %c0_6 = arith.constant 0 : index
    %c0_7 = arith.constant 0 : index
    %8 = vector.load %arg7[%c0_6, %c0_7] : memref<32x128xf32, #tpu.memory_space<vmem>>, vector<32x128xf32>
    tpu.vector_store %arg7[%c0_6, %c0_7], %7 {strides = array<i32>} : memref<32x128xf32, #tpu.memory_space<vmem>>, vector<32x128xf32>,
    %c2_i32 = arith.constant 2 : i32
    %9 = arith.cmpi eq, %arg2, %c2_i32 : i32
    %10 = arith.extui %9 : i1 to i32
    %c0_i32_8 = arith.constant 0 : i32
    %11 = arith.cmpi ne, %10, %c0_i32_8 : i32
    scf.if %11 {
      %c0_9 = arith.constant 0 : index
      %c0_10 = arith.constant 0 : index
      %12 = vector.load %arg7[%c0_9, %c0_10] : memref<32x128xf32, #tpu.memory_space<vmem>>, vector<32x128xf32>
      %c0_11 = arith.constant 0 : index
      %c0_12 = arith.constant 0 : index
      %13 = vector.load %arg5[%c0_11, %c0_12] : memref<1x128xf32, #tpu.memory_space<vmem>>, vector<1x128xf32>
      %14 = vector.broadcast %13 : vector<1x128xf32> to vector<32x128xf32>
      %15 = arith.addf %12, %14 : vector<32x128xf32>
      %cst_13 = arith.constant 0.000000e+00 : f32
      %16 = vector.broadcast %cst_13 : f32 to vector<32x128xf32>
      %17 = arith.maximumf %15, %16 : vector<32x128xf32>
      %18 = arith.truncf %17 : vector<32x128xf32> to vector<32x128xbf16>
      %c0_14 = arith.constant 0 : index
      %c0_15 = arith.constant 0 : index
      %19 = vector.load %arg6[%c0_14, %c0_15] : memref<32x128xbf16, #tpu.memory_space<vmem>>, vector<32x128xbf16>
      tpu.vector_store %arg6[%c0_14, %c0_15], %18 {strides = array<i32>} : memref<32x128xbf16, #tpu.memory_space<vmem>>, vector<32x128xbf16>,
    } else {
    }
    return
  }
  func.func @transform_0(%arg0: i32, %arg1: i32, %arg2: i32) -> (i32, i32) {
    %c0_i32 = arith.constant 0 : i32
    return %arg0, %arg2 : i32, i32
  }
  func.func @transform_1(%arg0: i32, %arg1: i32, %arg2: i32) -> (i32, i32) {
    %c0_i32 = arith.constant 0 : i32
    return %arg2, %arg1 : i32, i32
  }
  func.func @transform_2(%arg0: i32, %arg1: i32, %arg2: i32) -> (i32, i32) {
    %c0_i32 = arith.constant 0 : i32
    %c0_i32_0 = arith.constant 0 : i32
    return %c0_i32, %arg1 : i32, i32
  }
  func.func @transform_3(%arg0: i32, %arg1: i32, %arg2: i32) -> (i32, i32) {
    %c0_i32 = arith.constant 0 : i32
    return %arg0, %arg1 : i32, i32
  }
}

module attributes {stable_mosaic.version = 11 : i64} {
  func.func @_gemm_bn_act_kernel(%arg0: i32, %arg1: i32, %arg2: i32, %arg3: memref<32x128xbf16, #tpu.memory_space<vmem>>, %arg4: memref<128x128xbf16, #tpu.memory_space<vmem>>, %arg5: memref<1x128xf32, #tpu.memory_space<vmem>>, %arg6: memref<32x128xbf16, #tpu.memory_space<vmem>>, %arg7: memref<32x128xf32, #tpu.memory_space<vmem>>) attributes {dimension_semantics = [#tpu.dimension_semantics<parallel>, #tpu.dimension_semantics<parallel>, #tpu.dimension_semantics<arbitrary>], iteration_bounds = array<i64: 1, 1, 1>, scalar_prefetch = 0 : i64, scratch_operands = 1 : i64, tpu.core_type = #tpu.core_type<tc>, window_params = [{transform_indices = @transform_0, window_bounds = array<i64: 32, 128>}, {transform_indices = @transform_1, window_bounds = array<i64: 128, 128>}, {transform_indices = @transform_2, window_bounds = array<i64: 1, 128>}, {transform_indices = @transform_3, window_bounds = array<i64: 32, 128>}]} {
    %c0_i32 = arith.constant 0 : i32
    %0 = arith.cmpi eq, %arg2, %c0_i32 : i32
    %1 = arith.extui %0 : i1 to i32
    %c0_i32_0 = arith.constant 0 : i32
    %2 = arith.cmpi ne, %1, %c0_i32_0 : i32
    scf.if %2 {
      %cst_10 = arith.constant 0.000000e+00 : f32
      %12 = vector.broadcast %cst_10 : f32 to vector<32x128xf32>
      %c0_11 = arith.constant 0 : index
      %c0_12 = arith.constant 0 : index
      %13 = vector.load %arg7[%c0_11, %c0_12] : memref<32x128xf32, #tpu.memory_space<vmem>>, vector<32x128xf32>
      tpu.vector_store %arg7[%c0_11, %c0_12], %12 {strides = array<i32>} : memref<32x128xf32, #tpu.memory_space<vmem>>, vector<32x128xf32>,
    } else {
    }
    %c0 = arith.constant 0 : index
    %c0_1 = arith.constant 0 : index
    %3 = vector.load %arg7[%c0, %c0_1] : memref<32x128xf32, #tpu.memory_space<vmem>>, vector<32x128xf32>
    %c0_2 = arith.constant 0 : index
    %c0_3 = arith.constant 0 : index
    %4 = vector.load %arg3[%c0_2, %c0_3] : memref<32x128xbf16, #tpu.memory_space<vmem>>, vector<32x128xbf16>
    %c0_4 = arith.constant 0 : index
    %c0_5 = arith.constant 0 : index
    %5 = vector.load %arg4[%c0_4, %c0_5] : memref<128x128xbf16, #tpu.memory_space<vmem>>, vector<128x128xbf16>
    %cst = arith.constant dense<0.000000e+00> : vector<32x128xf32>
    %6 = tpu.matmul %4, %5, %cst {dimension_numbers = #tpu.dot_dimension_numbers<[1], [0], [0], [1], [0, 0, 1, 1], [], []>} : vector<32x128xbf16>, vector<128x128xbf16>, vector<32x128xf32> -> vector<32x128xf32>
    %7 = arith.addf %3, %6 : vector<32x128xf32>
    %c0_6 = arith.constant 0 : index
    %c0_7 = arith.constant 0 : index
    %8 = vector.load %arg7[%c0_6, %c0_7] : memref<32x128xf32, #tpu.memory_space<vmem>>, vector<32x128xf32>
    tpu.vector_store %arg7[%c0_6, %c0_7], %7 {strides = array<i32>} : memref<32x128xf32, #tpu.memory_space<vmem>>, vector<32x128xf32>,
    %c0_i32_8 = arith.constant 0 : i32
    %9 = arith.cmpi eq, %arg2, %c0_i32_8 : i32
    %10 = arith.extui %9 : i1 to i32
    %c0_i32_9 = arith.constant 0 : i32
    %11 = arith.cmpi ne, %10, %c0_i32_9 : i32
    scf.if %11 {
      %c0_10 = arith.constant 0 : index
      %c0_11 = arith.constant 0 : index
      %12 = vector.load %arg7[%c0_10, %c0_11] : memref<32x128xf32, #tpu.memory_space<vmem>>, vector<32x128xf32>
      %c0_12 = arith.constant 0 : index
      %c0_13 = arith.constant 0 : index
      %13 = vector.load %arg5[%c0_12, %c0_13] : memref<1x128xf32, #tpu.memory_space<vmem>>, vector<1x128xf32>
      %14 = vector.broadcast %13 : vector<1x128xf32> to vector<32x128xf32>
      %15 = arith.addf %12, %14 : vector<32x128xf32>
      %16 = arith.truncf %15 : vector<32x128xf32> to vector<32x128xbf16>
      %c0_14 = arith.constant 0 : index
      %c0_15 = arith.constant 0 : index
      %17 = vector.load %arg6[%c0_14, %c0_15] : memref<32x128xbf16, #tpu.memory_space<vmem>>, vector<32x128xbf16>
      tpu.vector_store %arg6[%c0_14, %c0_15], %16 {strides = array<i32>} : memref<32x128xbf16, #tpu.memory_space<vmem>>, vector<32x128xbf16>,
    } else {
    }
    return
  }
  func.func @transform_0(%arg0: i32, %arg1: i32, %arg2: i32) -> (i32, i32) {
    %c0_i32 = arith.constant 0 : i32
    return %arg0, %arg2 : i32, i32
  }
  func.func @transform_1(%arg0: i32, %arg1: i32, %arg2: i32) -> (i32, i32) {
    %c0_i32 = arith.constant 0 : i32
    return %arg2, %arg1 : i32, i32
  }
  func.func @transform_2(%arg0: i32, %arg1: i32, %arg2: i32) -> (i32, i32) {
    %c0_i32 = arith.constant 0 : i32
    %c0_i32_0 = arith.constant 0 : i32
    return %c0_i32, %arg1 : i32, i32
  }
  func.func @transform_3(%arg0: i32, %arg1: i32, %arg2: i32) -> (i32, i32) {
    %c0_i32 = arith.constant 0 : i32
    return %arg0, %arg1 : i32, i32
  }
}

module attributes {stable_mosaic.version = 11 : i64} {
  func.func @_gemm_bn_res_act_kernel(%arg0: i32, %arg1: i32, %arg2: i32, %arg3: memref<32x384xbf16, #tpu.memory_space<vmem>>, %arg4: memref<384x128xbf16, #tpu.memory_space<vmem>>, %arg5: memref<1x128xf32, #tpu.memory_space<vmem>>, %arg6: memref<32x128xbf16, #tpu.memory_space<vmem>>, %arg7: memref<32x128xbf16, #tpu.memory_space<vmem>>, %arg8: memref<32x128xf32, #tpu.memory_space<vmem>>) attributes {dimension_semantics = [#tpu.dimension_semantics<parallel>, #tpu.dimension_semantics<parallel>, #tpu.dimension_semantics<arbitrary>], iteration_bounds = array<i64: 1, 1, 3>, scalar_prefetch = 0 : i64, scratch_operands = 1 : i64, tpu.core_type = #tpu.core_type<tc>, window_params = [{transform_indices = @transform_0, window_bounds = array<i64: 32, 384>}, {transform_indices = @transform_1, window_bounds = array<i64: 384, 128>}, {transform_indices = @transform_2, window_bounds = array<i64: 1, 128>}, {transform_indices = @transform_3, window_bounds = array<i64: 32, 128>}, {transform_indices = @transform_4, window_bounds = array<i64: 32, 128>}]} {
    %c0_i32 = arith.constant 0 : i32
    %0 = arith.cmpi eq, %arg2, %c0_i32 : i32
    %1 = arith.extui %0 : i1 to i32
    %c0_i32_0 = arith.constant 0 : i32
    %2 = arith.cmpi ne, %1, %c0_i32_0 : i32
    scf.if %2 {
      %cst_9 = arith.constant 0.000000e+00 : f32
      %12 = vector.broadcast %cst_9 : f32 to vector<32x128xf32>
      %c0_10 = arith.constant 0 : index
      %c0_11 = arith.constant 0 : index
      %13 = vector.load %arg8[%c0_10, %c0_11] : memref<32x128xf32, #tpu.memory_space<vmem>>, vector<32x128xf32>
      tpu.vector_store %arg8[%c0_10, %c0_11], %12 {strides = array<i32>} : memref<32x128xf32, #tpu.memory_space<vmem>>, vector<32x128xf32>,
    } else {
    }
    %c0 = arith.constant 0 : index
    %c0_1 = arith.constant 0 : index
    %3 = vector.load %arg8[%c0, %c0_1] : memref<32x128xf32, #tpu.memory_space<vmem>>, vector<32x128xf32>
    %c0_2 = arith.constant 0 : index
    %c0_3 = arith.constant 0 : index
    %4 = vector.load %arg3[%c0_2, %c0_3] : memref<32x384xbf16, #tpu.memory_space<vmem>>, vector<32x384xbf16>
    %c0_4 = arith.constant 0 : index
    %c0_5 = arith.constant 0 : index
    %5 = vector.load %arg4[%c0_4, %c0_5] : memref<384x128xbf16, #tpu.memory_space<vmem>>, vector<384x128xbf16>
    %cst = arith.constant dense<0.000000e+00> : vector<32x128xf32>
    %6 = tpu.matmul %4, %5, %cst {dimension_numbers = #tpu.dot_dimension_numbers<[1], [0], [0], [1], [0, 0, 1, 1], [], []>} : vector<32x384xbf16>, vector<384x128xbf16>, vector<32x128xf32> -> vector<32x128xf32>
    %7 = arith.addf %3, %6 : vector<32x128xf32>
    %c0_6 = arith.constant 0 : index
    %c0_7 = arith.constant 0 : index
    %8 = vector.load %arg8[%c0_6, %c0_7] : memref<32x128xf32, #tpu.memory_space<vmem>>, vector<32x128xf32>
    tpu.vector_store %arg8[%c0_6, %c0_7], %7 {strides = array<i32>} : memref<32x128xf32, #tpu.memory_space<vmem>>, vector<32x128xf32>,
    %c2_i32 = arith.constant 2 : i32
    %9 = arith.cmpi eq, %arg2, %c2_i32 : i32
    %10 = arith.extui %9 : i1 to i32
    %c0_i32_8 = arith.constant 0 : i32
    %11 = arith.cmpi ne, %10, %c0_i32_8 : i32
    scf.if %11 {
      %c0_9 = arith.constant 0 : index
      %c0_10 = arith.constant 0 : index
      %12 = vector.load %arg8[%c0_9, %c0_10] : memref<32x128xf32, #tpu.memory_space<vmem>>, vector<32x128xf32>
      %c0_11 = arith.constant 0 : index
      %c0_12 = arith.constant 0 : index
      %13 = vector.load %arg5[%c0_11, %c0_12] : memref<1x128xf32, #tpu.memory_space<vmem>>, vector<1x128xf32>
      %14 = vector.broadcast %13 : vector<1x128xf32> to vector<32x128xf32>
      %15 = arith.addf %12, %14 : vector<32x128xf32>
      %c0_13 = arith.constant 0 : index
      %c0_14 = arith.constant 0 : index
      %16 = vector.load %arg6[%c0_13, %c0_14] : memref<32x128xbf16, #tpu.memory_space<vmem>>, vector<32x128xbf16>
      %17 = arith.extf %16 : vector<32x128xbf16> to vector<32x128xf32>
      %18 = arith.addf %15, %17 : vector<32x128xf32>
      %cst_15 = arith.constant 0.000000e+00 : f32
      %19 = vector.broadcast %cst_15 : f32 to vector<32x128xf32>
      %20 = arith.maximumf %18, %19 : vector<32x128xf32>
      %21 = arith.truncf %20 : vector<32x128xf32> to vector<32x128xbf16>
      %c0_16 = arith.constant 0 : index
      %c0_17 = arith.constant 0 : index
      %22 = vector.load %arg7[%c0_16, %c0_17] : memref<32x128xbf16, #tpu.memory_space<vmem>>, vector<32x128xbf16>
      tpu.vector_store %arg7[%c0_16, %c0_17], %21 {strides = array<i32>} : memref<32x128xbf16, #tpu.memory_space<vmem>>, vector<32x128xbf16>,
    } else {
    }
    return
  }
  func.func @transform_0(%arg0: i32, %arg1: i32, %arg2: i32) -> (i32, i32) {
    %c0_i32 = arith.constant 0 : i32
    return %arg0, %arg2 : i32, i32
  }
  func.func @transform_1(%arg0: i32, %arg1: i32, %arg2: i32) -> (i32, i32) {
    %c0_i32 = arith.constant 0 : i32
    return %arg2, %arg1 : i32, i32
  }
  func.func @transform_2(%arg0: i32, %arg1: i32, %arg2: i32) -> (i32, i32) {
    %c0_i32 = arith.constant 0 : i32
    %c0_i32_0 = arith.constant 0 : i32
    return %c0_i32, %arg1 : i32, i32
  }
  func.func @transform_3(%arg0: i32, %arg1: i32, %arg2: i32) -> (i32, i32) {
    %c0_i32 = arith.constant 0 : i32
    return %arg0, %arg1 : i32, i32
  }
  func.func @transform_4(%arg0: i32, %arg1: i32, %arg2: i32) -> (i32, i32) {
    %c0_i32 = arith.constant 0 : i32
    return %arg0, %arg1 : i32, i32
  }
}

module attributes {stable_mosaic.version = 11 : i64} {
  func.func @_gemm_bn_act_kernel(%arg0: i32, %arg1: i32, %arg2: i32, %arg3: memref<8x384xbf16, #tpu.memory_space<vmem>>, %arg4: memref<384x128xbf16, #tpu.memory_space<vmem>>, %arg5: memref<1x128xf32, #tpu.memory_space<vmem>>, %arg6: memref<8x128xbf16, #tpu.memory_space<vmem>>, %arg7: memref<8x128xf32, #tpu.memory_space<vmem>>) attributes {dimension_semantics = [#tpu.dimension_semantics<parallel>, #tpu.dimension_semantics<parallel>, #tpu.dimension_semantics<arbitrary>], iteration_bounds = array<i64: 1, 1, 3>, scalar_prefetch = 0 : i64, scratch_operands = 1 : i64, tpu.core_type = #tpu.core_type<tc>, window_params = [{transform_indices = @transform_0, window_bounds = array<i64: 8, 384>}, {transform_indices = @transform_1, window_bounds = array<i64: 384, 128>}, {transform_indices = @transform_2, window_bounds = array<i64: 1, 128>}, {transform_indices = @transform_3, window_bounds = array<i64: 8, 128>}]} {
    %c0_i32 = arith.constant 0 : i32
    %0 = arith.cmpi eq, %arg2, %c0_i32 : i32
    %1 = arith.extui %0 : i1 to i32
    %c0_i32_0 = arith.constant 0 : i32
    %2 = arith.cmpi ne, %1, %c0_i32_0 : i32
    scf.if %2 {
      %cst_9 = arith.constant 0.000000e+00 : f32
      %12 = vector.broadcast %cst_9 : f32 to vector<8x128xf32>
      %c0_10 = arith.constant 0 : index
      %c0_11 = arith.constant 0 : index
      %13 = vector.load %arg7[%c0_10, %c0_11] : memref<8x128xf32, #tpu.memory_space<vmem>>, vector<8x128xf32>
      tpu.vector_store %arg7[%c0_10, %c0_11], %12 {strides = array<i32>} : memref<8x128xf32, #tpu.memory_space<vmem>>, vector<8x128xf32>,
    } else {
    }
    %c0 = arith.constant 0 : index
    %c0_1 = arith.constant 0 : index
    %3 = vector.load %arg7[%c0, %c0_1] : memref<8x128xf32, #tpu.memory_space<vmem>>, vector<8x128xf32>
    %c0_2 = arith.constant 0 : index
    %c0_3 = arith.constant 0 : index
    %4 = vector.load %arg3[%c0_2, %c0_3] : memref<8x384xbf16, #tpu.memory_space<vmem>>, vector<8x384xbf16>
    %c0_4 = arith.constant 0 : index
    %c0_5 = arith.constant 0 : index
    %5 = vector.load %arg4[%c0_4, %c0_5] : memref<384x128xbf16, #tpu.memory_space<vmem>>, vector<384x128xbf16>
    %cst = arith.constant dense<0.000000e+00> : vector<8x128xf32>
    %6 = tpu.matmul %4, %5, %cst {dimension_numbers = #tpu.dot_dimension_numbers<[1], [0], [0], [1], [0, 0, 1, 1], [], []>} : vector<8x384xbf16>, vector<384x128xbf16>, vector<8x128xf32> -> vector<8x128xf32>
    %7 = arith.addf %3, %6 : vector<8x128xf32>
    %c0_6 = arith.constant 0 : index
    %c0_7 = arith.constant 0 : index
    %8 = vector.load %arg7[%c0_6, %c0_7] : memref<8x128xf32, #tpu.memory_space<vmem>>, vector<8x128xf32>
    tpu.vector_store %arg7[%c0_6, %c0_7], %7 {strides = array<i32>} : memref<8x128xf32, #tpu.memory_space<vmem>>, vector<8x128xf32>,
    %c2_i32 = arith.constant 2 : i32
    %9 = arith.cmpi eq, %arg2, %c2_i32 : i32
    %10 = arith.extui %9 : i1 to i32
    %c0_i32_8 = arith.constant 0 : i32
    %11 = arith.cmpi ne, %10, %c0_i32_8 : i32
    scf.if %11 {
      %c0_9 = arith.constant 0 : index
      %c0_10 = arith.constant 0 : index
      %12 = vector.load %arg7[%c0_9, %c0_10] : memref<8x128xf32, #tpu.memory_space<vmem>>, vector<8x128xf32>
      %c0_11 = arith.constant 0 : index
      %c0_12 = arith.constant 0 : index
      %13 = vector.load %arg5[%c0_11, %c0_12] : memref<1x128xf32, #tpu.memory_space<vmem>>, vector<1x128xf32>
      %14 = vector.broadcast %13 : vector<1x128xf32> to vector<8x128xf32>
      %15 = arith.addf %12, %14 : vector<8x128xf32>
      %cst_13 = arith.constant 0.000000e+00 : f32
      %16 = vector.broadcast %cst_13 : f32 to vector<8x128xf32>
      %17 = arith.maximumf %15, %16 : vector<8x128xf32>
      %18 = arith.truncf %17 : vector<8x128xf32> to vector<8x128xbf16>
      %c0_14 = arith.constant 0 : index
      %c0_15 = arith.constant 0 : index
      %19 = vector.load %arg6[%c0_14, %c0_15] : memref<8x128xbf16, #tpu.memory_space<vmem>>, vector<8x128xbf16>
      tpu.vector_store %arg6[%c0_14, %c0_15], %18 {strides = array<i32>} : memref<8x128xbf16, #tpu.memory_space<vmem>>, vector<8x128xbf16>,
    } else {
    }
    return
  }
  func.func @transform_0(%arg0: i32, %arg1: i32, %arg2: i32) -> (i32, i32) {
    %c0_i32 = arith.constant 0 : i32
    return %arg0, %arg2 : i32, i32
  }
  func.func @transform_1(%arg0: i32, %arg1: i32, %arg2: i32) -> (i32, i32) {
    %c0_i32 = arith.constant 0 : i32
    return %arg2, %arg1 : i32, i32
  }
  func.func @transform_2(%arg0: i32, %arg1: i32, %arg2: i32) -> (i32, i32) {
    %c0_i32 = arith.constant 0 : i32
    %c0_i32_0 = arith.constant 0 : i32
    return %c0_i32, %arg1 : i32, i32
  }
  func.func @transform_3(%arg0: i32, %arg1: i32, %arg2: i32) -> (i32, i32) {
    %c0_i32 = arith.constant 0 : i32
    return %arg0, %arg1 : i32, i32
  }
}

module attributes {stable_mosaic.version = 11 : i64} {
  func.func @_gemm_bn_act_kernel(%arg0: i32, %arg1: i32, %arg2: i32, %arg3: memref<8x128xbf16, #tpu.memory_space<vmem>>, %arg4: memref<128x128xbf16, #tpu.memory_space<vmem>>, %arg5: memref<1x128xf32, #tpu.memory_space<vmem>>, %arg6: memref<8x128xbf16, #tpu.memory_space<vmem>>, %arg7: memref<8x128xf32, #tpu.memory_space<vmem>>) attributes {dimension_semantics = [#tpu.dimension_semantics<parallel>, #tpu.dimension_semantics<parallel>, #tpu.dimension_semantics<arbitrary>], iteration_bounds = array<i64: 1, 1, 1>, scalar_prefetch = 0 : i64, scratch_operands = 1 : i64, tpu.core_type = #tpu.core_type<tc>, window_params = [{transform_indices = @transform_0, window_bounds = array<i64: 8, 128>}, {transform_indices = @transform_1, window_bounds = array<i64: 128, 128>}, {transform_indices = @transform_2, window_bounds = array<i64: 1, 128>}, {transform_indices = @transform_3, window_bounds = array<i64: 8, 128>}]} {
    %c0_i32 = arith.constant 0 : i32
    %0 = arith.cmpi eq, %arg2, %c0_i32 : i32
    %1 = arith.extui %0 : i1 to i32
    %c0_i32_0 = arith.constant 0 : i32
    %2 = arith.cmpi ne, %1, %c0_i32_0 : i32
    scf.if %2 {
      %cst_10 = arith.constant 0.000000e+00 : f32
      %12 = vector.broadcast %cst_10 : f32 to vector<8x128xf32>
      %c0_11 = arith.constant 0 : index
      %c0_12 = arith.constant 0 : index
      %13 = vector.load %arg7[%c0_11, %c0_12] : memref<8x128xf32, #tpu.memory_space<vmem>>, vector<8x128xf32>
      tpu.vector_store %arg7[%c0_11, %c0_12], %12 {strides = array<i32>} : memref<8x128xf32, #tpu.memory_space<vmem>>, vector<8x128xf32>,
    } else {
    }
    %c0 = arith.constant 0 : index
    %c0_1 = arith.constant 0 : index
    %3 = vector.load %arg7[%c0, %c0_1] : memref<8x128xf32, #tpu.memory_space<vmem>>, vector<8x128xf32>
    %c0_2 = arith.constant 0 : index
    %c0_3 = arith.constant 0 : index
    %4 = vector.load %arg3[%c0_2, %c0_3] : memref<8x128xbf16, #tpu.memory_space<vmem>>, vector<8x128xbf16>
    %c0_4 = arith.constant 0 : index
    %c0_5 = arith.constant 0 : index
    %5 = vector.load %arg4[%c0_4, %c0_5] : memref<128x128xbf16, #tpu.memory_space<vmem>>, vector<128x128xbf16>
    %cst = arith.constant dense<0.000000e+00> : vector<8x128xf32>
    %6 = tpu.matmul %4, %5, %cst {dimension_numbers = #tpu.dot_dimension_numbers<[1], [0], [0], [1], [0, 0, 1, 1], [], []>} : vector<8x128xbf16>, vector<128x128xbf16>, vector<8x128xf32> -> vector<8x128xf32>
    %7 = arith.addf %3, %6 : vector<8x128xf32>
    %c0_6 = arith.constant 0 : index
    %c0_7 = arith.constant 0 : index
    %8 = vector.load %arg7[%c0_6, %c0_7] : memref<8x128xf32, #tpu.memory_space<vmem>>, vector<8x128xf32>
    tpu.vector_store %arg7[%c0_6, %c0_7], %7 {strides = array<i32>} : memref<8x128xf32, #tpu.memory_space<vmem>>, vector<8x128xf32>,
    %c0_i32_8 = arith.constant 0 : i32
    %9 = arith.cmpi eq, %arg2, %c0_i32_8 : i32
    %10 = arith.extui %9 : i1 to i32
    %c0_i32_9 = arith.constant 0 : i32
    %11 = arith.cmpi ne, %10, %c0_i32_9 : i32
    scf.if %11 {
      %c0_10 = arith.constant 0 : index
      %c0_11 = arith.constant 0 : index
      %12 = vector.load %arg7[%c0_10, %c0_11] : memref<8x128xf32, #tpu.memory_space<vmem>>, vector<8x128xf32>
      %c0_12 = arith.constant 0 : index
      %c0_13 = arith.constant 0 : index
      %13 = vector.load %arg5[%c0_12, %c0_13] : memref<1x128xf32, #tpu.memory_space<vmem>>, vector<1x128xf32>
      %14 = vector.broadcast %13 : vector<1x128xf32> to vector<8x128xf32>
      %15 = arith.addf %12, %14 : vector<8x128xf32>
      %16 = arith.truncf %15 : vector<8x128xf32> to vector<8x128xbf16>
      %c0_14 = arith.constant 0 : index
      %c0_15 = arith.constant 0 : index
      %17 = vector.load %arg6[%c0_14, %c0_15] : memref<8x128xbf16, #tpu.memory_space<vmem>>, vector<8x128xbf16>
      tpu.vector_store %arg6[%c0_14, %c0_15], %16 {strides = array<i32>} : memref<8x128xbf16, #tpu.memory_space<vmem>>, vector<8x128xbf16>,
    } else {
    }
    return
  }
  func.func @transform_0(%arg0: i32, %arg1: i32, %arg2: i32) -> (i32, i32) {
    %c0_i32 = arith.constant 0 : i32
    return %arg0, %arg2 : i32, i32
  }
  func.func @transform_1(%arg0: i32, %arg1: i32, %arg2: i32) -> (i32, i32) {
    %c0_i32 = arith.constant 0 : i32
    return %arg2, %arg1 : i32, i32
  }
  func.func @transform_2(%arg0: i32, %arg1: i32, %arg2: i32) -> (i32, i32) {
    %c0_i32 = arith.constant 0 : i32
    %c0_i32_0 = arith.constant 0 : i32
    return %c0_i32, %arg1 : i32, i32
  }
  func.func @transform_3(%arg0: i32, %arg1: i32, %arg2: i32) -> (i32, i32) {
    %c0_i32 = arith.constant 0 : i32
    return %arg0, %arg1 : i32, i32
  }
}

module attributes {stable_mosaic.version = 11 : i64} {
  func.func @_gemm_bn_res_act_kernel(%arg0: i32, %arg1: i32, %arg2: i32, %arg3: memref<8x384xbf16, #tpu.memory_space<vmem>>, %arg4: memref<384x128xbf16, #tpu.memory_space<vmem>>, %arg5: memref<1x128xf32, #tpu.memory_space<vmem>>, %arg6: memref<8x128xbf16, #tpu.memory_space<vmem>>, %arg7: memref<8x128xbf16, #tpu.memory_space<vmem>>, %arg8: memref<8x128xf32, #tpu.memory_space<vmem>>) attributes {dimension_semantics = [#tpu.dimension_semantics<parallel>, #tpu.dimension_semantics<parallel>, #tpu.dimension_semantics<arbitrary>], iteration_bounds = array<i64: 1, 1, 3>, scalar_prefetch = 0 : i64, scratch_operands = 1 : i64, tpu.core_type = #tpu.core_type<tc>, window_params = [{transform_indices = @transform_0, window_bounds = array<i64: 8, 384>}, {transform_indices = @transform_1, window_bounds = array<i64: 384, 128>}, {transform_indices = @transform_2, window_bounds = array<i64: 1, 128>}, {transform_indices = @transform_3, window_bounds = array<i64: 8, 128>}, {transform_indices = @transform_4, window_bounds = array<i64: 8, 128>}]} {
    %c0_i32 = arith.constant 0 : i32
    %0 = arith.cmpi eq, %arg2, %c0_i32 : i32
    %1 = arith.extui %0 : i1 to i32
    %c0_i32_0 = arith.constant 0 : i32
    %2 = arith.cmpi ne, %1, %c0_i32_0 : i32
    scf.if %2 {
      %cst_9 = arith.constant 0.000000e+00 : f32
      %12 = vector.broadcast %cst_9 : f32 to vector<8x128xf32>
      %c0_10 = arith.constant 0 : index
      %c0_11 = arith.constant 0 : index
      %13 = vector.load %arg8[%c0_10, %c0_11] : memref<8x128xf32, #tpu.memory_space<vmem>>, vector<8x128xf32>
      tpu.vector_store %arg8[%c0_10, %c0_11], %12 {strides = array<i32>} : memref<8x128xf32, #tpu.memory_space<vmem>>, vector<8x128xf32>,
    } else {
    }
    %c0 = arith.constant 0 : index
    %c0_1 = arith.constant 0 : index
    %3 = vector.load %arg8[%c0, %c0_1] : memref<8x128xf32, #tpu.memory_space<vmem>>, vector<8x128xf32>
    %c0_2 = arith.constant 0 : index
    %c0_3 = arith.constant 0 : index
    %4 = vector.load %arg3[%c0_2, %c0_3] : memref<8x384xbf16, #tpu.memory_space<vmem>>, vector<8x384xbf16>
    %c0_4 = arith.constant 0 : index
    %c0_5 = arith.constant 0 : index
    %5 = vector.load %arg4[%c0_4, %c0_5] : memref<384x128xbf16, #tpu.memory_space<vmem>>, vector<384x128xbf16>
    %cst = arith.constant dense<0.000000e+00> : vector<8x128xf32>
    %6 = tpu.matmul %4, %5, %cst {dimension_numbers = #tpu.dot_dimension_numbers<[1], [0], [0], [1], [0, 0, 1, 1], [], []>} : vector<8x384xbf16>, vector<384x128xbf16>, vector<8x128xf32> -> vector<8x128xf32>
    %7 = arith.addf %3, %6 : vector<8x128xf32>
    %c0_6 = arith.constant 0 : index
    %c0_7 = arith.constant 0 : index
    %8 = vector.load %arg8[%c0_6, %c0_7] : memref<8x128xf32, #tpu.memory_space<vmem>>, vector<8x128xf32>
    tpu.vector_store %arg8[%c0_6, %c0_7], %7 {strides = array<i32>} : memref<8x128xf32, #tpu.memory_space<vmem>>, vector<8x128xf32>,
    %c2_i32 = arith.constant 2 : i32
    %9 = arith.cmpi eq, %arg2, %c2_i32 : i32
    %10 = arith.extui %9 : i1 to i32
    %c0_i32_8 = arith.constant 0 : i32
    %11 = arith.cmpi ne, %10, %c0_i32_8 : i32
    scf.if %11 {
      %c0_9 = arith.constant 0 : index
      %c0_10 = arith.constant 0 : index
      %12 = vector.load %arg8[%c0_9, %c0_10] : memref<8x128xf32, #tpu.memory_space<vmem>>, vector<8x128xf32>
      %c0_11 = arith.constant 0 : index
      %c0_12 = arith.constant 0 : index
      %13 = vector.load %arg5[%c0_11, %c0_12] : memref<1x128xf32, #tpu.memory_space<vmem>>, vector<1x128xf32>
      %14 = vector.broadcast %13 : vector<1x128xf32> to vector<8x128xf32>
      %15 = arith.addf %12, %14 : vector<8x128xf32>
      %c0_13 = arith.constant 0 : index
      %c0_14 = arith.constant 0 : index
      %16 = vector.load %arg6[%c0_13, %c0_14] : memref<8x128xbf16, #tpu.memory_space<vmem>>, vector<8x128xbf16>
      %17 = arith.extf %16 : vector<8x128xbf16> to vector<8x128xf32>
      %18 = arith.addf %15, %17 : vector<8x128xf32>
      %cst_15 = arith.constant 0.000000e+00 : f32
      %19 = vector.broadcast %cst_15 : f32 to vector<8x128xf32>
      %20 = arith.maximumf %18, %19 : vector<8x128xf32>
      %21 = arith.truncf %20 : vector<8x128xf32> to vector<8x128xbf16>
      %c0_16 = arith.constant 0 : index
      %c0_17 = arith.constant 0 : index
      %22 = vector.load %arg7[%c0_16, %c0_17] : memref<8x128xbf16, #tpu.memory_space<vmem>>, vector<8x128xbf16>
      tpu.vector_store %arg7[%c0_16, %c0_17], %21 {strides = array<i32>} : memref<8x128xbf16, #tpu.memory_space<vmem>>, vector<8x128xbf16>,
    } else {
    }
    return
  }
  func.func @transform_0(%arg0: i32, %arg1: i32, %arg2: i32) -> (i32, i32) {
    %c0_i32 = arith.constant 0 : i32
    return %arg0, %arg2 : i32, i32
  }
  func.func @transform_1(%arg0: i32, %arg1: i32, %arg2: i32) -> (i32, i32) {
    %c0_i32 = arith.constant 0 : i32
    return %arg2, %arg1 : i32, i32
  }
  func.func @transform_2(%arg0: i32, %arg1: i32, %arg2: i32) -> (i32, i32) {
    %c0_i32 = arith.constant 0 : i32
    %c0_i32_0 = arith.constant 0 : i32
    return %c0_i32, %arg1 : i32, i32
  }
  func.func @transform_3(%arg0: i32, %arg1: i32, %arg2: i32) -> (i32, i32) {
    %c0_i32 = arith.constant 0 : i32
    return %arg0, %arg1 : i32, i32
  }
  func.func @transform_4(%arg0: i32, %arg1: i32, %arg2: i32) -> (i32, i32) {
    %c0_i32 = arith.constant 0 : i32
    return %arg0, %arg1 : i32, i32
  }
}

</mosaic_0001>

<llo_original>
// kernel: _lambda_.20
$region0: #{_lambda_.20}
  #allocation0 [shape = 'u32[]', space=smem, size = 0x4, offset = 0x4, fixed_abs, tag = 'smem constant byte address 0x4 - core index']
  #allocation1 [shape = 'u32[72,128]{1,0:T(1,128)}', space=vmem, size = 0x9000, scoped, tag = 'internal scratch']
  #allocation2 [shape = 'f32[128,128]{1,0:T(8,128)}', space=vmem, size = 0x10000, scoped, tag = 'scratch operand']
  %s0 = inlined_call_operand.vmem [shape: bf16[512,256], index: 0, kind: input, shape index: {}]
  %s1 = inlined_call_operand.vmem [shape: bf16[256,128], index: 1, kind: input, shape index: {}]
  %s2 = inlined_call_operand.vmem [shape: f32[1,128], index: 2, kind: input, shape index: {}]
  %s3 = inlined_call_operand.vmem [shape: bf16[512,128], index: 3, kind: output, shape index: {}]
  %s4 = sld [smem:[#allocation0]]
  $region53: #{_lambda_.20} parent=0
    _
  %s6 = ssub.s32 1, %s4
  %s7 = scalar_select 0, %s6, %s4
  loop: start=0, step=1, limit=6
  $region2: #{_lambda_.20} parent=0 // loop_pre_header
    _
  $region3: #{_lambda_.20} parent=0 // loop_header
    %s9 = sphi 0, %s13
    %p10 = scmp.ge.s32.totalorder %s9, 6
    %s16 = sphi 0, %s35
    %s17 = sphi 0, %s31
    %s18 = sphi 0, %s27
    %s19 = sphi 0, %s16
    %s20 = sphi 0, %s17
    %s21 = sphi 0, %s18
    %s22 = sphi 0, %s19
    %s23 = sphi 0, %s20
    %s24 = sphi 0, %s21
    %s40 = sphi 0, %s42
    %s43 = sphi 0, %s40
    %s44 = sphi 0, %s43
    %s60 = sphi 0, %s44
    %s68 = sphi 0, %s70
    %s71 = sphi 0, %s68
    %s72 = sphi 0, %s71
    %s88 = sphi 0, %s72
    %s94 = sphi 0, %s96
    %s97 = sphi 0, %s94
    %s98 = sphi 0, %s97
    %s114 = sphi 0, %s98
    %s122 = sphi 0, %s124
    %s125 = sphi 0, %s122
    %s126 = sphi 0, %s125
    %s142 = sphi 0, %s126
  $region4: #{_lambda_.20} parent=0 // loop_header_branch
    %12 = sbr.rel (%p10) target = $region8
  $region5: #{_lambda_.20} parent=0 // loop_body
    %s14 = ssub.s32 %s9, 1
    %s15 = ssub.s32 %s9, 2
    %s25 = sadd.s32 1, %s18
    %p26 = scmp.ge.s32.totalorder %s25, 1
    %s27 = scalar_select %p26, 0, %s25
    %s28 = sadd.s32 1, %s17
    %s29 = scalar_select %p26, %s28, %s17
    %p30 = scmp.ge.s32.totalorder %s29, 1
    %s31 = scalar_select %p30, 0, %s29
    %s32 = sadd.s32 1, %s16
    %s33 = scalar_select %p30, %s32, %s16
    %p34 = scmp.ge.s32.totalorder %s33, 4
    %s35 = scalar_select %p34, 0, %s33
    %s36 = ssub.s32 %s16, %s35
    %s37 = ssub.s32 %s18, %s27
    %s38 = sor.u32 %s36, %s37
    %p39 = scmp.eq.s32.totalorder %s38, 0
    %s41 = sadd.s32 %s40, 1
    %s42 = scalar_select %p39, %s40, %s41
    %p45 = pneg %p39
    %p46 = scmp.eq.s32.totalorder %s9, 3
    %p47 = por %p45, %p46
    %p48 = scmp.ne.s32.totalorder %s40, %s43
    %p49 = scmp.eq.s32.totalorder %s9, 0
    %p50 = por %p48, %p49
    %p51 = scmp.ne.s32.totalorder %s40, %s43
    %p52 = scmp.eq.s32.totalorder %s14, 3
    %p53 = por %p51, %p52
    %p54 = scmp.ne.s32.totalorder %s43, %s44
    %p55 = scmp.eq.s32.totalorder %s14, 0
    %p56 = por %p54, %p55
    %p57 = scmp.ne.s32.totalorder %s43, %s44
    %p58 = scmp.eq.s32.totalorder %s15, 3
    %p59 = por %p57, %p58
    %p61 = scmp.ne.s32.totalorder %s44, %s60
    %p62 = scmp.eq.s32.totalorder %s15, 0
    %p63 = por %p61, %p62
    %s64 = ssub.s32 %s18, %s27
    %s65 = ssub.s32 %s17, %s31
    %s66 = sor.u32 %s64, %s65
    %p67 = scmp.eq.s32.totalorder %s66, 0
    %s69 = sadd.s32 %s68, 1
    %s70 = scalar_select %p67, %s68, %s69
    %p73 = pneg %p67
    %p74 = scmp.eq.s32.totalorder %s9, 3
    %p75 = por %p73, %p74
    %p76 = scmp.ne.s32.totalorder %s68, %s71
    %p77 = scmp.eq.s32.totalorder %s9, 0
    %p78 = por %p76, %p77
    %p79 = scmp.ne.s32.totalorder %s68, %s71
    %p80 = scmp.eq.s32.totalorder %s14, 3
    %p81 = por %p79, %p80
    %p82 = scmp.ne.s32.totalorder %s71, %s72
    %p83 = scmp.eq.s32.totalorder %s14, 0
    %p84 = por %p82, %p83
    %p85 = scmp.ne.s32.totalorder %s71, %s72
    %p86 = scmp.eq.s32.totalorder %s15, 3
    %p87 = por %p85, %p86
    %p89 = scmp.ne.s32.totalorder %s72, %s88
    %p90 = scmp.eq.s32.totalorder %s15, 0
    %p91 = por %p89, %p90
    %s92 = ssub.s32 %s17, %s31
    %p93 = scmp.eq.s32.totalorder %s92, 0
    %s95 = sadd.s32 %s94, 1
    %s96 = scalar_select %p93, %s94, %s95
    %p99 = pneg %p93
    %p100 = scmp.eq.s32.totalorder %s9, 3
    %p101 = por %p99, %p100
    %p102 = scmp.ne.s32.totalorder %s94, %s97
    %p103 = scmp.eq.s32.totalorder %s9, 0
    %p104 = por %p102, %p103
    %p105 = scmp.ne.s32.totalorder %s94, %s97
    %p106 = scmp.eq.s32.totalorder %s14, 3
    %p107 = por %p105, %p106
    %p108 = scmp.ne.s32.totalorder %s97, %s98
    %p109 = scmp.eq.s32.totalorder %s14, 0
    %p110 = por %p108, %p109
    %p111 = scmp.ne.s32.totalorder %s97, %s98
    %p112 = scmp.eq.s32.totalorder %s15, 3
    %p113 = por %p111, %p112
    %p115 = scmp.ne.s32.totalorder %s98, %s114
    %p116 = scmp.eq.s32.totalorder %s15, 0
    %p117 = por %p115, %p116
    %s118 = ssub.s32 %s16, %s35
    %s119 = ssub.s32 %s17, %s31
    %s120 = sor.u32 %s118, %s119
    %p121 = scmp.eq.s32.totalorder %s120, 0
    %s123 = sadd.s32 %s122, 1
    %s124 = scalar_select %p121, %s122, %s123
    %p127 = pneg %p121
    %p128 = scmp.eq.s32.totalorder %s9, 3
    %p129 = por %p127, %p128
    %p130 = scmp.ne.s32.totalorder %s122, %s125
    %p131 = scmp.eq.s32.totalorder %s9, 0
    %p132 = por %p130, %p131
    %p133 = scmp.ne.s32.totalorder %s122, %s125
    %p134 = scmp.eq.s32.totalorder %s14, 3
    %p135 = por %p133, %p134
    %p136 = scmp.ne.s32.totalorder %s125, %s126
    %p137 = scmp.eq.s32.totalorder %s14, 0
    %p138 = por %p136, %p137
    %p139 = scmp.ne.s32.totalorder %s125, %s126
    %p140 = scmp.eq.s32.totalorder %s15, 3
    %p141 = por %p139, %p140
    %p143 = scmp.ne.s32.totalorder %s126, %s142
    %p144 = scmp.eq.s32.totalorder %s15, 0
    %p145 = por %p143, %p144
    %p146 = scmp.le.s32.totalorder 1, %s9
    %p147 = scmp.lt.s32.totalorder %s9, 5
    %p148 = pnand %p146, %p147
    %p149 = pneg %p148
    // Predicated region
    $region9: #{_lambda_.20} parent=5 // pred_check
      _
    $region10: #{_lambda_.20} parent=5 // pred_check_branch
      %151 = sbr.rel (%p148) target = $region12
    $region11: #{_lambda_.20} parent=5 // pred_region
      %s152 = ssub.s32 %s9, 1
      // Predicated region
      $region13: #{_lambda_.20} parent=11 // pred_check
        %p153 = pneg %p84
      $region14: #{_lambda_.20} parent=11 // pred_check_branch
        %155 = sbr.rel (%p153) target = $region16
      $region15: #{_lambda_.20} parent=11 // pred_region
        %s156 = smul.u32 32, %s21
        %p157 = scmp.lt.s32.totalorder %s156, 31
        %s158 = scalar_select %p157, %s156, 31
        %p159 = scmp.lt.s32.totalorder %s20, 0
        %s160 = scalar_select %p159, %s20, 0
        %s161 = sadd.s32 %s160, %s158
        %s162 = smul.addr %s161, 4
        %s163 = scalar_lea.vmem %s1, %s162
        %s164 = smul.u32 32, %s21
      $region16: #{_lambda_.20} parent=11 // pred_fallthru
        _
      // Predicated region
      $region17: #{_lambda_.20} parent=11 // pred_check
        %p165 = pneg %p110
      $region18: #{_lambda_.20} parent=11 // pred_check_branch
        %167 = sbr.rel (%p165) target = $region20
      $region19: #{_lambda_.20} parent=11 // pred_region
        %p168 = scmp.lt.s32.totalorder %s20, 0
        %s169 = scalar_select %p168, %s20, 0
        %s170 = scalar_lea.vmem %s2, %s169
      $region20: #{_lambda_.20} parent=11 // pred_fallthru
        _
    $region12: #{_lambda_.20} parent=5 // pred_fallthru
      _
    %p171 = scmp.lt.s32.totalorder %s9, 4
    // Predicated region
    $region21: #{_lambda_.20} parent=5 // pred_check
      %p172 = pneg %p171
    $region22: #{_lambda_.20} parent=5 // pred_check_branch
      %174 = sbr.rel (%p172) target = $region24
    $region23: #{_lambda_.20} parent=5 // pred_region
      // Predicated region
      $region25: #{_lambda_.20} parent=23 // pred_check
        %p175 = pneg %p50
      $region26: #{_lambda_.20} parent=23 // pred_check_branch
        %177 = sbr.rel (%p175) target = $region28
      $region27: #{_lambda_.20} parent=23 // pred_region
        %s178 = smul.u32 16, %s16
        %s179 = smul.u32 2, %s18
        %p180 = scmp.lt.s32.totalorder %s178, 63
        %s181 = scalar_select %p180, %s178, 63
        %p182 = scmp.lt.s32.totalorder %s179, 1
        %s183 = scalar_select %p182, %s179, 1
        %s184 = smul.addr %s181, 2
        %s185 = sadd.s32 %s183, %s184
        %s186 = smul.addr %s185, 4
        %s187 = scalar_lea.vmem %s0, %s186
        %s188 = smul.u32 16, %s16
        %s189 = smul.u32 2, %s18
      $region28: #{_lambda_.20} parent=23 // pred_fallthru
        _
    $region24: #{_lambda_.20} parent=5 // pred_fallthru
      _
    %p190 = scmp.le.s32.totalorder 1, %s9
    %p191 = scmp.lt.s32.totalorder %s9, 5
    %p192 = pnand %p190, %p191
    %p193 = pneg %p192
    // Predicated region
    $region29: #{_lambda_.20} parent=5 // pred_check
      _
    $region30: #{_lambda_.20} parent=5 // pred_check_branch
      %195 = sbr.rel (%p192) target = $region32
    $region31: #{_lambda_.20} parent=5 // pred_region
      %s196 = ssub.s32 %s9, 1
      %s197 = smul.u32 16, %s19
      %s198 = smul.u32 2, %s21
      %p199 = scmp.lt.s32.totalorder %s197, 63
      %s200 = scalar_select %p199, %s197, 63
      %p201 = scmp.lt.s32.totalorder %s198, 1
      %s202 = scalar_select %p201, %s198, 1
      %s203 = smul.addr %s200, 2
      %s204 = sadd.s32 %s202, %s203
      %s205 = smul.addr %s204, 4
      %s206 = scalar_lea.vmem %s0, %s205
      %p207 = pneg %p56
      %p208 = pneg %p53
      %s209 = smul.u32 32, %s21
      %p210 = scmp.lt.s32.totalorder %s209, 31
      %s211 = scalar_select %p210, %s209, 31
      %p212 = scmp.lt.s32.totalorder %s20, 0
      %s213 = scalar_select %p212, %s20, 0
      %s214 = sadd.s32 %s213, %s211
      %s215 = smul.addr %s214, 4
      %s216 = scalar_lea.vmem %s1, %s215
      %p217 = pneg %p84
      %p218 = pneg %p81
      %p219 = scmp.lt.s32.totalorder %s20, 0
      %s220 = scalar_select %p219, %s20, 0
      %s221 = scalar_lea.vmem %s2, %s220
      %p222 = pneg %p110
      %p223 = pneg %p107
      %p224 = pneg %p138
      %p225 = pneg %p135
      %s226 = smul.u32 16, %s19
      %p227 = scmp.lt.s32.totalorder %s226, 63
      %s228 = scalar_select %p227, %s226, 63
      %p229 = scmp.lt.s32.totalorder %s20, 0
      %s230 = scalar_select %p229, %s20, 0
      %s231 = sadd.s32 %s230, %s228
      %s232 = smul.addr %s231, 4
      %s233 = scalar_lea.vmem %s3, %s232
      %s234 = smul.u32 16, %s19
      %s235 = smul.u32 2, %s21
      %p236 = scmp.lt.s32.totalorder %s234, 63
      %s237 = scalar_select %p236, %s234, 63
      %p238 = scmp.lt.s32.totalorder %s235, 1
      %s239 = scalar_select %p238, %s235, 1
      %s240 = smul.addr %s237, 2
      %s241 = sadd.s32 %s239, %s240
      %s242 = smul.addr %s241, 4
      %s243 = scalar_lea.vmem %s0, %s242
      %s244 = smul.u32 16, %s19
      %s245 = smul.u32 2, %s21
      %s246 = smul.u32 32, %s21
      %p247 = scmp.lt.s32.totalorder %s246, 31
      %s248 = scalar_select %p247, %s246, 31
      %p249 = scmp.lt.s32.totalorder %s20, 0
      %s250 = scalar_select %p249, %s20, 0
      %s251 = sadd.s32 %s250, %s248
      %s252 = smul.addr %s251, 4
      %s253 = scalar_lea.vmem %s1, %s252
      %s254 = smul.u32 32, %s21
      %p255 = scmp.lt.s32.totalorder %s20, 0
      %s256 = scalar_select %p255, %s20, 0
      %s257 = scalar_lea.vmem %s2, %s256
      %s258 = smul.u32 16, %s19
      %p259 = scmp.lt.s32.totalorder %s258, 63
      %s260 = scalar_select %p259, %s258, 63
      %p261 = scmp.lt.s32.totalorder %s20, 0
      %s262 = scalar_select %p261, %s20, 0
      %s263 = sadd.s32 %s262, %s260
      %s264 = smul.addr %s263, 4
      %s265 = scalar_lea.vmem %s3, %s264
      %s266 = smul.u32 16, %s19
      %p267 = scmp.eq.s32.totalorder %s21, 0
      // Predicated region
      $region33: #{_lambda_.20} parent=31 // pred_check
        %p268 = pneg %p267
      $region34: #{_lambda_.20} parent=31 // pred_check_branch
        %270 = sbr.rel (%p268) target = $region36
      $region35: #{_lambda_.20} parent=31 // pred_region
        %271 = vst [vmem:[#allocation2] sm:$0xff] 0.0
        %272 = vst [vmem:[#allocation2 + $0x8] sm:$0xff] 0.0
        %273 = vst [vmem:[#allocation2 + $0x10] sm:$0xff] 0.0
        %274 = vst [vmem:[#allocation2 + $0x18] sm:$0xff] 0.0
        %275 = vst [vmem:[#allocation2 + $0x20] sm:$0xff] 0.0
        %276 = vst [vmem:[#allocation2 + $0x28] sm:$0xff] 0.0
        %277 = vst [vmem:[#allocation2 + $0x30] sm:$0xff] 0.0
        %278 = vst [vmem:[#allocation2 + $0x38] sm:$0xff] 0.0
        %279 = vst [vmem:[#allocation2 + $0x40] sm:$0xff] 0.0
        %280 = vst [vmem:[#allocation2 + $0x48] sm:$0xff] 0.0
        %281 = vst [vmem:[#allocation2 + $0x50] sm:$0xff] 0.0
        %282 = vst [vmem:[#allocation2 + $0x58] sm:$0xff] 0.0
        %283 = vst [vmem:[#allocation2 + $0x60] sm:$0xff] 0.0
        %284 = vst [vmem:[#allocation2 + $0x68] sm:$0xff] 0.0
        %285 = vst [vmem:[#allocation2 + $0x70] sm:$0xff] 0.0
        %286 = vst [vmem:[#allocation2 + $0x78] sm:$0xff] 0.0
      $region36: #{_lambda_.20} parent=31 // pred_fallthru
        _
      %v287 = vld [vmem:[#allocation2] sm:$0xff]
      %v288 = vld [vmem:[#allocation2 + $0x8] sm:$0xff]
      %v289 = vld [vmem:[#allocation2 + $0x10] sm:$0xff]
      %v290 = vld [vmem:[#allocation2 + $0x18] sm:$0xff]
      %v291 = vld [vmem:[#allocation2 + $0x20] sm:$0xff]
      %v292 = vld [vmem:[#allocation2 + $0x28] sm:$0xff]
      %v293 = vld [vmem:[#allocation2 + $0x30] sm:$0xff]
      %v294 = vld [vmem:[#allocation2 + $0x38] sm:$0xff]
      %v295 = vld [vmem:[#allocation2 + $0x40] sm:$0xff]
      %v296 = vld [vmem:[#allocation2 + $0x48] sm:$0xff]
      %v297 = vld [vmem:[#allocation2 + $0x50] sm:$0xff]
      %v298 = vld [vmem:[#allocation2 + $0x58] sm:$0xff]
      %v299 = vld [vmem:[#allocation2 + $0x60] sm:$0xff]
      %v300 = vld [vmem:[#allocation2 + $0x68] sm:$0xff]
      %v301 = vld [vmem:[#allocation2 + $0x70] sm:$0xff]
      %v302 = vld [vmem:[#allocation2 + $0x78] sm:$0xff]
      %v303 = vld [vmem:[%s243] sm:$0xff]
      %v304 = vld [vmem:[%s243 + $0x8] sm:$0xff]
      %v305 = vld [vmem:[%s243 + $0x10] sm:$0xff]
      %v306 = vld [vmem:[%s243 + $0x18] sm:$0xff]
      %v307 = vld [vmem:[%s243 + $0x20] sm:$0xff]
      %v308 = vld [vmem:[%s243 + $0x28] sm:$0xff]
      %v309 = vld [vmem:[%s243 + $0x30] sm:$0xff]
      %v310 = vld [vmem:[%s243 + $0x38] sm:$0xff]
      %v311 = vld [vmem:[%s243 + $0x40] sm:$0xff]
      %v312 = vld [vmem:[%s243 + $0x48] sm:$0xff]
      %v313 = vld [vmem:[%s243 + $0x50] sm:$0xff]
      %v314 = vld [vmem:[%s243 + $0x58] sm:$0xff]
      %v315 = vld [vmem:[%s243 + $0x60] sm:$0xff]
      %v316 = vld [vmem:[%s243 + $0x68] sm:$0xff]
      %v317 = vld [vmem:[%s243 + $0x70] sm:$0xff]
      %v318 = vld [vmem:[%s243 + $0x78] sm:$0xff]
      %v319 = vld [vmem:[%s253] sm:$0xf]
      %v320 = vld [vmem:[%s253 + $0x4] sm:$0xf]
      %v321 = vld [vmem:[%s253 + $0x8] sm:$0xf]
      %v322 = vld [vmem:[%s253 + $0xc] sm:$0xf]
      %v323 = vld [vmem:[%s253 + $0x10] sm:$0xf]
      %v324 = vld [vmem:[%s253 + $0x14] sm:$0xf]
      %v325 = vld [vmem:[%s253 + $0x18] sm:$0xf]
      %v326 = vld [vmem:[%s253 + $0x1c] sm:$0xf]
      %v327 = vld [vmem:[%s253 + $0x20] sm:$0xf]
      %v328 = vld [vmem:[%s253 + $0x24] sm:$0xf]
      %v329 = vld [vmem:[%s253 + $0x28] sm:$0xf]
      %v330 = vld [vmem:[%s253 + $0x2c] sm:$0xf]
      %v331 = vld [vmem:[%s253 + $0x30] sm:$0xf]
      %v332 = vld [vmem:[%s253 + $0x34] sm:$0xf]
      %v333 = vld [vmem:[%s253 + $0x38] sm:$0xf]
      %v334 = vld [vmem:[%s253 + $0x3c] sm:$0xf]
      %v335 = vld [vmem:[%s253 + $0x40] sm:$0xf]
      %v336 = vld [vmem:[%s253 + $0x44] sm:$0xf]
      %v337 = vld [vmem:[%s253 + $0x48] sm:$0xf]
      %v338 = vld [vmem:[%s253 + $0x4c] sm:$0xf]
      %v339 = vld [vmem:[%s253 + $0x50] sm:$0xf]
      %v340 = vld [vmem:[%s253 + $0x54] sm:$0xf]
      %v341 = vld [vmem:[%s253 + $0x58] sm:$0xf]
      %v342 = vld [vmem:[%s253 + $0x5c] sm:$0xf]
      %v343 = vld [vmem:[%s253 + $0x60] sm:$0xf]
      %v344 = vld [vmem:[%s253 + $0x64] sm:$0xf]
      %v345 = vld [vmem:[%s253 + $0x68] sm:$0xf]
      %v346 = vld [vmem:[%s253 + $0x6c] sm:$0xf]
      %v347 = vld [vmem:[%s253 + $0x70] sm:$0xf]
      %v348 = vld [vmem:[%s253 + $0x74] sm:$0xf]
      %v349 = vld [vmem:[%s253 + $0x78] sm:$0xf]
      %v350 = vld [vmem:[%s253 + $0x7c] sm:$0xf]
      %v367 = vunpack.c.l.b16 %v303
      %v368 = vunpack.c.h.b16 %v303
      %v369 = vunpack.c.l.b16 %v304
      %v370 = vunpack.c.h.b16 %v304
      %v371 = vunpack.c.l.b16 %v305
      %v372 = vunpack.c.h.b16 %v305
      %v373 = vunpack.c.l.b16 %v306
      %v374 = vunpack.c.h.b16 %v306
      %v375 = vunpack.c.l.b16 %v307
      %v376 = vunpack.c.h.b16 %v307
      %v377 = vunpack.c.l.b16 %v308
      %v378 = vunpack.c.h.b16 %v308
      %v379 = vunpack.c.l.b16 %v309
      %v380 = vunpack.c.h.b16 %v309
      %v381 = vunpack.c.l.b16 %v310
      %v382 = vunpack.c.h.b16 %v310
      %v383 = vunpack.c.l.b16 %v311
      %v384 = vunpack.c.h.b16 %v311
      %v385 = vunpack.c.l.b16 %v312
      %v386 = vunpack.c.h.b16 %v312
      %v387 = vunpack.c.l.b16 %v313
      %v388 = vunpack.c.h.b16 %v313
      %v389 = vunpack.c.l.b16 %v314
      %v390 = vunpack.c.h.b16 %v314
      %v391 = vunpack.c.l.b16 %v315
      %v392 = vunpack.c.h.b16 %v315
      %v393 = vunpack.c.l.b16 %v316
      %v394 = vunpack.c.h.b16 %v316
      %v395 = vunpack.c.l.b16 %v317
      %v396 = vunpack.c.h.b16 %v317
      %v397 = vunpack.c.l.b16 %v318
      %v398 = vunpack.c.h.b16 %v318
      %v399 = vpack.c.b16 %v369, %v367
      %v400 = vpack.c.b16 %v370, %v368
      %v401 = vpack.c.b16 %v373, %v371
      %v402 = vpack.c.b16 %v374, %v372
      %v403 = vpack.c.b16 %v377, %v375
      %v404 = vpack.c.b16 %v378, %v376
      %v405 = vpack.c.b16 %v381, %v379
      %v406 = vpack.c.b16 %v382, %v380
      %v407 = vpack.c.b16 %v385, %v383
      %v408 = vpack.c.b16 %v386, %v384
      %v409 = vpack.c.b16 %v389, %v387
      %v410 = vpack.c.b16 %v390, %v388
      %v411 = vpack.c.b16 %v393, %v391
      %v412 = vpack.c.b16 %v394, %v392
      %v413 = vpack.c.b16 %v397, %v395
      %v414 = vpack.c.b16 %v398, %v396
      %v463 = vunpack.c.l.b16 %v319
      %v464 = vunpack.c.l.b16 %v320
      %v465 = vunpack.c.l.b16 %v321
      %v466 = vunpack.c.l.b16 %v322
      %v467 = vunpack.c.l.b16 %v323
      %v468 = vunpack.c.l.b16 %v324
      %v469 = vunpack.c.l.b16 %v325
      %v470 = vunpack.c.l.b16 %v326
      %v471 = vunpack.c.l.b16 %v327
      %v472 = vunpack.c.l.b16 %v328
      %v473 = vunpack.c.l.b16 %v329
      %v474 = vunpack.c.l.b16 %v330
      %v475 = vunpack.c.l.b16 %v331
      %v476 = vunpack.c.l.b16 %v332
      %v477 = vunpack.c.l.b16 %v333
      %v478 = vunpack.c.l.b16 %v334
      %v479 = vunpack.c.l.b16 %v335
      %v480 = vunpack.c.l.b16 %v336
      %v481 = vunpack.c.l.b16 %v337
      %v482 = vunpack.c.l.b16 %v338
      %v483 = vunpack.c.l.b16 %v339
      %v484 = vunpack.c.l.b16 %v340
      %v485 = vunpack.c.l.b16 %v341
      %v486 = vunpack.c.l.b16 %v342
      %v487 = vunpack.c.l.b16 %v343
      %v488 = vunpack.c.l.b16 %v344
      %v489 = vunpack.c.l.b16 %v345
      %v490 = vunpack.c.l.b16 %v346
      %v491 = vunpack.c.l.b16 %v347
      %v492 = vunpack.c.l.b16 %v348
      %v493 = vunpack.c.l.b16 %v349
      %v494 = vunpack.c.l.b16 %v350
      %v495 = vpack.c.b16 %v464, %v463
      %v496 = vpack.c.b16 %v466, %v465
      %v497 = vpack.c.b16 %v468, %v467
      %v498 = vpack.c.b16 %v470, %v469
      %v499 = vpack.c.b16 %v472, %v471
      %v500 = vpack.c.b16 %v474, %v473
      %v501 = vpack.c.b16 %v476, %v475
      %v502 = vpack.c.b16 %v478, %v477
      %v503 = vpack.c.b16 %v480, %v479
      %v504 = vpack.c.b16 %v482, %v481
      %v505 = vpack.c.b16 %v484, %v483
      %v506 = vpack.c.b16 %v486, %v485
      %v507 = vpack.c.b16 %v488, %v487
      %v508 = vpack.c.b16 %v490, %v489
      %v509 = vpack.c.b16 %v492, %v491
      %v510 = vpack.c.b16 %v494, %v493
      %527 = vmatpush.bf16.msra.mxu0 %v502
      %528 = vmatpush.bf16.msra.mxu0 %v501
      %529 = vmatpush.bf16.msra.mxu0 %v500
      %530 = vmatpush.bf16.msra.mxu0 %v499
      %531 = vmatpush.bf16.msra.mxu0 %v498
      %532 = vmatpush.bf16.msra.mxu0 %v497
      %533 = vmatpush.bf16.msra.mxu0 %v496
      %534 = vmatpush.bf16.msra.mxu0 %v495
      %535 = vmatmul.bf16.gmra.mxu0 %v399
      %v536 = vpop.f32.mrf.mxu0
      %v537 = vadd.f32 0.0, %v536
      %v538 = vpop.f32.mrf.mxu0
      %v539 = vadd.f32 0.0, %v538
      %540 = vmatmul.bf16.gmra.mxu0 %v401
      %v541 = vpop.f32.mrf.mxu0
      %v542 = vadd.f32 0.0, %v541
      %v543 = vpop.f32.mrf.mxu0
      %v544 = vadd.f32 0.0, %v543
      %545 = vmatmul.bf16.gmra.mxu0 %v403
      %v546 = vpop.f32.mrf.mxu0
      %v547 = vadd.f32 0.0, %v546
      %v548 = vpop.f32.mrf.mxu0
      %v549 = vadd.f32 0.0, %v548
      %550 = vmatmul.bf16.gmra.mxu0 %v405
      %v551 = vpop.f32.mrf.mxu0
      %v552 = vadd.f32 0.0, %v551
      %v553 = vpop.f32.mrf.mxu0
      %v554 = vadd.f32 0.0, %v553
      %555 = vmatmul.bf16.gmra.mxu0 %v407
      %v556 = vpop.f32.mrf.mxu0
      %v557 = vadd.f32 0.0, %v556
      %v558 = vpop.f32.mrf.mxu0
      %v559 = vadd.f32 0.0, %v558
      %560 = vmatmul.bf16.gmra.mxu0 %v409
      %v561 = vpop.f32.mrf.mxu0
      %v562 = vadd.f32 0.0, %v561
      %v563 = vpop.f32.mrf.mxu0
      %v564 = vadd.f32 0.0, %v563
      %565 = vmatmul.bf16.gmra.mxu0 %v411
      %v566 = vpop.f32.mrf.mxu0
      %v567 = vadd.f32 0.0, %v566
      %v568 = vpop.f32.mrf.mxu0
      %v569 = vadd.f32 0.0, %v568
      %570 = vmatmul.bf16.gmra.mxu0 %v413
      %v571 = vpop.f32.mrf.mxu0
      %v572 = vadd.f32 0.0, %v571
      %v573 = vpop.f32.mrf.mxu0
      %v574 = vadd.f32 0.0, %v573
      %575 = vdwg.mxu0
      %576 = vmatpush.bf16.msra.mxu0 %v510
      %577 = vmatpush.bf16.msra.mxu0 %v509
      %578 = vmatpush.bf16.msra.mxu0 %v508
      %579 = vmatpush.bf16.msra.mxu0 %v507
      %580 = vmatpush.bf16.msra.mxu0 %v506
      %581 = vmatpush.bf16.msra.mxu0 %v505
      %582 = vmatpush.bf16.msra.mxu0 %v504
      %583 = vmatpush.bf16.msra.mxu0 %v503
      %584 = vmatmul.bf16.gmra.mxu0 %v400
      %v585 = vpop.f32.mrf.mxu0
      %v586 = vadd.f32 %v537, %v585
      %v587 = vpop.f32.mrf.mxu0
      %v588 = vadd.f32 %v539, %v587
      %589 = vmatmul.bf16.gmra.mxu0 %v402
      %v590 = vpop.f32.mrf.mxu0
      %v591 = vadd.f32 %v542, %v590
      %v592 = vpop.f32.mrf.mxu0
      %v593 = vadd.f32 %v544, %v592
      %594 = vmatmul.bf16.gmra.mxu0 %v404
      %v595 = vpop.f32.mrf.mxu0
      %v596 = vadd.f32 %v547, %v595
      %v597 = vpop.f32.mrf.mxu0
      %v598 = vadd.f32 %v549, %v597
      %599 = vmatmul.bf16.gmra.mxu0 %v406
      %v600 = vpop.f32.mrf.mxu0
      %v601 = vadd.f32 %v552, %v600
      %v602 = vpop.f32.mrf.mxu0
      %v603 = vadd.f32 %v554, %v602
      %604 = vmatmul.bf16.gmra.mxu0 %v408
      %v605 = vpop.f32.mrf.mxu0
      %v606 = vadd.f32 %v557, %v605
      %v607 = vpop.f32.mrf.mxu0
      %v608 = vadd.f32 %v559, %v607
      %609 = vmatmul.bf16.gmra.mxu0 %v410
      %v610 = vpop.f32.mrf.mxu0
      %v611 = vadd.f32 %v562, %v610
      %v612 = vpop.f32.mrf.mxu0
      %v613 = vadd.f32 %v564, %v612
      %614 = vmatmul.bf16.gmra.mxu0 %v412
      %v615 = vpop.f32.mrf.mxu0
      %v616 = vadd.f32 %v567, %v615
      %v617 = vpop.f32.mrf.mxu0
      %v618 = vadd.f32 %v569, %v617
      %619 = vmatmul.bf16.gmra.mxu0 %v414
      %v620 = vpop.f32.mrf.mxu0
      %v621 = vadd.f32 %v572, %v620
      %v622 = vpop.f32.mrf.mxu0
      %v623 = vadd.f32 %v574, %v622
      %624 = vdwg.mxu0
      %v625 = vadd.f32 %v287, %v586
      %v626 = vadd.f32 %v288, %v588
      %v627 = vadd.f32 %v289, %v591
      %v628 = vadd.f32 %v290, %v593
      %v629 = vadd.f32 %v291, %v596
      %v630 = vadd.f32 %v292, %v598
      %v631 = vadd.f32 %v293, %v601
      %v632 = vadd.f32 %v294, %v603
      %v633 = vadd.f32 %v295, %v606
      %v634 = vadd.f32 %v296, %v608
      %v635 = vadd.f32 %v297, %v611
      %v636 = vadd.f32 %v298, %v613
      %v637 = vadd.f32 %v299, %v616
      %v638 = vadd.f32 %v300, %v618
      %v639 = vadd.f32 %v301, %v621
      %v640 = vadd.f32 %v302, %v623
      %641 = vst [vmem:[#allocation2] sm:$0xff] %v625
      %642 = vst [vmem:[#allocation2 + $0x8] sm:$0xff] %v626
      %643 = vst [vmem:[#allocation2 + $0x10] sm:$0xff] %v627
      %644 = vst [vmem:[#allocation2 + $0x18] sm:$0xff] %v628
      %645 = vst [vmem:[#allocation2 + $0x20] sm:$0xff] %v629
      %646 = vst [vmem:[#allocation2 + $0x28] sm:$0xff] %v630
      %647 = vst [vmem:[#allocation2 + $0x30] sm:$0xff] %v631
      %648 = vst [vmem:[#allocation2 + $0x38] sm:$0xff] %v632
      %649 = vst [vmem:[#allocation2 + $0x40] sm:$0xff] %v633
      %650 = vst [vmem:[#allocation2 + $0x48] sm:$0xff] %v634
      %651 = vst [vmem:[#allocation2 + $0x50] sm:$0xff] %v635
      %652 = vst [vmem:[#allocation2 + $0x58] sm:$0xff] %v636
      %653 = vst [vmem:[#allocation2 + $0x60] sm:$0xff] %v637
      %654 = vst [vmem:[#allocation2 + $0x68] sm:$0xff] %v638
      %655 = vst [vmem:[#allocation2 + $0x70] sm:$0xff] %v639
      %656 = vst [vmem:[#allocation2 + $0x78] sm:$0xff] %v640
      // Predicated region
      $region37: #{_lambda_.20} parent=31 // pred_check
        %p657 = pneg %p267
      $region38: #{_lambda_.20} parent=31 // pred_check_branch
        %659 = sbr.rel (%p657) target = $region40
      $region39: #{_lambda_.20} parent=31 // pred_region
        %v660 = vld [vmem:[#allocation2] sm:$0xff]
        %v661 = vld [vmem:[#allocation2 + $0x8] sm:$0xff]
        %v662 = vld [vmem:[#allocation2 + $0x10] sm:$0xff]
        %v663 = vld [vmem:[#allocation2 + $0x18] sm:$0xff]
        %v664 = vld [vmem:[#allocation2 + $0x20] sm:$0xff]
        %v665 = vld [vmem:[#allocation2 + $0x28] sm:$0xff]
        %v666 = vld [vmem:[#allocation2 + $0x30] sm:$0xff]
        %v667 = vld [vmem:[#allocation2 + $0x38] sm:$0xff]
        %v668 = vld [vmem:[#allocation2 + $0x40] sm:$0xff]
        %v669 = vld [vmem:[#allocation2 + $0x48] sm:$0xff]
        %v670 = vld [vmem:[#allocation2 + $0x50] sm:$0xff]
        %v671 = vld [vmem:[#allocation2 + $0x58] sm:$0xff]
        %v672 = vld [vmem:[#allocation2 + $0x60] sm:$0xff]
        %v673 = vld [vmem:[#allocation2 + $0x68] sm:$0xff]
        %v674 = vld [vmem:[#allocation2 + $0x70] sm:$0xff]
        %v675 = vld [vmem:[#allocation2 + $0x78] sm:$0xff]
        %v676 = vld [vmem:[%s257] sm:$0x1]
        %v678 = vperm.slane %v676, 0
        %v680 = vadd.f32 %v660, %v678
        %v681 = vadd.f32 %v661, %v678
        %v682 = vadd.f32 %v662, %v678
        %v683 = vadd.f32 %v663, %v678
        %v684 = vadd.f32 %v664, %v678
        %v685 = vadd.f32 %v665, %v678
        %v686 = vadd.f32 %v666, %v678
        %v687 = vadd.f32 %v667, %v678
        %v688 = vadd.f32 %v668, %v678
        %v689 = vadd.f32 %v669, %v678
        %v690 = vadd.f32 %v670, %v678
        %v691 = vadd.f32 %v671, %v678
        %v692 = vadd.f32 %v672, %v678
        %v693 = vadd.f32 %v673, %v678
        %v694 = vadd.f32 %v674, %v678
        %v695 = vadd.f32 %v675, %v678
        %v696 = vmax.f32 %v680, 0.0
        %v697 = vmax.f32 %v681, 0.0
        %v698 = vmax.f32 %v682, 0.0
        %v699 = vmax.f32 %v683, 0.0
        %v700 = vmax.f32 %v684, 0.0
        %v701 = vmax.f32 %v685, 0.0
        %v702 = vmax.f32 %v686, 0.0
        %v703 = vmax.f32 %v687, 0.0
        %v704 = vmax.f32 %v688, 0.0
        %v705 = vmax.f32 %v689, 0.0
        %v706 = vmax.f32 %v690, 0.0
        %v707 = vmax.f32 %v691, 0.0
        %v708 = vmax.f32 %v692, 0.0
        %v709 = vmax.f32 %v693, 0.0
        %v710 = vmax.f32 %v694, 0.0
        %v711 = vmax.f32 %v695, 0.0
        %v712 = vpack.c.bf16 %v696, %v696
        %v713 = vpack.c.bf16 %v697, %v697
        %v714 = vpack.c.bf16 %v698, %v698
        %v715 = vpack.c.bf16 %v699, %v699
        %v716 = vpack.c.bf16 %v700, %v700
        %v717 = vpack.c.bf16 %v701, %v701
        %v718 = vpack.c.bf16 %v702, %v702
        %v719 = vpack.c.bf16 %v703, %v703
        %v720 = vpack.c.bf16 %v704, %v704
        %v721 = vpack.c.bf16 %v705, %v705
        %v722 = vpack.c.bf16 %v706, %v706
        %v723 = vpack.c.bf16 %v707, %v707
        %v724 = vpack.c.bf16 %v708, %v708
        %v725 = vpack.c.bf16 %v709, %v709
        %v726 = vpack.c.bf16 %v710, %v710
        %v727 = vpack.c.bf16 %v711, %v711
        %728 = vst [vmem:[%s265] sm:$0xf] %v712
        %729 = vst [vmem:[%s265 + $0x4] sm:$0xf] %v713
        %730 = vst [vmem:[%s265 + $0x8] sm:$0xf] %v714
        %731 = vst [vmem:[%s265 + $0xc] sm:$0xf] %v715
        %732 = vst [vmem:[%s265 + $0x10] sm:$0xf] %v716
        %733 = vst [vmem:[%s265 + $0x14] sm:$0xf] %v717
        %734 = vst [vmem:[%s265 + $0x18] sm:$0xf] %v718
        %735 = vst [vmem:[%s265 + $0x1c] sm:$0xf] %v719
        %736 = vst [vmem:[%s265 + $0x20] sm:$0xf] %v720
        %737 = vst [vmem:[%s265 + $0x24] sm:$0xf] %v721
        %738 = vst [vmem:[%s265 + $0x28] sm:$0xf] %v722
        %739 = vst [vmem:[%s265 + $0x2c] sm:$0xf] %v723
        %740 = vst [vmem:[%s265 + $0x30] sm:$0xf] %v724
        %741 = vst [vmem:[%s265 + $0x34] sm:$0xf] %v725
        %742 = vst [vmem:[%s265 + $0x38] sm:$0xf] %v726
        %743 = vst [vmem:[%s265 + $0x3c] sm:$0xf] %v727
      $region40: #{_lambda_.20} parent=31 // pred_fallthru
        _
      %s744 = smul.u32 16, %s19
      %p745 = scmp.lt.s32.totalorder %s744, 63
      %s746 = scalar_select %p745, %s744, 63
      %p747 = scmp.lt.s32.totalorder %s20, 0
      %s748 = scalar_select %p747, %s20, 0
      %s749 = sadd.s32 %s748, %s746
      %s750 = smul.addr %s749, 4
      %s751 = scalar_lea.vmem %s3, %s750
      // Predicated region
      $region41: #{_lambda_.20} parent=31 // pred_check
        %p752 = pneg %p135
      $region42: #{_lambda_.20} parent=31 // pred_check_branch
        %754 = sbr.rel (%p752) target = $region44
      $region43: #{_lambda_.20} parent=31 // pred_region
        %s755 = smul.u32 16, %s19
      $region44: #{_lambda_.20} parent=31 // pred_fallthru
        _
    $region32: #{_lambda_.20} parent=5 // pred_fallthru
      _
    %p756 = scmp.le.s32.totalorder 2, %s9
    // Predicated region
    $region45: #{_lambda_.20} parent=5 // pred_check
      %p757 = pneg %p756
    $region46: #{_lambda_.20} parent=5 // pred_check_branch
      %759 = sbr.rel (%p757) target = $region48
    $region47: #{_lambda_.20} parent=5 // pred_region
      %s760 = ssub.s32 %s9, 2
      // Predicated region
      $region49: #{_lambda_.20} parent=47 // pred_check
        %p761 = pneg %p141
      $region50: #{_lambda_.20} parent=47 // pred_check_branch
        %763 = sbr.rel (%p761) target = $region52
      $region51: #{_lambda_.20} parent=47 // pred_region
        %s764 = smul.u32 16, %s22
        %p765 = scmp.lt.s32.totalorder %s764, 63
        %s766 = scalar_select %p765, %s764, 63
        %p767 = scmp.lt.s32.totalorder %s23, 0
        %s768 = scalar_select %p767, %s23, 0
        %s769 = sadd.s32 %s768, %s766
        %s770 = smul.addr %s769, 4
        %s771 = scalar_lea.vmem %s3, %s770
      $region52: #{_lambda_.20} parent=47 // pred_fallthru
        _
    $region48: #{_lambda_.20} parent=5 // pred_fallthru
      _
  $region6: #{_lambda_.20} parent=0 // loop_footer
    %s13 = sadd.s32 1, %s9
  $region7: #{_lambda_.20} parent=0 // loop_footer_branch
    %8 = sbr.rel target = $region3
  $region8: #{_lambda_.20} parent=0 // loop_exit
    _

// kernel: _lambda_.21
$region0: #{_lambda_.21}
  #allocation0 [shape = 'u32[]', space=smem, size = 0x4, offset = 0x4, fixed_abs, tag = 'smem constant byte address 0x4 - core index']
  #allocation1 [shape = 'u32[72,128]{1,0:T(1,128)}', space=vmem, size = 0x9000, scoped, tag = 'internal scratch']
  #allocation2 [shape = 'f32[128,128]{1,0:T(8,128)}', space=vmem, size = 0x10000, scoped, tag = 'scratch operand']
  %s0 = inlined_call_operand.vmem [shape: bf16[128,1152], index: 0, kind: input, shape index: {}]
  %s1 = inlined_call_operand.vmem [shape: bf16[1152,128], index: 1, kind: input, shape index: {}]
  %s2 = inlined_call_operand.vmem [shape: f32[1,128], index: 2, kind: input, shape index: {}]
  %s3 = inlined_call_operand.vmem [shape: bf16[128,128], index: 3, kind: output, shape index: {}]
  %s4 = sld [smem:[#allocation0]]
  $region79: #{_lambda_.21} parent=0
    _
  %s6 = ssub.s32 1, %s4
  %s7 = scalar_select 0, %s6, %s4
  $region1: #{_lambda_.21} parent=0
    #allocation3 [shape = 'u8[196608]{0}', space=vmem, size = 0x30000, scoped, tag = 'input window, operand 0']
    loop: start=0, step=1, limit=5
    $region2: #{_lambda_.21} parent=1 // loop_pre_header
      _
    $region3: #{_lambda_.21} parent=1 // loop_header
      %s9 = sphi 0, %s13
      %p10 = scmp.ge.s32.totalorder %s9, 5
      %s16 = sphi 0, %s35
      %s17 = sphi 0, %s31
      %s18 = sphi 0, %s27
      %s19 = sphi 0, %s16
      %s20 = sphi 0, %s17
      %s21 = sphi 0, %s18
      %s22 = sphi 0, %s19
      %s23 = sphi 0, %s20
      %s24 = sphi 0, %s21
      %s40 = sphi 0, %s42
      %s43 = sphi 0, %s40
      %s44 = sphi 0, %s43
      %s60 = sphi 0, %s44
      %s68 = sphi 0, %s70
      %s71 = sphi 0, %s68
      %s72 = sphi 0, %s71
      %s88 = sphi 0, %s72
      %s94 = sphi 0, %s96
      %s97 = sphi 0, %s94
      %s98 = sphi 0, %s97
      %s114 = sphi 0, %s98
      %s122 = sphi 0, %s124
      %s125 = sphi 0, %s122
      %s126 = sphi 0, %s125
      %s142 = sphi 0, %s126
    $region4: #{_lambda_.21} parent=1 // loop_header_branch
      %12 = sbr.rel (%p10) target = $region8
    $region5: #{_lambda_.21} parent=1 // loop_body
      %s14 = ssub.s32 %s9, 1
      %s15 = ssub.s32 %s9, 2
      %s25 = sadd.s32 1, %s18
      %p26 = scmp.ge.s32.totalorder %s25, 3
      %s27 = scalar_select %p26, 0, %s25
      %s28 = sadd.s32 1, %s17
      %s29 = scalar_select %p26, %s28, %s17
      %p30 = scmp.ge.s32.totalorder %s29, 1
      %s31 = scalar_select %p30, 0, %s29
      %s32 = sadd.s32 1, %s16
      %s33 = scalar_select %p30, %s32, %s16
      %p34 = scmp.ge.s32.totalorder %s33, 1
      %s35 = scalar_select %p34, 0, %s33
      %s36 = ssub.s32 %s16, %s35
      %s37 = ssub.s32 %s18, %s27
      %s38 = sor.u32 %s36, %s37
      %p39 = scmp.eq.s32.totalorder %s38, 0
      %s41 = sadd.s32 %s40, 1
      %s42 = scalar_select %p39, %s40, %s41
      %p45 = pneg %p39
      %p46 = scmp.eq.s32.totalorder %s9, 2
      %p47 = por %p45, %p46
      %p48 = scmp.ne.s32.totalorder %s40, %s43
      %p49 = scmp.eq.s32.totalorder %s9, 0
      %p50 = por %p48, %p49
      %p51 = scmp.ne.s32.totalorder %s40, %s43
      %p52 = scmp.eq.s32.totalorder %s14, 2
      %p53 = por %p51, %p52
      %p54 = scmp.ne.s32.totalorder %s43, %s44
      %p55 = scmp.eq.s32.totalorder %s14, 0
      %p56 = por %p54, %p55
      %p57 = scmp.ne.s32.totalorder %s43, %s44
      %p58 = scmp.eq.s32.totalorder %s15, 2
      %p59 = por %p57, %p58
      %p61 = scmp.ne.s32.totalorder %s44, %s60
      %p62 = scmp.eq.s32.totalorder %s15, 0
      %p63 = por %p61, %p62
      %s64 = ssub.s32 %s18, %s27
      %s65 = ssub.s32 %s17, %s31
      %s66 = sor.u32 %s64, %s65
      %p67 = scmp.eq.s32.totalorder %s66, 0
      %s69 = sadd.s32 %s68, 1
      %s70 = scalar_select %p67, %s68, %s69
      %p73 = pneg %p67
      %p74 = scmp.eq.s32.totalorder %s9, 2
      %p75 = por %p73, %p74
      %p76 = scmp.ne.s32.totalorder %s68, %s71
      %p77 = scmp.eq.s32.totalorder %s9, 0
      %p78 = por %p76, %p77
      %p79 = scmp.ne.s32.totalorder %s68, %s71
      %p80 = scmp.eq.s32.totalorder %s14, 2
      %p81 = por %p79, %p80
      %p82 = scmp.ne.s32.totalorder %s71, %s72
      %p83 = scmp.eq.s32.totalorder %s14, 0
      %p84 = por %p82, %p83
      %p85 = scmp.ne.s32.totalorder %s71, %s72
      %p86 = scmp.eq.s32.totalorder %s15, 2
      %p87 = por %p85, %p86
      %p89 = scmp.ne.s32.totalorder %s72, %s88
      %p90 = scmp.eq.s32.totalorder %s15, 0
      %p91 = por %p89, %p90
      %s92 = ssub.s32 %s17, %s31
      %p93 = scmp.eq.s32.totalorder %s92, 0
      %s95 = sadd.s32 %s94, 1
      %s96 = scalar_select %p93, %s94, %s95
      %p99 = pneg %p93
      %p100 = scmp.eq.s32.totalorder %s9, 2
      %p101 = por %p99, %p100
      %p102 = scmp.ne.s32.totalorder %s94, %s97
      %p103 = scmp.eq.s32.totalorder %s9, 0
      %p104 = por %p102, %p103
      %p105 = scmp.ne.s32.totalorder %s94, %s97
      %p106 = scmp.eq.s32.totalorder %s14, 2
      %p107 = por %p105, %p106
      %p108 = scmp.ne.s32.totalorder %s97, %s98
      %p109 = scmp.eq.s32.totalorder %s14, 0
      %p110 = por %p108, %p109
      %p111 = scmp.ne.s32.totalorder %s97, %s98
      %p112 = scmp.eq.s32.totalorder %s15, 2
      %p113 = por %p111, %p112
      %p115 = scmp.ne.s32.totalorder %s98, %s114
      %p116 = scmp.eq.s32.totalorder %s15, 0
      %p117 = por %p115, %p116
      %s118 = ssub.s32 %s16, %s35
      %s119 = ssub.s32 %s17, %s31
      %s120 = sor.u32 %s118, %s119
      %p121 = scmp.eq.s32.totalorder %s120, 0
      %s123 = sadd.s32 %s122, 1
      %s124 = scalar_select %p121, %s122, %s123
      %p127 = pneg %p121
      %p128 = scmp.eq.s32.totalorder %s9, 2
      %p129 = por %p127, %p128
      %p130 = scmp.ne.s32.totalorder %s122, %s125
      %p131 = scmp.eq.s32.totalorder %s9, 0
      %p132 = por %p130, %p131
      %p133 = scmp.ne.s32.totalorder %s122, %s125
      %p134 = scmp.eq.s32.totalorder %s14, 2
      %p135 = por %p133, %p134
      %p136 = scmp.ne.s32.totalorder %s125, %s126
      %p137 = scmp.eq.s32.totalorder %s14, 0
      %p138 = por %p136, %p137
      %p139 = scmp.ne.s32.totalorder %s125, %s126
      %p140 = scmp.eq.s32.totalorder %s15, 2
      %p141 = por %p139, %p140
      %p143 = scmp.ne.s32.totalorder %s126, %s142
      %p144 = scmp.eq.s32.totalorder %s15, 0
      %p145 = por %p143, %p144
      %p146 = scmp.le.s32.totalorder 1, %s9
      %p147 = scmp.lt.s32.totalorder %s9, 4
      %p148 = pnand %p146, %p147
      %p149 = pneg %p148
      // Predicated region
      $region9: #{_lambda_.21} parent=5 // pred_check
        _
      $region10: #{_lambda_.21} parent=5 // pred_check_branch
        %151 = sbr.rel (%p148) target = $region12
      $region11: #{_lambda_.21} parent=5 // pred_region
        %s152 = ssub.s32 %s9, 1
        // Predicated region
        $region13: #{_lambda_.21} parent=11 // pred_check
          %p153 = pneg %p110
        $region14: #{_lambda_.21} parent=11 // pred_check_branch
          %155 = sbr.rel (%p153) target = $region16
        $region15: #{_lambda_.21} parent=11 // pred_region
          %p156 = scmp.lt.s32.totalorder %s20, 0
          %s157 = scalar_select %p156, %s20, 0
          %s158 = scalar_lea.vmem %s2, %s157
        $region16: #{_lambda_.21} parent=11 // pred_fallthru
          _
      $region12: #{_lambda_.21} parent=5 // pred_fallthru
        _
      %p159 = scmp.lt.s32.totalorder %s9, 3
      // Predicated region
      $region17: #{_lambda_.21} parent=5 // pred_check
        %p160 = pneg %p159
      $region18: #{_lambda_.21} parent=5 // pred_check_branch
        %162 = sbr.rel (%p160) target = $region20
      $region19: #{_lambda_.21} parent=5 // pred_region
        // Predicated region
        $region21: #{_lambda_.21} parent=19 // pred_check
          %p163 = pneg %p50
        $region22: #{_lambda_.21} parent=19 // pred_check_branch
          %165 = sbr.rel (%p163) target = $region24
        $region23: #{_lambda_.21} parent=19 // pred_region
          %s166 = sand.u32 %s40, 1
          %s167 = sand.u32 %s40, 1
          %s168 = smul.addr %s167, 192
          %s169 = scalar_lea.vmem [#allocation3], %s168
          %s170 = smul.u32 16, %s16
          %s171 = smul.u32 3, %s18
          %s172 = smul.addr %s170, 9
          %s173 = sadd.s32 %s171, %s172
          %s174 = smul.addr %s173, 4
          %s175 = scalar_lea.vmem %s0, %s174
          // Predicated region
          $region25: #{_lambda_.21} parent=23 // pred_check
            _
          $region26: #{_lambda_.21} parent=23 // pred_check_branch
            %177 = sbr.rel (0) target = $region28
          $region27: #{_lambda_.21} parent=23 // pred_region
            // Predicated region
            $region29: #{_lambda_.21} parent=27 // pred_check
              _
            $region30: #{_lambda_.21} parent=27 // pred_check_branch
              %179 = sbr.rel (0) target = $region32
            $region31: #{_lambda_.21} parent=27 // pred_region
              %s180 = scalar_lea.vmem %s175, 8
              %s181 = scalar_lea.vmem %s169, 8 [#allocation3]
              loop: start=0, step=1, limit=1
              $region33: #{_lambda_.21} parent=31 // loop_pre_header
                _
              $region34: #{_lambda_.21} parent=31 // loop_header
                %s183 = sphi 0, %s187
                %p184 = scmp.ge.s32.totalorder %s183, 1
                %s188 = sphi %s175, %s175
                %s189 = sphi %s169, %s169
              $region35: #{_lambda_.21} parent=31 // loop_header_branch
                %186 = sbr.rel (%p184) target = $region39
              $region36: #{_lambda_.21} parent=31 // loop_body
                %v190 = vld [vmem:[%s188] sm:$0xff]
                %191 = vst [vmem:[%s189] sm:$0xff] %v190
                %v192 = vld [vmem:[%s188 + $0x24] sm:$0xff]
                %193 = vst [vmem:[%s189 + $0xc] sm:$0xff] %v192
                %v194 = vld [vmem:[%s188 + $0x48] sm:$0xff]
                %195 = vst [vmem:[%s189 + $0x18] sm:$0xff] %v194
                %v196 = vld [vmem:[%s188 + $0x6c] sm:$0xff]
                %197 = vst [vmem:[%s189 + $0x24] sm:$0xff] %v196
                %v198 = vld [vmem:[%s188 + $0x90] sm:$0xff]
                %199 = vst [vmem:[%s189 + $0x30] sm:$0xff] %v198
                %v200 = vld [vmem:[%s188 + $0xb4] sm:$0xff]
                %201 = vst [vmem:[%s189 + $0x3c] sm:$0xff] %v200
                %v202 = vld [vmem:[%s188 + $0xd8] sm:$0xff]
                %203 = vst [vmem:[%s189 + $0x48] sm:$0xff] %v202
                %v204 = vld [vmem:[%s188 + $0xfc] sm:$0xff]
                %205 = vst [vmem:[%s189 + $0x54] sm:$0xff] %v204
                %v206 = vld [vmem:[%s188 + $0x120] sm:$0xff]
                %207 = vst [vmem:[%s189 + $0x60] sm:$0xff] %v206
                %v208 = vld [vmem:[%s188 + $0x144] sm:$0xff]
                %209 = vst [vmem:[%s189 + $0x6c] sm:$0xff] %v208
                %v210 = vld [vmem:[%s188 + $0x168] sm:$0xff]
                %211 = vst [vmem:[%s189 + $0x78] sm:$0xff] %v210
                %v212 = vld [vmem:[%s188 + $0x18c] sm:$0xff]
                %213 = vst [vmem:[%s189 + $0x84] sm:$0xff] %v212
                %v214 = vld [vmem:[%s188 + $0x1b0] sm:$0xff]
                %215 = vst [vmem:[%s189 + $0x90] sm:$0xff] %v214
                %v216 = vld [vmem:[%s188 + $0x1d4] sm:$0xff]
                %217 = vst [vmem:[%s189 + $0x9c] sm:$0xff] %v216
                %v218 = vld [vmem:[%s188 + $0x1f8] sm:$0xff]
                %219 = vst [vmem:[%s189 + $0xa8] sm:$0xff] %v218
                %v220 = vld [vmem:[%s188 + $0x21c] sm:$0xff]
                %221 = vst [vmem:[%s189 + $0xb4] sm:$0xff] %v220
              $region37: #{_lambda_.21} parent=31 // loop_footer
                %s187 = sadd.s32 1, %s183
              $region38: #{_lambda_.21} parent=31 // loop_footer_branch
                %182 = sbr.rel target = $region34
              $region39: #{_lambda_.21} parent=31 // loop_exit
                _
              %s223 = ssub.s32 16, 1
              loop: start=0, step=1, limit=1
              $region40: #{_lambda_.21} parent=31 // loop_pre_header
                _
              $region41: #{_lambda_.21} parent=31 // loop_header
                %s225 = sphi 0, %s229
                %p226 = scmp.ge.s32.totalorder %s225, 1
                %s230 = sphi %s180, %s180
                %s231 = sphi %s181, %s181
              $region42: #{_lambda_.21} parent=31 // loop_header_branch
                %228 = sbr.rel (%p226) target = $region46
              $region43: #{_lambda_.21} parent=31 // loop_body
                %v232 = vld [vmem:[%s230] sm:%s223]
                %233 = vst [vmem:[%s231] sm:%s223] %v232
                %v234 = vld [vmem:[%s230 + $0x24] sm:%s223]
                %235 = vst [vmem:[%s231 + $0xc] sm:%s223] %v234
                %v236 = vld [vmem:[%s230 + $0x48] sm:%s223]
                %237 = vst [vmem:[%s231 + $0x18] sm:%s223] %v236
                %v238 = vld [vmem:[%s230 + $0x6c] sm:%s223]
                %239 = vst [vmem:[%s231 + $0x24] sm:%s223] %v238
                %v240 = vld [vmem:[%s230 + $0x90] sm:%s223]
                %241 = vst [vmem:[%s231 + $0x30] sm:%s223] %v240
                %v242 = vld [vmem:[%s230 + $0xb4] sm:%s223]
                %243 = vst [vmem:[%s231 + $0x3c] sm:%s223] %v242
                %v244 = vld [vmem:[%s230 + $0xd8] sm:%s223]
                %245 = vst [vmem:[%s231 + $0x48] sm:%s223] %v244
                %v246 = vld [vmem:[%s230 + $0xfc] sm:%s223]
                %247 = vst [vmem:[%s231 + $0x54] sm:%s223] %v246
                %v248 = vld [vmem:[%s230 + $0x120] sm:%s223]
                %249 = vst [vmem:[%s231 + $0x60] sm:%s223] %v248
                %v250 = vld [vmem:[%s230 + $0x144] sm:%s223]
                %251 = vst [vmem:[%s231 + $0x6c] sm:%s223] %v250
                %v252 = vld [vmem:[%s230 + $0x168] sm:%s223]
                %253 = vst [vmem:[%s231 + $0x78] sm:%s223] %v252
                %v254 = vld [vmem:[%s230 + $0x18c] sm:%s223]
                %255 = vst [vmem:[%s231 + $0x84] sm:%s223] %v254
                %v256 = vld [vmem:[%s230 + $0x1b0] sm:%s223]
                %257 = vst [vmem:[%s231 + $0x90] sm:%s223] %v256
                %v258 = vld [vmem:[%s230 + $0x1d4] sm:%s223]
                %259 = vst [vmem:[%s231 + $0x9c] sm:%s223] %v258
                %v260 = vld [vmem:[%s230 + $0x1f8] sm:%s223]
                %261 = vst [vmem:[%s231 + $0xa8] sm:%s223] %v260
                %v262 = vld [vmem:[%s230 + $0x21c] sm:%s223]
                %263 = vst [vmem:[%s231 + $0xb4] sm:%s223] %v262
              $region44: #{_lambda_.21} parent=31 // loop_footer
                %s229 = sadd.s32 1, %s225
              $region45: #{_lambda_.21} parent=31 // loop_footer_branch
                %224 = sbr.rel target = $region41
              $region46: #{_lambda_.21} parent=31 // loop_exit
                _
            $region32: #{_lambda_.21} parent=27 // pred_fallthru
              _
          $region28: #{_lambda_.21} parent=23 // pred_fallthru
            _
          %264 = vnop
        $region24: #{_lambda_.21} parent=19 // pred_fallthru
          _
        // Predicated region
        $region47: #{_lambda_.21} parent=19 // pred_check
          %p265 = pneg %p78
        $region48: #{_lambda_.21} parent=19 // pred_check_branch
          %267 = sbr.rel (%p265) target = $region50
        $region49: #{_lambda_.21} parent=19 // pred_region
          %s268 = smul.u32 48, %s18
          %p269 = scmp.lt.s32.totalorder %s268, 143
          %s270 = scalar_select %p269, %s268, 143
          %p271 = scmp.lt.s32.totalorder %s17, 0
          %s272 = scalar_select %p271, %s17, 0
          %s273 = sadd.s32 %s272, %s270
          %s274 = smul.addr %s273, 4
          %s275 = scalar_lea.vmem %s1, %s274
          %s276 = smul.u32 48, %s18
        $region50: #{_lambda_.21} parent=19 // pred_fallthru
          _
      $region20: #{_lambda_.21} parent=5 // pred_fallthru
        _
      %p277 = scmp.le.s32.totalorder 1, %s9
      %p278 = scmp.lt.s32.totalorder %s9, 4
      %p279 = pnand %p277, %p278
      %p280 = pneg %p279
      // Predicated region
      $region51: #{_lambda_.21} parent=5 // pred_check
        _
      $region52: #{_lambda_.21} parent=5 // pred_check_branch
        %282 = sbr.rel (%p279) target = $region54
      $region53: #{_lambda_.21} parent=5 // pred_region
        %s283 = ssub.s32 %s9, 1
        %s284 = sand.u32 %s43, 1
        %s285 = sand.u32 %s43, 1
        %s286 = smul.addr %s285, 192
        %s287 = scalar_lea.vmem [#allocation3], %s286
        // Predicated region
        $region55: #{_lambda_.21} parent=53 // pred_check
          %p288 = pneg %p56
        $region56: #{_lambda_.21} parent=53 // pred_check_branch
          %290 = sbr.rel (%p288) target = $region58
        $region57: #{_lambda_.21} parent=53 // pred_region
          _
        $region58: #{_lambda_.21} parent=53 // pred_fallthru
          _
        %s291 = sand.u32 %s43, 1
        %s292 = sand.u32 %s43, 1
        %s293 = smul.addr %s292, 192
        %s294 = scalar_lea.vmem [#allocation3], %s293
        %p295 = pneg %p56
        %p296 = pneg %p53
        %s297 = smul.u32 48, %s21
        %p298 = scmp.lt.s32.totalorder %s297, 143
        %s299 = scalar_select %p298, %s297, 143
        %p300 = scmp.lt.s32.totalorder %s20, 0
        %s301 = scalar_select %p300, %s20, 0
        %s302 = sadd.s32 %s301, %s299
        %s303 = smul.addr %s302, 4
        %s304 = scalar_lea.vmem %s1, %s303
        %p305 = pneg %p84
        %p306 = pneg %p81
        %p307 = scmp.lt.s32.totalorder %s20, 0
        %s308 = scalar_select %p307, %s20, 0
        %s309 = scalar_lea.vmem %s2, %s308
        %p310 = pneg %p110
        %p311 = pneg %p107
        %p312 = pneg %p138
        %p313 = pneg %p135
        %s314 = smul.u32 16, %s19
        %p315 = scmp.lt.s32.totalorder %s314, 15
        %s316 = scalar_select %p315, %s314, 15
        %p317 = scmp.lt.s32.totalorder %s20, 0
        %s318 = scalar_select %p317, %s20, 0
        %s319 = sadd.s32 %s318, %s316
        %s320 = smul.addr %s319, 4
        %s321 = scalar_lea.vmem %s3, %s320
        %s322 = smul.u32 16, %s19
        %s323 = smul.u32 3, %s21
        %s324 = smul.u32 48, %s21
        %p325 = scmp.lt.s32.totalorder %s324, 143
        %s326 = scalar_select %p325, %s324, 143
        %p327 = scmp.lt.s32.totalorder %s20, 0
        %s328 = scalar_select %p327, %s20, 0
        %s329 = sadd.s32 %s328, %s326
        %s330 = smul.addr %s329, 4
        %s331 = scalar_lea.vmem %s1, %s330
        %s332 = smul.u32 48, %s21
        %p333 = scmp.lt.s32.totalorder %s20, 0
        %s334 = scalar_select %p333, %s20, 0
        %s335 = scalar_lea.vmem %s2, %s334
        %s336 = smul.u32 16, %s19
        %p337 = scmp.lt.s32.totalorder %s336, 15
        %s338 = scalar_select %p337, %s336, 15
        %p339 = scmp.lt.s32.totalorder %s20, 0
        %s340 = scalar_select %p339, %s20, 0
        %s341 = sadd.s32 %s340, %s338
        %s342 = smul.addr %s341, 4
        %s343 = scalar_lea.vmem %s3, %s342
        %s344 = smul.u32 16, %s19
        %p345 = scmp.eq.s32.totalorder %s21, 0
        // Predicated region
        $region59: #{_lambda_.21} parent=53 // pred_check
          %p346 = pneg %p345
        $region60: #{_lambda_.21} parent=53 // pred_check_branch
          %348 = sbr.rel (%p346) target = $region62
        $region61: #{_lambda_.21} parent=53 // pred_region
          %349 = vst [vmem:[#allocation2] sm:$0xff] 0.0
          %350 = vst [vmem:[#allocation2 + $0x8] sm:$0xff] 0.0
          %351 = vst [vmem:[#allocation2 + $0x10] sm:$0xff] 0.0
          %352 = vst [vmem:[#allocation2 + $0x18] sm:$0xff] 0.0
          %353 = vst [vmem:[#allocation2 + $0x20] sm:$0xff] 0.0
          %354 = vst [vmem:[#allocation2 + $0x28] sm:$0xff] 0.0
          %355 = vst [vmem:[#allocation2 + $0x30] sm:$0xff] 0.0
          %356 = vst [vmem:[#allocation2 + $0x38] sm:$0xff] 0.0
          %357 = vst [vmem:[#allocation2 + $0x40] sm:$0xff] 0.0
          %358 = vst [vmem:[#allocation2 + $0x48] sm:$0xff] 0.0
          %359 = vst [vmem:[#allocation2 + $0x50] sm:$0xff] 0.0
          %360 = vst [vmem:[#allocation2 + $0x58] sm:$0xff] 0.0
          %361 = vst [vmem:[#allocation2 + $0x60] sm:$0xff] 0.0
          %362 = vst [vmem:[#allocation2 + $0x68] sm:$0xff] 0.0
          %363 = vst [vmem:[#allocation2 + $0x70] sm:$0xff] 0.0
          %364 = vst [vmem:[#allocation2 + $0x78] sm:$0xff] 0.0
        $region62: #{_lambda_.21} parent=53 // pred_fallthru
          _
        %v365 = vld [vmem:[#allocation2] sm:$0xff]
        %v366 = vld [vmem:[#allocation2 + $0x8] sm:$0xff]
        %v367 = vld [vmem:[#allocation2 + $0x10] sm:$0xff]
        %v368 = vld [vmem:[#allocation2 + $0x18] sm:$0xff]
        %v369 = vld [vmem:[#allocation2 + $0x20] sm:$0xff]
        %v370 = vld [vmem:[#allocation2 + $0x28] sm:$0xff]
        %v371 = vld [vmem:[#allocation2 + $0x30] sm:$0xff]
        %v372 = vld [vmem:[#allocation2 + $0x38] sm:$0xff]
        %v373 = vld [vmem:[#allocation2 + $0x40] sm:$0xff]
        %v374 = vld [vmem:[#allocation2 + $0x48] sm:$0xff]
        %v375 = vld [vmem:[#allocation2 + $0x50] sm:$0xff]
        %v376 = vld [vmem:[#allocation2 + $0x58] sm:$0xff]
        %v377 = vld [vmem:[#allocation2 + $0x60] sm:$0xff]
        %v378 = vld [vmem:[#allocation2 + $0x68] sm:$0xff]
        %v379 = vld [vmem:[#allocation2 + $0x70] sm:$0xff]
        %v380 = vld [vmem:[#allocation2 + $0x78] sm:$0xff]
        %v381 = vld [vmem:[%s287] sm:$0xff]
        %v382 = vld [vmem:[%s287 + $0x8] sm:$0xf]
        %v383 = vld [vmem:[%s287 + $0xc] sm:$0xff]
        %v384 = vld [vmem:[%s287 + $0x14] sm:$0xf]
        %v385 = vld [vmem:[%s287 + $0x18] sm:$0xff]
        %v386 = vld [vmem:[%s287 + $0x20] sm:$0xf]
        %v387 = vld [vmem:[%s287 + $0x24] sm:$0xff]
        %v388 = vld [vmem:[%s287 + $0x2c] sm:$0xf]
        %v389 = vld [vmem:[%s287 + $0x30] sm:$0xff]
        %v390 = vld [vmem:[%s287 + $0x38] sm:$0xf]
        %v391 = vld [vmem:[%s287 + $0x3c] sm:$0xff]
        %v392 = vld [vmem:[%s287 + $0x44] sm:$0xf]
        %v393 = vld [vmem:[%s287 + $0x48] sm:$0xff]
        %v394 = vld [vmem:[%s287 + $0x50] sm:$0xf]
        %v395 = vld [vmem:[%s287 + $0x54] sm:$0xff]
        %v396 = vld [vmem:[%s287 + $0x5c] sm:$0xf]
        %v397 = vld [vmem:[%s287 + $0x60] sm:$0xff]
        %v398 = vld [vmem:[%s287 + $0x68] sm:$0xf]
        %v399 = vld [vmem:[%s287 + $0x6c] sm:$0xff]
        %v400 = vld [vmem:[%s287 + $0x74] sm:$0xf]
        %v401 = vld [vmem:[%s287 + $0x78] sm:$0xff]
        %v402 = vld [vmem:[%s287 + $0x80] sm:$0xf]
        %v403 = vld [vmem:[%s287 + $0x84] sm:$0xff]
        %v404 = vld [vmem:[%s287 + $0x8c] sm:$0xf]
        %v405 = vld [vmem:[%s287 + $0x90] sm:$0xff]
        %v406 = vld [vmem:[%s287 + $0x98] sm:$0xf]
        %v407 = vld [vmem:[%s287 + $0x9c] sm:$0xff]
        %v408 = vld [vmem:[%s287 + $0xa4] sm:$0xf]
        %v409 = vld [vmem:[%s287 + $0xa8] sm:$0xff]
        %v410 = vld [vmem:[%s287 + $0xb0] sm:$0xf]
        %v411 = vld [vmem:[%s287 + $0xb4] sm:$0xff]
        %v412 = vld [vmem:[%s287 + $0xbc] sm:$0xf]
        %v413 = vld [vmem:[%s331] sm:$0xf]
        %v414 = vld [vmem:[%s331 + $0x4] sm:$0xf]
        %v415 = vld [vmem:[%s331 + $0x8] sm:$0xf]
        %v416 = vld [vmem:[%s331 + $0xc] sm:$0xf]
        %v417 = vld [vmem:[%s331 + $0x10] sm:$0xf]
        %v418 = vld [vmem:[%s331 + $0x14] sm:$0xf]
        %v419 = vld [vmem:[%s331 + $0x18] sm:$0xf]
        %v420 = vld [vmem:[%s331 + $0x1c] sm:$0xf]
        %v421 = vld [vmem:[%s331 + $0x20] sm:$0xf]
        %v422 = vld [vmem:[%s331 + $0x24] sm:$0xf]
        %v423 = vld [vmem:[%s331 + $0x28] sm:$0xf]
        %v424 = vld [vmem:[%s331 + $0x2c] sm:$0xf]
        %v425 = vld [vmem:[%s331 + $0x30] sm:$0xf]
        %v426 = vld [vmem:[%s331 + $0x34] sm:$0xf]
        %v427 = vld [vmem:[%s331 + $0x38] sm:$0xf]
        %v428 = vld [vmem:[%s331 + $0x3c] sm:$0xf]
        %v429 = vld [vmem:[%s331 + $0x40] sm:$0xf]
        %v430 = vld [vmem:[%s331 + $0x44] sm:$0xf]
        %v431 = vld [vmem:[%s331 + $0x48] sm:$0xf]
        %v432 = vld [vmem:[%s331 + $0x4c] sm:$0xf]
        %v433 = vld [vmem:[%s331 + $0x50] sm:$0xf]
        %v434 = vld [vmem:[%s331 + $0x54] sm:$0xf]
        %v435 = vld [vmem:[%s331 + $0x58] sm:$0xf]
        %v436 = vld [vmem:[%s331 + $0x5c] sm:$0xf]
        %v437 = vld [vmem:[%s331 + $0x60] sm:$0xf]
        %v438 = vld [vmem:[%s331 + $0x64] sm:$0xf]
        %v439 = vld [vmem:[%s331 + $0x68] sm:$0xf]
        %v440 = vld [vmem:[%s331 + $0x6c] sm:$0xf]
        %v441 = vld [vmem:[%s331 + $0x70] sm:$0xf]
        %v442 = vld [vmem:[%s331 + $0x74] sm:$0xf]
        %v443 = vld [vmem:[%s331 + $0x78] sm:$0xf]
        %v444 = vld [vmem:[%s331 + $0x7c] sm:$0xf]
        %v445 = vld [vmem:[%s331 + $0x80] sm:$0xf]
        %v446 = vld [vmem:[%s331 + $0x84] sm:$0xf]
        %v447 = vld [vmem:[%s331 + $0x88] sm:$0xf]
        %v448 = vld [vmem:[%s331 + $0x8c] sm:$0xf]
        %v449 = vld [vmem:[%s331 + $0x90] sm:$0xf]
        %v450 = vld [vmem:[%s331 + $0x94] sm:$0xf]
        %v451 = vld [vmem:[%s331 + $0x98] sm:$0xf]
        %v452 = vld [vmem:[%s331 + $0x9c] sm:$0xf]
        %v453 = vld [vmem:[%s331 + $0xa0] sm:$0xf]
        %v454 = vld [vmem:[%s331 + $0xa4] sm:$0xf]
        %v455 = vld [vmem:[%s331 + $0xa8] sm:$0xf]
        %v456 = vld [vmem:[%s331 + $0xac] sm:$0xf]
        %v457 = vld [vmem:[%s331 + $0xb0] sm:$0xf]
        %v458 = vld [vmem:[%s331 + $0xb4] sm:$0xf]
        %v459 = vld [vmem:[%s331 + $0xb8] sm:$0xf]
        %v460 = vld [vmem:[%s331 + $0xbc] sm:$0xf]
        %v493 = vunpack.c.l.b16 %v381
        %v494 = vunpack.c.h.b16 %v381
        %v495 = vunpack.c.l.b16 %v382
        %v496 = vunpack.c.l.b16 %v383
        %v497 = vunpack.c.h.b16 %v383
        %v498 = vunpack.c.l.b16 %v384
        %v499 = vunpack.c.l.b16 %v385
        %v500 = vunpack.c.h.b16 %v385
        %v501 = vunpack.c.l.b16 %v386
        %v502 = vunpack.c.l.b16 %v387
        %v503 = vunpack.c.h.b16 %v387
        %v504 = vunpack.c.l.b16 %v388
        %v505 = vunpack.c.l.b16 %v389
        %v506 = vunpack.c.h.b16 %v389
        %v507 = vunpack.c.l.b16 %v390
        %v508 = vunpack.c.l.b16 %v391
        %v509 = vunpack.c.h.b16 %v391
        %v510 = vunpack.c.l.b16 %v392
        %v511 = vunpack.c.l.b16 %v393
        %v512 = vunpack.c.h.b16 %v393
        %v513 = vunpack.c.l.b16 %v394
        %v514 = vunpack.c.l.b16 %v395
        %v515 = vunpack.c.h.b16 %v395
        %v516 = vunpack.c.l.b16 %v396
        %v517 = vunpack.c.l.b16 %v397
        %v518 = vunpack.c.h.b16 %v397
        %v519 = vunpack.c.l.b16 %v398
        %v520 = vunpack.c.l.b16 %v399
        %v521 = vunpack.c.h.b16 %v399
        %v522 = vunpack.c.l.b16 %v400
        %v523 = vunpack.c.l.b16 %v401
        %v524 = vunpack.c.h.b16 %v401
        %v525 = vunpack.c.l.b16 %v402
        %v526 = vunpack.c.l.b16 %v403
        %v527 = vunpack.c.h.b16 %v403
        %v528 = vunpack.c.l.b16 %v404
        %v529 = vunpack.c.l.b16 %v405
        %v530 = vunpack.c.h.b16 %v405
        %v531 = vunpack.c.l.b16 %v406
        %v532 = vunpack.c.l.b16 %v407
        %v533 = vunpack.c.h.b16 %v407
        %v534 = vunpack.c.l.b16 %v408
        %v535 = vunpack.c.l.b16 %v409
        %v536 = vunpack.c.h.b16 %v409
        %v537 = vunpack.c.l.b16 %v410
        %v538 = vunpack.c.l.b16 %v411
        %v539 = vunpack.c.h.b16 %v411
        %v540 = vunpack.c.l.b16 %v412
        %v541 = vpack.c.b16 %v496, %v493
        %v542 = vpack.c.b16 %v497, %v494
        %v543 = vpack.c.b16 %v498, %v495
        %v544 = vpack.c.b16 %v502, %v499
        %v545 = vpack.c.b16 %v503, %v500
        %v546 = vpack.c.b16 %v504, %v501
        %v547 = vpack.c.b16 %v508, %v505
        %v548 = vpack.c.b16 %v509, %v506
        %v549 = vpack.c.b16 %v510, %v507
        %v550 = vpack.c.b16 %v514, %v511
        %v551 = vpack.c.b16 %v515, %v512
        %v552 = vpack.c.b16 %v516, %v513
        %v553 = vpack.c.b16 %v520, %v517
        %v554 = vpack.c.b16 %v521, %v518
        %v555 = vpack.c.b16 %v522, %v519
        %v556 = vpack.c.b16 %v526, %v523
        %v557 = vpack.c.b16 %v527, %v524
        %v558 = vpack.c.b16 %v528, %v525
        %v559 = vpack.c.b16 %v532, %v529
        %v560 = vpack.c.b16 %v533, %v530
        %v561 = vpack.c.b16 %v534, %v531
        %v562 = vpack.c.b16 %v538, %v535
        %v563 = vpack.c.b16 %v539, %v536
        %v564 = vpack.c.b16 %v540, %v537
        %v637 = vunpack.c.l.b16 %v413
        %v638 = vunpack.c.l.b16 %v414
        %v639 = vunpack.c.l.b16 %v415
        %v640 = vunpack.c.l.b16 %v416
        %v641 = vunpack.c.l.b16 %v417
        %v642 = vunpack.c.l.b16 %v418
        %v643 = vunpack.c.l.b16 %v419
        %v644 = vunpack.c.l.b16 %v420
        %v645 = vunpack.c.l.b16 %v421
        %v646 = vunpack.c.l.b16 %v422
        %v647 = vunpack.c.l.b16 %v423
        %v648 = vunpack.c.l.b16 %v424
        %v649 = vunpack.c.l.b16 %v425
        %v650 = vunpack.c.l.b16 %v426
        %v651 = vunpack.c.l.b16 %v427
        %v652 = vunpack.c.l.b16 %v428
        %v653 = vunpack.c.l.b16 %v429
        %v654 = vunpack.c.l.b16 %v430
        %v655 = vunpack.c.l.b16 %v431
        %v656 = vunpack.c.l.b16 %v432
        %v657 = vunpack.c.l.b16 %v433
        %v658 = vunpack.c.l.b16 %v434
        %v659 = vunpack.c.l.b16 %v435
        %v660 = vunpack.c.l.b16 %v436
        %v661 = vunpack.c.l.b16 %v437
        %v662 = vunpack.c.l.b16 %v438
        %v663 = vunpack.c.l.b16 %v439
        %v664 = vunpack.c.l.b16 %v440
        %v665 = vunpack.c.l.b16 %v441
        %v666 = vunpack.c.l.b16 %v442
        %v667 = vunpack.c.l.b16 %v443
        %v668 = vunpack.c.l.b16 %v444
        %v669 = vunpack.c.l.b16 %v445
        %v670 = vunpack.c.l.b16 %v446
        %v671 = vunpack.c.l.b16 %v447
        %v672 = vunpack.c.l.b16 %v448
        %v673 = vunpack.c.l.b16 %v449
        %v674 = vunpack.c.l.b16 %v450
        %v675 = vunpack.c.l.b16 %v451
        %v676 = vunpack.c.l.b16 %v452
        %v677 = vunpack.c.l.b16 %v453
        %v678 = vunpack.c.l.b16 %v454
        %v679 = vunpack.c.l.b16 %v455
        %v680 = vunpack.c.l.b16 %v456
        %v681 = vunpack.c.l.b16 %v457
        %v682 = vunpack.c.l.b16 %v458
        %v683 = vunpack.c.l.b16 %v459
        %v684 = vunpack.c.l.b16 %v460
        %v685 = vpack.c.b16 %v638, %v637
        %v686 = vpack.c.b16 %v640, %v639
        %v687 = vpack.c.b16 %v642, %v641
        %v688 = vpack.c.b16 %v644, %v643
        %v689 = vpack.c.b16 %v646, %v645
        %v690 = vpack.c.b16 %v648, %v647
        %v691 = vpack.c.b16 %v650, %v649
        %v692 = vpack.c.b16 %v652, %v651
        %v693 = vpack.c.b16 %v654, %v653
        %v694 = vpack.c.b16 %v656, %v655
        %v695 = vpack.c.b16 %v658, %v657
        %v696 = vpack.c.b16 %v660, %v659
        %v697 = vpack.c.b16 %v662, %v661
        %v698 = vpack.c.b16 %v664, %v663
        %v699 = vpack.c.b16 %v666, %v665
        %v700 = vpack.c.b16 %v668, %v667
        %v701 = vpack.c.b16 %v670, %v669
        %v702 = vpack.c.b16 %v672, %v671
        %v703 = vpack.c.b16 %v674, %v673
        %v704 = vpack.c.b16 %v676, %v675
        %v705 = vpack.c.b16 %v678, %v677
        %v706 = vpack.c.b16 %v680, %v679
        %v707 = vpack.c.b16 %v682, %v681
        %v708 = vpack.c.b16 %v684, %v683
        %733 = vmatpush.bf16.msra.mxu0 %v692
        %734 = vmatpush.bf16.msra.mxu0 %v691
        %735 = vmatpush.bf16.msra.mxu0 %v690
        %736 = vmatpush.bf16.msra.mxu0 %v689
        %737 = vmatpush.bf16.msra.mxu0 %v688
        %738 = vmatpush.bf16.msra.mxu0 %v687
        %739 = vmatpush.bf16.msra.mxu0 %v686
        %740 = vmatpush.bf16.msra.mxu0 %v685
        %741 = vmatmul.bf16.gmra.mxu0 %v541
        %v742 = vpop.f32.mrf.mxu0
        %v743 = vadd.f32 0.0, %v742
        %v744 = vpop.f32.mrf.mxu0
        %v745 = vadd.f32 0.0, %v744
        %746 = vmatmul.bf16.gmra.mxu0 %v544
        %v747 = vpop.f32.mrf.mxu0
        %v748 = vadd.f32 0.0, %v747
        %v749 = vpop.f32.mrf.mxu0
        %v750 = vadd.f32 0.0, %v749
        %751 = vmatmul.bf16.gmra.mxu0 %v547
        %v752 = vpop.f32.mrf.mxu0
        %v753 = vadd.f32 0.0, %v752
        %v754 = vpop.f32.mrf.mxu0
        %v755 = vadd.f32 0.0, %v754
        %756 = vmatmul.bf16.gmra.mxu0 %v550
        %v757 = vpop.f32.mrf.mxu0
        %v758 = vadd.f32 0.0, %v757
        %v759 = vpop.f32.mrf.mxu0
        %v760 = vadd.f32 0.0, %v759
        %761 = vmatmul.bf16.gmra.mxu0 %v553
        %v762 = vpop.f32.mrf.mxu0
        %v763 = vadd.f32 0.0, %v762
        %v764 = vpop.f32.mrf.mxu0
        %v765 = vadd.f32 0.0, %v764
        %766 = vmatmul.bf16.gmra.mxu0 %v556
        %v767 = vpop.f32.mrf.mxu0
        %v768 = vadd.f32 0.0, %v767
        %v769 = vpop.f32.mrf.mxu0
        %v770 = vadd.f32 0.0, %v769
        %771 = vmatmul.bf16.gmra.mxu0 %v559
        %v772 = vpop.f32.mrf.mxu0
        %v773 = vadd.f32 0.0, %v772
        %v774 = vpop.f32.mrf.mxu0
        %v775 = vadd.f32 0.0, %v774
        %776 = vmatmul.bf16.gmra.mxu0 %v562
        %v777 = vpop.f32.mrf.mxu0
        %v778 = vadd.f32 0.0, %v777
        %v779 = vpop.f32.mrf.mxu0
        %v780 = vadd.f32 0.0, %v779
        %781 = vdwg.mxu0
        %782 = vmatpush.bf16.msra.mxu0 %v700
        %783 = vmatpush.bf16.msra.mxu0 %v699
        %784 = vmatpush.bf16.msra.mxu0 %v698
        %785 = vmatpush.bf16.msra.mxu0 %v697
        %786 = vmatpush.bf16.msra.mxu0 %v696
        %787 = vmatpush.bf16.msra.mxu0 %v695
        %788 = vmatpush.bf16.msra.mxu0 %v694
        %789 = vmatpush.bf16.msra.mxu0 %v693
        %790 = vmatmul.bf16.gmra.mxu0 %v542
        %v791 = vpop.f32.mrf.mxu0
        %v792 = vadd.f32 %v743, %v791
        %v793 = vpop.f32.mrf.mxu0
        %v794 = vadd.f32 %v745, %v793
        %795 = vmatmul.bf16.gmra.mxu0 %v545
        %v796 = vpop.f32.mrf.mxu0
        %v797 = vadd.f32 %v748, %v796
        %v798 = vpop.f32.mrf.mxu0
        %v799 = vadd.f32 %v750, %v798
        %800 = vmatmul.bf16.gmra.mxu0 %v548
        %v801 = vpop.f32.mrf.mxu0
        %v802 = vadd.f32 %v753, %v801
        %v803 = vpop.f32.mrf.mxu0
        %v804 = vadd.f32 %v755, %v803
        %805 = vmatmul.bf16.gmra.mxu0 %v551
        %v806 = vpop.f32.mrf.mxu0
        %v807 = vadd.f32 %v758, %v806
        %v808 = vpop.f32.mrf.mxu0
        %v809 = vadd.f32 %v760, %v808
        %810 = vmatmul.bf16.gmra.mxu0 %v554
        %v811 = vpop.f32.mrf.mxu0
        %v812 = vadd.f32 %v763, %v811
        %v813 = vpop.f32.mrf.mxu0
        %v814 = vadd.f32 %v765, %v813
        %815 = vmatmul.bf16.gmra.mxu0 %v557
        %v816 = vpop.f32.mrf.mxu0
        %v817 = vadd.f32 %v768, %v816
        %v818 = vpop.f32.mrf.mxu0
        %v819 = vadd.f32 %v770, %v818
        %820 = vmatmul.bf16.gmra.mxu0 %v560
        %v821 = vpop.f32.mrf.mxu0
        %v822 = vadd.f32 %v773, %v821
        %v823 = vpop.f32.mrf.mxu0
        %v824 = vadd.f32 %v775, %v823
        %825 = vmatmul.bf16.gmra.mxu0 %v563
        %v826 = vpop.f32.mrf.mxu0
        %v827 = vadd.f32 %v778, %v826
        %v828 = vpop.f32.mrf.mxu0
        %v829 = vadd.f32 %v780, %v828
        %830 = vdwg.mxu0
        %831 = vmatpush.bf16.msra.mxu0 %v708
        %832 = vmatpush.bf16.msra.mxu0 %v707
        %833 = vmatpush.bf16.msra.mxu0 %v706
        %834 = vmatpush.bf16.msra.mxu0 %v705
        %835 = vmatpush.bf16.msra.mxu0 %v704
        %836 = vmatpush.bf16.msra.mxu0 %v703
        %837 = vmatpush.bf16.msra.mxu0 %v702
        %838 = vmatpush.bf16.msra.mxu0 %v701
        %839 = vmatmul.bf16.gmra.mxu0 %v543
        %v840 = vpop.f32.mrf.mxu0
        %v841 = vadd.f32 %v792, %v840
        %v842 = vpop.f32.mrf.mxu0
        %v843 = vadd.f32 %v794, %v842
        %844 = vmatmul.bf16.gmra.mxu0 %v546
        %v845 = vpop.f32.mrf.mxu0
        %v846 = vadd.f32 %v797, %v845
        %v847 = vpop.f32.mrf.mxu0
        %v848 = vadd.f32 %v799, %v847
        %849 = vmatmul.bf16.gmra.mxu0 %v549
        %v850 = vpop.f32.mrf.mxu0
        %v851 = vadd.f32 %v802, %v850
        %v852 = vpop.f32.mrf.mxu0
        %v853 = vadd.f32 %v804, %v852
        %854 = vmatmul.bf16.gmra.mxu0 %v552
        %v855 = vpop.f32.mrf.mxu0
        %v856 = vadd.f32 %v807, %v855
        %v857 = vpop.f32.mrf.mxu0
        %v858 = vadd.f32 %v809, %v857
        %859 = vmatmul.bf16.gmra.mxu0 %v555
        %v860 = vpop.f32.mrf.mxu0
        %v861 = vadd.f32 %v812, %v860
        %v862 = vpop.f32.mrf.mxu0
        %v863 = vadd.f32 %v814, %v862
        %864 = vmatmul.bf16.gmra.mxu0 %v558
        %v865 = vpop.f32.mrf.mxu0
        %v866 = vadd.f32 %v817, %v865
        %v867 = vpop.f32.mrf.mxu0
        %v868 = vadd.f32 %v819, %v867
        %869 = vmatmul.bf16.gmra.mxu0 %v561
        %v870 = vpop.f32.mrf.mxu0
        %v871 = vadd.f32 %v822, %v870
        %v872 = vpop.f32.mrf.mxu0
        %v873 = vadd.f32 %v824, %v872
        %874 = vmatmul.bf16.gmra.mxu0 %v564
        %v875 = vpop.f32.mrf.mxu0
        %v876 = vadd.f32 %v827, %v875
        %v877 = vpop.f32.mrf.mxu0
        %v878 = vadd.f32 %v829, %v877
        %879 = vdwg.mxu0
        %v880 = vadd.f32 %v365, %v841
        %v881 = vadd.f32 %v366, %v843
        %v882 = vadd.f32 %v367, %v846
        %v883 = vadd.f32 %v368, %v848
        %v884 = vadd.f32 %v369, %v851
        %v885 = vadd.f32 %v370, %v853
        %v886 = vadd.f32 %v371, %v856
        %v887 = vadd.f32 %v372, %v858
        %v888 = vadd.f32 %v373, %v861
        %v889 = vadd.f32 %v374, %v863
        %v890 = vadd.f32 %v375, %v866
        %v891 = vadd.f32 %v376, %v868
        %v892 = vadd.f32 %v377, %v871
        %v893 = vadd.f32 %v378, %v873
        %v894 = vadd.f32 %v379, %v876
        %v895 = vadd.f32 %v380, %v878
        %896 = vst [vmem:[#allocation2] sm:$0xff] %v880
        %897 = vst [vmem:[#allocation2 + $0x8] sm:$0xff] %v881
        %898 = vst [vmem:[#allocation2 + $0x10] sm:$0xff] %v882
        %899 = vst [vmem:[#allocation2 + $0x18] sm:$0xff] %v883
        %900 = vst [vmem:[#allocation2 + $0x20] sm:$0xff] %v884
        %901 = vst [vmem:[#allocation2 + $0x28] sm:$0xff] %v885
        %902 = vst [vmem:[#allocation2 + $0x30] sm:$0xff] %v886
        %903 = vst [vmem:[#allocation2 + $0x38] sm:$0xff] %v887
        %904 = vst [vmem:[#allocation2 + $0x40] sm:$0xff] %v888
        %905 = vst [vmem:[#allocation2 + $0x48] sm:$0xff] %v889
        %906 = vst [vmem:[#allocation2 + $0x50] sm:$0xff] %v890
        %907 = vst [vmem:[#allocation2 + $0x58] sm:$0xff] %v891
        %908 = vst [vmem:[#allocation2 + $0x60] sm:$0xff] %v892
        %909 = vst [vmem:[#allocation2 + $0x68] sm:$0xff] %v893
        %910 = vst [vmem:[#allocation2 + $0x70] sm:$0xff] %v894
        %911 = vst [vmem:[#allocation2 + $0x78] sm:$0xff] %v895
        %p912 = scmp.eq.s32.totalorder %s21, 2
        // Predicated region
        $region63: #{_lambda_.21} parent=53 // pred_check
          %p913 = pneg %p912
        $region64: #{_lambda_.21} parent=53 // pred_check_branch
          %915 = sbr.rel (%p913) target = $region66
        $region65: #{_lambda_.21} parent=53 // pred_region
          %v916 = vld [vmem:[#allocation2] sm:$0xff]
          %v917 = vld [vmem:[#allocation2 + $0x8] sm:$0xff]
          %v918 = vld [vmem:[#allocation2 + $0x10] sm:$0xff]
          %v919 = vld [vmem:[#allocation2 + $0x18] sm:$0xff]
          %v920 = vld [vmem:[#allocation2 + $0x20] sm:$0xff]
          %v921 = vld [vmem:[#allocation2 + $0x28] sm:$0xff]
          %v922 = vld [vmem:[#allocation2 + $0x30] sm:$0xff]
          %v923 = vld [vmem:[#allocation2 + $0x38] sm:$0xff]
          %v924 = vld [vmem:[#allocation2 + $0x40] sm:$0xff]
          %v925 = vld [vmem:[#allocation2 + $0x48] sm:$0xff]
          %v926 = vld [vmem:[#allocation2 + $0x50] sm:$0xff]
          %v927 = vld [vmem:[#allocation2 + $0x58] sm:$0xff]
          %v928 = vld [vmem:[#allocation2 + $0x60] sm:$0xff]
          %v929 = vld [vmem:[#allocation2 + $0x68] sm:$0xff]
          %v930 = vld [vmem:[#allocation2 + $0x70] sm:$0xff]
          %v931 = vld [vmem:[#allocation2 + $0x78] sm:$0xff]
          %v932 = vld [vmem:[%s335] sm:$0x1]
          %v934 = vperm.slane %v932, 0
          %v936 = vadd.f32 %v916, %v934
          %v937 = vadd.f32 %v917, %v934
          %v938 = vadd.f32 %v918, %v934
          %v939 = vadd.f32 %v919, %v934
          %v940 = vadd.f32 %v920, %v934
          %v941 = vadd.f32 %v921, %v934
          %v942 = vadd.f32 %v922, %v934
          %v943 = vadd.f32 %v923, %v934
          %v944 = vadd.f32 %v924, %v934
          %v945 = vadd.f32 %v925, %v934
          %v946 = vadd.f32 %v926, %v934
          %v947 = vadd.f32 %v927, %v934
          %v948 = vadd.f32 %v928, %v934
          %v949 = vadd.f32 %v929, %v934
          %v950 = vadd.f32 %v930, %v934
          %v951 = vadd.f32 %v931, %v934
          %v952 = vmax.f32 %v936, 0.0
          %v953 = vmax.f32 %v937, 0.0
          %v954 = vmax.f32 %v938, 0.0
          %v955 = vmax.f32 %v939, 0.0
          %v956 = vmax.f32 %v940, 0.0
          %v957 = vmax.f32 %v941, 0.0
          %v958 = vmax.f32 %v942, 0.0
          %v959 = vmax.f32 %v943, 0.0
          %v960 = vmax.f32 %v944, 0.0
          %v961 = vmax.f32 %v945, 0.0
          %v962 = vmax.f32 %v946, 0.0
          %v963 = vmax.f32 %v947, 0.0
          %v964 = vmax.f32 %v948, 0.0
          %v965 = vmax.f32 %v949, 0.0
          %v966 = vmax.f32 %v950, 0.0
          %v967 = vmax.f32 %v951, 0.0
          %v968 = vpack.c.bf16 %v952, %v952
          %v969 = vpack.c.bf16 %v953, %v953
          %v970 = vpack.c.bf16 %v954, %v954
          %v971 = vpack.c.bf16 %v955, %v955
          %v972 = vpack.c.bf16 %v956, %v956
          %v973 = vpack.c.bf16 %v957, %v957
          %v974 = vpack.c.bf16 %v958, %v958
          %v975 = vpack.c.bf16 %v959, %v959
          %v976 = vpack.c.bf16 %v960, %v960
          %v977 = vpack.c.bf16 %v961, %v961
          %v978 = vpack.c.bf16 %v962, %v962
          %v979 = vpack.c.bf16 %v963, %v963
          %v980 = vpack.c.bf16 %v964, %v964
          %v981 = vpack.c.bf16 %v965, %v965
          %v982 = vpack.c.bf16 %v966, %v966
          %v983 = vpack.c.bf16 %v967, %v967
          %984 = vst [vmem:[%s343] sm:$0xf] %v968
          %985 = vst [vmem:[%s343 + $0x4] sm:$0xf] %v969
          %986 = vst [vmem:[%s343 + $0x8] sm:$0xf] %v970
          %987 = vst [vmem:[%s343 + $0xc] sm:$0xf] %v971
          %988 = vst [vmem:[%s343 + $0x10] sm:$0xf] %v972
          %989 = vst [vmem:[%s343 + $0x14] sm:$0xf] %v973
          %990 = vst [vmem:[%s343 + $0x18] sm:$0xf] %v974
          %991 = vst [vmem:[%s343 + $0x1c] sm:$0xf] %v975
          %992 = vst [vmem:[%s343 + $0x20] sm:$0xf] %v976
          %993 = vst [vmem:[%s343 + $0x24] sm:$0xf] %v977
          %994 = vst [vmem:[%s343 + $0x28] sm:$0xf] %v978
          %995 = vst [vmem:[%s343 + $0x2c] sm:$0xf] %v979
          %996 = vst [vmem:[%s343 + $0x30] sm:$0xf] %v980
          %997 = vst [vmem:[%s343 + $0x34] sm:$0xf] %v981
          %998 = vst [vmem:[%s343 + $0x38] sm:$0xf] %v982
          %999 = vst [vmem:[%s343 + $0x3c] sm:$0xf] %v983
        $region66: #{_lambda_.21} parent=53 // pred_fallthru
          _
        %s1000 = smul.u32 16, %s19
        %p1001 = scmp.lt.s32.totalorder %s1000, 15
        %s1002 = scalar_select %p1001, %s1000, 15
        %p1003 = scmp.lt.s32.totalorder %s20, 0
        %s1004 = scalar_select %p1003, %s20, 0
        %s1005 = sadd.s32 %s1004, %s1002
        %s1006 = smul.addr %s1005, 4
        %s1007 = scalar_lea.vmem %s3, %s1006
        // Predicated region
        $region67: #{_lambda_.21} parent=53 // pred_check
          %p1008 = pneg %p135
        $region68: #{_lambda_.21} parent=53 // pred_check_branch
          %1010 = sbr.rel (%p1008) target = $region70
        $region69: #{_lambda_.21} parent=53 // pred_region
          %s1011 = smul.u32 16, %s19
        $region70: #{_lambda_.21} parent=53 // pred_fallthru
          _
        // Predicated region
        $region71: #{_lambda_.21} parent=53 // pred_check
          %p1012 = pneg %p135
        $region72: #{_lambda_.21} parent=53 // pred_check_branch
          %1014 = sbr.rel (%p1012) target = $region74
        $region73: #{_lambda_.21} parent=53 // pred_region
          %s1015 = smul.u32 16, %s19
          %p1016 = scmp.lt.s32.totalorder %s1015, 15
          %s1017 = scalar_select %p1016, %s1015, 15
          %p1018 = scmp.lt.s32.totalorder %s20, 0
          %s1019 = scalar_select %p1018, %s20, 0
          %s1020 = sadd.s32 %s1019, %s1017
          %s1021 = smul.addr %s1020, 4
          %s1022 = scalar_lea.vmem %s3, %s1021
        $region74: #{_lambda_.21} parent=53 // pred_fallthru
          _
      $region54: #{_lambda_.21} parent=5 // pred_fallthru
        _
      %p1023 = scmp.le.s32.totalorder 2, %s9
      // Predicated region
      $region75: #{_lambda_.21} parent=5 // pred_check
        %p1024 = pneg %p1023
      $region76: #{_lambda_.21} parent=5 // pred_check_branch
        %1026 = sbr.rel (%p1024) target = $region78
      $region77: #{_lambda_.21} parent=5 // pred_region
        %s1027 = ssub.s32 %s9, 2
      $region78: #{_lambda_.21} parent=5 // pred_fallthru
        _
    $region6: #{_lambda_.21} parent=1 // loop_footer
      %s13 = sadd.s32 1, %s9
    $region7: #{_lambda_.21} parent=1 // loop_footer_branch
      %8 = sbr.rel target = $region3
    $region8: #{_lambda_.21} parent=1 // loop_exit
      _

// kernel: _lambda_.22
$region0: #{_lambda_.22}
  #allocation0 [shape = 'u32[]', space=smem, size = 0x4, offset = 0x4, fixed_abs, tag = 'smem constant byte address 0x4 - core index']
  #allocation1 [shape = 'u32[72,128]{1,0:T(1,128)}', space=vmem, size = 0x9000, scoped, tag = 'internal scratch']
  #allocation2 [shape = 'f32[128,128]{1,0:T(8,128)}', space=vmem, size = 0x10000, scoped, tag = 'scratch operand']
  %s0 = inlined_call_operand.vmem [shape: bf16[128,1152], index: 0, kind: input, shape index: {}]
  %s1 = inlined_call_operand.vmem [shape: bf16[1152,128], index: 1, kind: input, shape index: {}]
  %s2 = inlined_call_operand.vmem [shape: f32[1,128], index: 2, kind: input, shape index: {}]
  %s3 = inlined_call_operand.vmem [shape: bf16[128,128], index: 3, kind: input, shape index: {}]
  %s4 = inlined_call_operand.vmem [shape: bf16[128,128], index: 4, kind: output, shape index: {}]
  %s5 = sld [smem:[#allocation0]]
  $region83: #{_lambda_.22} parent=0
    _
  %s7 = ssub.s32 1, %s5
  %s8 = scalar_select 0, %s7, %s5
  $region1: #{_lambda_.22} parent=0
    #allocation3 [shape = 'u8[196608]{0}', space=vmem, size = 0x30000, scoped, tag = 'input window, operand 0']
    loop: start=0, step=1, limit=5
    $region2: #{_lambda_.22} parent=1 // loop_pre_header
      _
    $region3: #{_lambda_.22} parent=1 // loop_header
      %s10 = sphi 0, %s14
      %p11 = scmp.ge.s32.totalorder %s10, 5
      %s17 = sphi 0, %s36
      %s18 = sphi 0, %s32
      %s19 = sphi 0, %s28
      %s20 = sphi 0, %s17
      %s21 = sphi 0, %s18
      %s22 = sphi 0, %s19
      %s23 = sphi 0, %s20
      %s24 = sphi 0, %s21
      %s25 = sphi 0, %s22
      %s41 = sphi 0, %s43
      %s44 = sphi 0, %s41
      %s45 = sphi 0, %s44
      %s61 = sphi 0, %s45
      %s69 = sphi 0, %s71
      %s72 = sphi 0, %s69
      %s73 = sphi 0, %s72
      %s89 = sphi 0, %s73
      %s95 = sphi 0, %s97
      %s98 = sphi 0, %s95
      %s99 = sphi 0, %s98
      %s115 = sphi 0, %s99
      %s123 = sphi 0, %s125
      %s126 = sphi 0, %s123
      %s127 = sphi 0, %s126
      %s143 = sphi 0, %s127
      %s151 = sphi 0, %s153
      %s154 = sphi 0, %s151
      %s155 = sphi 0, %s154
      %s171 = sphi 0, %s155
    $region4: #{_lambda_.22} parent=1 // loop_header_branch
      %13 = sbr.rel (%p11) target = $region8
    $region5: #{_lambda_.22} parent=1 // loop_body
      %s15 = ssub.s32 %s10, 1
      %s16 = ssub.s32 %s10, 2
      %s26 = sadd.s32 1, %s19
      %p27 = scmp.ge.s32.totalorder %s26, 3
      %s28 = scalar_select %p27, 0, %s26
      %s29 = sadd.s32 1, %s18
      %s30 = scalar_select %p27, %s29, %s18
      %p31 = scmp.ge.s32.totalorder %s30, 1
      %s32 = scalar_select %p31, 0, %s30
      %s33 = sadd.s32 1, %s17
      %s34 = scalar_select %p31, %s33, %s17
      %p35 = scmp.ge.s32.totalorder %s34, 1
      %s36 = scalar_select %p35, 0, %s34
      %s37 = ssub.s32 %s17, %s36
      %s38 = ssub.s32 %s19, %s28
      %s39 = sor.u32 %s37, %s38
      %p40 = scmp.eq.s32.totalorder %s39, 0
      %s42 = sadd.s32 %s41, 1
      %s43 = scalar_select %p40, %s41, %s42
      %p46 = pneg %p40
      %p47 = scmp.eq.s32.totalorder %s10, 2
      %p48 = por %p46, %p47
      %p49 = scmp.ne.s32.totalorder %s41, %s44
      %p50 = scmp.eq.s32.totalorder %s10, 0
      %p51 = por %p49, %p50
      %p52 = scmp.ne.s32.totalorder %s41, %s44
      %p53 = scmp.eq.s32.totalorder %s15, 2
      %p54 = por %p52, %p53
      %p55 = scmp.ne.s32.totalorder %s44, %s45
      %p56 = scmp.eq.s32.totalorder %s15, 0
      %p57 = por %p55, %p56
      %p58 = scmp.ne.s32.totalorder %s44, %s45
      %p59 = scmp.eq.s32.totalorder %s16, 2
      %p60 = por %p58, %p59
      %p62 = scmp.ne.s32.totalorder %s45, %s61
      %p63 = scmp.eq.s32.totalorder %s16, 0
      %p64 = por %p62, %p63
      %s65 = ssub.s32 %s19, %s28
      %s66 = ssub.s32 %s18, %s32
      %s67 = sor.u32 %s65, %s66
      %p68 = scmp.eq.s32.totalorder %s67, 0
      %s70 = sadd.s32 %s69, 1
      %s71 = scalar_select %p68, %s69, %s70
      %p74 = pneg %p68
      %p75 = scmp.eq.s32.totalorder %s10, 2
      %p76 = por %p74, %p75
      %p77 = scmp.ne.s32.totalorder %s69, %s72
      %p78 = scmp.eq.s32.totalorder %s10, 0
      %p79 = por %p77, %p78
      %p80 = scmp.ne.s32.totalorder %s69, %s72
      %p81 = scmp.eq.s32.totalorder %s15, 2
      %p82 = por %p80, %p81
      %p83 = scmp.ne.s32.totalorder %s72, %s73
      %p84 = scmp.eq.s32.totalorder %s15, 0
      %p85 = por %p83, %p84
      %p86 = scmp.ne.s32.totalorder %s72, %s73
      %p87 = scmp.eq.s32.totalorder %s16, 2
      %p88 = por %p86, %p87
      %p90 = scmp.ne.s32.totalorder %s73, %s89
      %p91 = scmp.eq.s32.totalorder %s16, 0
      %p92 = por %p90, %p91
      %s93 = ssub.s32 %s18, %s32
      %p94 = scmp.eq.s32.totalorder %s93, 0
      %s96 = sadd.s32 %s95, 1
      %s97 = scalar_select %p94, %s95, %s96
      %p100 = pneg %p94
      %p101 = scmp.eq.s32.totalorder %s10, 2
      %p102 = por %p100, %p101
      %p103 = scmp.ne.s32.totalorder %s95, %s98
      %p104 = scmp.eq.s32.totalorder %s10, 0
      %p105 = por %p103, %p104
      %p106 = scmp.ne.s32.totalorder %s95, %s98
      %p107 = scmp.eq.s32.totalorder %s15, 2
      %p108 = por %p106, %p107
      %p109 = scmp.ne.s32.totalorder %s98, %s99
      %p110 = scmp.eq.s32.totalorder %s15, 0
      %p111 = por %p109, %p110
      %p112 = scmp.ne.s32.totalorder %s98, %s99
      %p113 = scmp.eq.s32.totalorder %s16, 2
      %p114 = por %p112, %p113
      %p116 = scmp.ne.s32.totalorder %s99, %s115
      %p117 = scmp.eq.s32.totalorder %s16, 0
      %p118 = por %p116, %p117
      %s119 = ssub.s32 %s17, %s36
      %s120 = ssub.s32 %s18, %s32
      %s121 = sor.u32 %s119, %s120
      %p122 = scmp.eq.s32.totalorder %s121, 0
      %s124 = sadd.s32 %s123, 1
      %s125 = scalar_select %p122, %s123, %s124
      %p128 = pneg %p122
      %p129 = scmp.eq.s32.totalorder %s10, 2
      %p130 = por %p128, %p129
      %p131 = scmp.ne.s32.totalorder %s123, %s126
      %p132 = scmp.eq.s32.totalorder %s10, 0
      %p133 = por %p131, %p132
      %p134 = scmp.ne.s32.totalorder %s123, %s126
      %p135 = scmp.eq.s32.totalorder %s15, 2
      %p136 = por %p134, %p135
      %p137 = scmp.ne.s32.totalorder %s126, %s127
      %p138 = scmp.eq.s32.totalorder %s15, 0
      %p139 = por %p137, %p138
      %p140 = scmp.ne.s32.totalorder %s126, %s127
      %p141 = scmp.eq.s32.totalorder %s16, 2
      %p142 = por %p140, %p141
      %p144 = scmp.ne.s32.totalorder %s127, %s143
      %p145 = scmp.eq.s32.totalorder %s16, 0
      %p146 = por %p144, %p145
      %s147 = ssub.s32 %s17, %s36
      %s148 = ssub.s32 %s18, %s32
      %s149 = sor.u32 %s147, %s148
      %p150 = scmp.eq.s32.totalorder %s149, 0
      %s152 = sadd.s32 %s151, 1
      %s153 = scalar_select %p150, %s151, %s152
      %p156 = pneg %p150
      %p157 = scmp.eq.s32.totalorder %s10, 2
      %p158 = por %p156, %p157
      %p159 = scmp.ne.s32.totalorder %s151, %s154
      %p160 = scmp.eq.s32.totalorder %s10, 0
      %p161 = por %p159, %p160
      %p162 = scmp.ne.s32.totalorder %s151, %s154
      %p163 = scmp.eq.s32.totalorder %s15, 2
      %p164 = por %p162, %p163
      %p165 = scmp.ne.s32.totalorder %s154, %s155
      %p166 = scmp.eq.s32.totalorder %s15, 0
      %p167 = por %p165, %p166
      %p168 = scmp.ne.s32.totalorder %s154, %s155
      %p169 = scmp.eq.s32.totalorder %s16, 2
      %p170 = por %p168, %p169
      %p172 = scmp.ne.s32.totalorder %s155, %s171
      %p173 = scmp.eq.s32.totalorder %s16, 0
      %p174 = por %p172, %p173
      %p175 = scmp.le.s32.totalorder 1, %s10
      %p176 = scmp.lt.s32.totalorder %s10, 4
      %p177 = pnand %p175, %p176
      %p178 = pneg %p177
      // Predicated region
      $region9: #{_lambda_.22} parent=5 // pred_check
        _
      $region10: #{_lambda_.22} parent=5 // pred_check_branch
        %180 = sbr.rel (%p177) target = $region12
      $region11: #{_lambda_.22} parent=5 // pred_region
        %s181 = ssub.s32 %s10, 1
        // Predicated region
        $region13: #{_lambda_.22} parent=11 // pred_check
          %p182 = pneg %p111
        $region14: #{_lambda_.22} parent=11 // pred_check_branch
          %184 = sbr.rel (%p182) target = $region16
        $region15: #{_lambda_.22} parent=11 // pred_region
          %p185 = scmp.lt.s32.totalorder %s21, 0
          %s186 = scalar_select %p185, %s21, 0
          %s187 = scalar_lea.vmem %s2, %s186
        $region16: #{_lambda_.22} parent=11 // pred_fallthru
          _
        // Predicated region
        $region17: #{_lambda_.22} parent=11 // pred_check
          %p188 = pneg %p139
        $region18: #{_lambda_.22} parent=11 // pred_check_branch
          %190 = sbr.rel (%p188) target = $region20
        $region19: #{_lambda_.22} parent=11 // pred_region
          %s191 = smul.u32 16, %s20
          %p192 = scmp.lt.s32.totalorder %s191, 15
          %s193 = scalar_select %p192, %s191, 15
          %p194 = scmp.lt.s32.totalorder %s21, 0
          %s195 = scalar_select %p194, %s21, 0
          %s196 = sadd.s32 %s195, %s193
          %s197 = smul.addr %s196, 4
          %s198 = scalar_lea.vmem %s3, %s197
          %s199 = smul.u32 16, %s20
        $region20: #{_lambda_.22} parent=11 // pred_fallthru
          _
      $region12: #{_lambda_.22} parent=5 // pred_fallthru
        _
      %p200 = scmp.lt.s32.totalorder %s10, 3
      // Predicated region
      $region21: #{_lambda_.22} parent=5 // pred_check
        %p201 = pneg %p200
      $region22: #{_lambda_.22} parent=5 // pred_check_branch
        %203 = sbr.rel (%p201) target = $region24
      $region23: #{_lambda_.22} parent=5 // pred_region
        // Predicated region
        $region25: #{_lambda_.22} parent=23 // pred_check
          %p204 = pneg %p51
        $region26: #{_lambda_.22} parent=23 // pred_check_branch
          %206 = sbr.rel (%p204) target = $region28
        $region27: #{_lambda_.22} parent=23 // pred_region
          %s207 = sand.u32 %s41, 1
          %s208 = sand.u32 %s41, 1
          %s209 = smul.addr %s208, 192
          %s210 = scalar_lea.vmem [#allocation3], %s209
          %s211 = smul.u32 16, %s17
          %s212 = smul.u32 3, %s19
          %s213 = smul.addr %s211, 9
          %s214 = sadd.s32 %s212, %s213
          %s215 = smul.addr %s214, 4
          %s216 = scalar_lea.vmem %s0, %s215
          // Predicated region
          $region29: #{_lambda_.22} parent=27 // pred_check
            _
          $region30: #{_lambda_.22} parent=27 // pred_check_branch
            %218 = sbr.rel (0) target = $region32
          $region31: #{_lambda_.22} parent=27 // pred_region
            // Predicated region
            $region33: #{_lambda_.22} parent=31 // pred_check
              _
            $region34: #{_lambda_.22} parent=31 // pred_check_branch
              %220 = sbr.rel (0) target = $region36
            $region35: #{_lambda_.22} parent=31 // pred_region
              %s221 = scalar_lea.vmem %s216, 8
              %s222 = scalar_lea.vmem %s210, 8 [#allocation3]
              loop: start=0, step=1, limit=1
              $region37: #{_lambda_.22} parent=35 // loop_pre_header
                _
              $region38: #{_lambda_.22} parent=35 // loop_header
                %s224 = sphi 0, %s228
                %p225 = scmp.ge.s32.totalorder %s224, 1
                %s229 = sphi %s216, %s216
                %s230 = sphi %s210, %s210
              $region39: #{_lambda_.22} parent=35 // loop_header_branch
                %227 = sbr.rel (%p225) target = $region43
              $region40: #{_lambda_.22} parent=35 // loop_body
                %v231 = vld [vmem:[%s229] sm:$0xff]
                %232 = vst [vmem:[%s230] sm:$0xff] %v231
                %v233 = vld [vmem:[%s229 + $0x24] sm:$0xff]
                %234 = vst [vmem:[%s230 + $0xc] sm:$0xff] %v233
                %v235 = vld [vmem:[%s229 + $0x48] sm:$0xff]
                %236 = vst [vmem:[%s230 + $0x18] sm:$0xff] %v235
                %v237 = vld [vmem:[%s229 + $0x6c] sm:$0xff]
                %238 = vst [vmem:[%s230 + $0x24] sm:$0xff] %v237
                %v239 = vld [vmem:[%s229 + $0x90] sm:$0xff]
                %240 = vst [vmem:[%s230 + $0x30] sm:$0xff] %v239
                %v241 = vld [vmem:[%s229 + $0xb4] sm:$0xff]
                %242 = vst [vmem:[%s230 + $0x3c] sm:$0xff] %v241
                %v243 = vld [vmem:[%s229 + $0xd8] sm:$0xff]
                %244 = vst [vmem:[%s230 + $0x48] sm:$0xff] %v243
                %v245 = vld [vmem:[%s229 + $0xfc] sm:$0xff]
                %246 = vst [vmem:[%s230 + $0x54] sm:$0xff] %v245
                %v247 = vld [vmem:[%s229 + $0x120] sm:$0xff]
                %248 = vst [vmem:[%s230 + $0x60] sm:$0xff] %v247
                %v249 = vld [vmem:[%s229 + $0x144] sm:$0xff]
                %250 = vst [vmem:[%s230 + $0x6c] sm:$0xff] %v249
                %v251 = vld [vmem:[%s229 + $0x168] sm:$0xff]
                %252 = vst [vmem:[%s230 + $0x78] sm:$0xff] %v251
                %v253 = vld [vmem:[%s229 + $0x18c] sm:$0xff]
                %254 = vst [vmem:[%s230 + $0x84] sm:$0xff] %v253
                %v255 = vld [vmem:[%s229 + $0x1b0] sm:$0xff]
                %256 = vst [vmem:[%s230 + $0x90] sm:$0xff] %v255
                %v257 = vld [vmem:[%s229 + $0x1d4] sm:$0xff]
                %258 = vst [vmem:[%s230 + $0x9c] sm:$0xff] %v257
                %v259 = vld [vmem:[%s229 + $0x1f8] sm:$0xff]
                %260 = vst [vmem:[%s230 + $0xa8] sm:$0xff] %v259
                %v261 = vld [vmem:[%s229 + $0x21c] sm:$0xff]
                %262 = vst [vmem:[%s230 + $0xb4] sm:$0xff] %v261
              $region41: #{_lambda_.22} parent=35 // loop_footer
                %s228 = sadd.s32 1, %s224
              $region42: #{_lambda_.22} parent=35 // loop_footer_branch
                %223 = sbr.rel target = $region38
              $region43: #{_lambda_.22} parent=35 // loop_exit
                _
              %s264 = ssub.s32 16, 1
              loop: start=0, step=1, limit=1
              $region44: #{_lambda_.22} parent=35 // loop_pre_header
                _
              $region45: #{_lambda_.22} parent=35 // loop_header
                %s266 = sphi 0, %s270
                %p267 = scmp.ge.s32.totalorder %s266, 1
                %s271 = sphi %s221, %s221
                %s272 = sphi %s222, %s222
              $region46: #{_lambda_.22} parent=35 // loop_header_branch
                %269 = sbr.rel (%p267) target = $region50
              $region47: #{_lambda_.22} parent=35 // loop_body
                %v273 = vld [vmem:[%s271] sm:%s264]
                %274 = vst [vmem:[%s272] sm:%s264] %v273
                %v275 = vld [vmem:[%s271 + $0x24] sm:%s264]
                %276 = vst [vmem:[%s272 + $0xc] sm:%s264] %v275
                %v277 = vld [vmem:[%s271 + $0x48] sm:%s264]
                %278 = vst [vmem:[%s272 + $0x18] sm:%s264] %v277
                %v279 = vld [vmem:[%s271 + $0x6c] sm:%s264]
                %280 = vst [vmem:[%s272 + $0x24] sm:%s264] %v279
                %v281 = vld [vmem:[%s271 + $0x90] sm:%s264]
                %282 = vst [vmem:[%s272 + $0x30] sm:%s264] %v281
                %v283 = vld [vmem:[%s271 + $0xb4] sm:%s264]
                %284 = vst [vmem:[%s272 + $0x3c] sm:%s264] %v283
                %v285 = vld [vmem:[%s271 + $0xd8] sm:%s264]
                %286 = vst [vmem:[%s272 + $0x48] sm:%s264] %v285
                %v287 = vld [vmem:[%s271 + $0xfc] sm:%s264]
                %288 = vst [vmem:[%s272 + $0x54] sm:%s264] %v287
                %v289 = vld [vmem:[%s271 + $0x120] sm:%s264]
                %290 = vst [vmem:[%s272 + $0x60] sm:%s264] %v289
                %v291 = vld [vmem:[%s271 + $0x144] sm:%s264]
                %292 = vst [vmem:[%s272 + $0x6c] sm:%s264] %v291
                %v293 = vld [vmem:[%s271 + $0x168] sm:%s264]
                %294 = vst [vmem:[%s272 + $0x78] sm:%s264] %v293
                %v295 = vld [vmem:[%s271 + $0x18c] sm:%s264]
                %296 = vst [vmem:[%s272 + $0x84] sm:%s264] %v295
                %v297 = vld [vmem:[%s271 + $0x1b0] sm:%s264]
                %298 = vst [vmem:[%s272 + $0x90] sm:%s264] %v297
                %v299 = vld [vmem:[%s271 + $0x1d4] sm:%s264]
                %300 = vst [vmem:[%s272 + $0x9c] sm:%s264] %v299
                %v301 = vld [vmem:[%s271 + $0x1f8] sm:%s264]
                %302 = vst [vmem:[%s272 + $0xa8] sm:%s264] %v301
                %v303 = vld [vmem:[%s271 + $0x21c] sm:%s264]
                %304 = vst [vmem:[%s272 + $0xb4] sm:%s264] %v303
              $region48: #{_lambda_.22} parent=35 // loop_footer
                %s270 = sadd.s32 1, %s266
              $region49: #{_lambda_.22} parent=35 // loop_footer_branch
                %265 = sbr.rel target = $region45
              $region50: #{_lambda_.22} parent=35 // loop_exit
                _
            $region36: #{_lambda_.22} parent=31 // pred_fallthru
              _
          $region32: #{_lambda_.22} parent=27 // pred_fallthru
            _
          %305 = vnop
        $region28: #{_lambda_.22} parent=23 // pred_fallthru
          _
        // Predicated region
        $region51: #{_lambda_.22} parent=23 // pred_check
          %p306 = pneg %p79
        $region52: #{_lambda_.22} parent=23 // pred_check_branch
          %308 = sbr.rel (%p306) target = $region54
        $region53: #{_lambda_.22} parent=23 // pred_region
          %s309 = smul.u32 48, %s19
          %p310 = scmp.lt.s32.totalorder %s309, 143
          %s311 = scalar_select %p310, %s309, 143
          %p312 = scmp.lt.s32.totalorder %s18, 0
          %s313 = scalar_select %p312, %s18, 0
          %s314 = sadd.s32 %s313, %s311
          %s315 = smul.addr %s314, 4
          %s316 = scalar_lea.vmem %s1, %s315
          %s317 = smul.u32 48, %s19
        $region54: #{_lambda_.22} parent=23 // pred_fallthru
          _
      $region24: #{_lambda_.22} parent=5 // pred_fallthru
        _
      %p318 = scmp.le.s32.totalorder 1, %s10
      %p319 = scmp.lt.s32.totalorder %s10, 4
      %p320 = pnand %p318, %p319
      %p321 = pneg %p320
      // Predicated region
      $region55: #{_lambda_.22} parent=5 // pred_check
        _
      $region56: #{_lambda_.22} parent=5 // pred_check_branch
        %323 = sbr.rel (%p320) target = $region58
      $region57: #{_lambda_.22} parent=5 // pred_region
        %s324 = ssub.s32 %s10, 1
        %s325 = sand.u32 %s44, 1
        %s326 = sand.u32 %s44, 1
        %s327 = smul.addr %s326, 192
        %s328 = scalar_lea.vmem [#allocation3], %s327
        // Predicated region
        $region59: #{_lambda_.22} parent=57 // pred_check
          %p329 = pneg %p57
        $region60: #{_lambda_.22} parent=57 // pred_check_branch
          %331 = sbr.rel (%p329) target = $region62
        $region61: #{_lambda_.22} parent=57 // pred_region
          _
        $region62: #{_lambda_.22} parent=57 // pred_fallthru
          _
        %s332 = sand.u32 %s44, 1
        %s333 = sand.u32 %s44, 1
        %s334 = smul.addr %s333, 192
        %s335 = scalar_lea.vmem [#allocation3], %s334
        %p336 = pneg %p57
        %p337 = pneg %p54
        %s338 = smul.u32 48, %s22
        %p339 = scmp.lt.s32.totalorder %s338, 143
        %s340 = scalar_select %p339, %s338, 143
        %p341 = scmp.lt.s32.totalorder %s21, 0
        %s342 = scalar_select %p341, %s21, 0
        %s343 = sadd.s32 %s342, %s340
        %s344 = smul.addr %s343, 4
        %s345 = scalar_lea.vmem %s1, %s344
        %p346 = pneg %p85
        %p347 = pneg %p82
        %p348 = scmp.lt.s32.totalorder %s21, 0
        %s349 = scalar_select %p348, %s21, 0
        %s350 = scalar_lea.vmem %s2, %s349
        %p351 = pneg %p111
        %p352 = pneg %p108
        %s353 = smul.u32 16, %s20
        %p354 = scmp.lt.s32.totalorder %s353, 15
        %s355 = scalar_select %p354, %s353, 15
        %p356 = scmp.lt.s32.totalorder %s21, 0
        %s357 = scalar_select %p356, %s21, 0
        %s358 = sadd.s32 %s357, %s355
        %s359 = smul.addr %s358, 4
        %s360 = scalar_lea.vmem %s3, %s359
        %p361 = pneg %p139
        %p362 = pneg %p136
        %p363 = pneg %p167
        %p364 = pneg %p164
        %s365 = smul.u32 16, %s20
        %p366 = scmp.lt.s32.totalorder %s365, 15
        %s367 = scalar_select %p366, %s365, 15
        %p368 = scmp.lt.s32.totalorder %s21, 0
        %s369 = scalar_select %p368, %s21, 0
        %s370 = sadd.s32 %s369, %s367
        %s371 = smul.addr %s370, 4
        %s372 = scalar_lea.vmem %s4, %s371
        %s373 = smul.u32 16, %s20
        %s374 = smul.u32 3, %s22
        %s375 = smul.u32 48, %s22
        %p376 = scmp.lt.s32.totalorder %s375, 143
        %s377 = scalar_select %p376, %s375, 143
        %p378 = scmp.lt.s32.totalorder %s21, 0
        %s379 = scalar_select %p378, %s21, 0
        %s380 = sadd.s32 %s379, %s377
        %s381 = smul.addr %s380, 4
        %s382 = scalar_lea.vmem %s1, %s381
        %s383 = smul.u32 48, %s22
        %p384 = scmp.lt.s32.totalorder %s21, 0
        %s385 = scalar_select %p384, %s21, 0
        %s386 = scalar_lea.vmem %s2, %s385
        %s387 = smul.u32 16, %s20
        %p388 = scmp.lt.s32.totalorder %s387, 15
        %s389 = scalar_select %p388, %s387, 15
        %p390 = scmp.lt.s32.totalorder %s21, 0
        %s391 = scalar_select %p390, %s21, 0
        %s392 = sadd.s32 %s391, %s389
        %s393 = smul.addr %s392, 4
        %s394 = scalar_lea.vmem %s3, %s393
        %s395 = smul.u32 16, %s20
        %s396 = smul.u32 16, %s20
        %p397 = scmp.lt.s32.totalorder %s396, 15
        %s398 = scalar_select %p397, %s396, 15
        %p399 = scmp.lt.s32.totalorder %s21, 0
        %s400 = scalar_select %p399, %s21, 0
        %s401 = sadd.s32 %s400, %s398
        %s402 = smul.addr %s401, 4
        %s403 = scalar_lea.vmem %s4, %s402
        %s404 = smul.u32 16, %s20
        %p405 = scmp.eq.s32.totalorder %s22, 0
        // Predicated region
        $region63: #{_lambda_.22} parent=57 // pred_check
          %p406 = pneg %p405
        $region64: #{_lambda_.22} parent=57 // pred_check_branch
          %408 = sbr.rel (%p406) target = $region66
        $region65: #{_lambda_.22} parent=57 // pred_region
          %409 = vst [vmem:[#allocation2] sm:$0xff] 0.0
          %410 = vst [vmem:[#allocation2 + $0x8] sm:$0xff] 0.0
          %411 = vst [vmem:[#allocation2 + $0x10] sm:$0xff] 0.0
          %412 = vst [vmem:[#allocation2 + $0x18] sm:$0xff] 0.0
          %413 = vst [vmem:[#allocation2 + $0x20] sm:$0xff] 0.0
          %414 = vst [vmem:[#allocation2 + $0x28] sm:$0xff] 0.0
          %415 = vst [vmem:[#allocation2 + $0x30] sm:$0xff] 0.0
          %416 = vst [vmem:[#allocation2 + $0x38] sm:$0xff] 0.0
          %417 = vst [vmem:[#allocation2 + $0x40] sm:$0xff] 0.0
          %418 = vst [vmem:[#allocation2 + $0x48] sm:$0xff] 0.0
          %419 = vst [vmem:[#allocation2 + $0x50] sm:$0xff] 0.0
          %420 = vst [vmem:[#allocation2 + $0x58] sm:$0xff] 0.0
          %421 = vst [vmem:[#allocation2 + $0x60] sm:$0xff] 0.0
          %422 = vst [vmem:[#allocation2 + $0x68] sm:$0xff] 0.0
          %423 = vst [vmem:[#allocation2 + $0x70] sm:$0xff] 0.0
          %424 = vst [vmem:[#allocation2 + $0x78] sm:$0xff] 0.0
        $region66: #{_lambda_.22} parent=57 // pred_fallthru
          _
        %v425 = vld [vmem:[#allocation2] sm:$0xff]
        %v426 = vld [vmem:[#allocation2 + $0x8] sm:$0xff]
        %v427 = vld [vmem:[#allocation2 + $0x10] sm:$0xff]
        %v428 = vld [vmem:[#allocation2 + $0x18] sm:$0xff]
        %v429 = vld [vmem:[#allocation2 + $0x20] sm:$0xff]
        %v430 = vld [vmem:[#allocation2 + $0x28] sm:$0xff]
        %v431 = vld [vmem:[#allocation2 + $0x30] sm:$0xff]
        %v432 = vld [vmem:[#allocation2 + $0x38] sm:$0xff]
        %v433 = vld [vmem:[#allocation2 + $0x40] sm:$0xff]
        %v434 = vld [vmem:[#allocation2 + $0x48] sm:$0xff]
        %v435 = vld [vmem:[#allocation2 + $0x50] sm:$0xff]
        %v436 = vld [vmem:[#allocation2 + $0x58] sm:$0xff]
        %v437 = vld [vmem:[#allocation2 + $0x60] sm:$0xff]
        %v438 = vld [vmem:[#allocation2 + $0x68] sm:$0xff]
        %v439 = vld [vmem:[#allocation2 + $0x70] sm:$0xff]
        %v440 = vld [vmem:[#allocation2 + $0x78] sm:$0xff]
        %v441 = vld [vmem:[%s328] sm:$0xff]
        %v442 = vld [vmem:[%s328 + $0x8] sm:$0xf]
        %v443 = vld [vmem:[%s328 + $0xc] sm:$0xff]
        %v444 = vld [vmem:[%s328 + $0x14] sm:$0xf]
        %v445 = vld [vmem:[%s328 + $0x18] sm:$0xff]
        %v446 = vld [vmem:[%s328 + $0x20] sm:$0xf]
        %v447 = vld [vmem:[%s328 + $0x24] sm:$0xff]
        %v448 = vld [vmem:[%s328 + $0x2c] sm:$0xf]
        %v449 = vld [vmem:[%s328 + $0x30] sm:$0xff]
        %v450 = vld [vmem:[%s328 + $0x38] sm:$0xf]
        %v451 = vld [vmem:[%s328 + $0x3c] sm:$0xff]
        %v452 = vld [vmem:[%s328 + $0x44] sm:$0xf]
        %v453 = vld [vmem:[%s328 + $0x48] sm:$0xff]
        %v454 = vld [vmem:[%s328 + $0x50] sm:$0xf]
        %v455 = vld [vmem:[%s328 + $0x54] sm:$0xff]
        %v456 = vld [vmem:[%s328 + $0x5c] sm:$0xf]
        %v457 = vld [vmem:[%s328 + $0x60] sm:$0xff]
        %v458 = vld [vmem:[%s328 + $0x68] sm:$0xf]
        %v459 = vld [vmem:[%s328 + $0x6c] sm:$0xff]
        %v460 = vld [vmem:[%s328 + $0x74] sm:$0xf]
        %v461 = vld [vmem:[%s328 + $0x78] sm:$0xff]
        %v462 = vld [vmem:[%s328 + $0x80] sm:$0xf]
        %v463 = vld [vmem:[%s328 + $0x84] sm:$0xff]
        %v464 = vld [vmem:[%s328 + $0x8c] sm:$0xf]
        %v465 = vld [vmem:[%s328 + $0x90] sm:$0xff]
        %v466 = vld [vmem:[%s328 + $0x98] sm:$0xf]
        %v467 = vld [vmem:[%s328 + $0x9c] sm:$0xff]
        %v468 = vld [vmem:[%s328 + $0xa4] sm:$0xf]
        %v469 = vld [vmem:[%s328 + $0xa8] sm:$0xff]
        %v470 = vld [vmem:[%s328 + $0xb0] sm:$0xf]
        %v471 = vld [vmem:[%s328 + $0xb4] sm:$0xff]
        %v472 = vld [vmem:[%s328 + $0xbc] sm:$0xf]
        %v473 = vld [vmem:[%s382] sm:$0xf]
        %v474 = vld [vmem:[%s382 + $0x4] sm:$0xf]
        %v475 = vld [vmem:[%s382 + $0x8] sm:$0xf]
        %v476 = vld [vmem:[%s382 + $0xc] sm:$0xf]
        %v477 = vld [vmem:[%s382 + $0x10] sm:$0xf]
        %v478 = vld [vmem:[%s382 + $0x14] sm:$0xf]
        %v479 = vld [vmem:[%s382 + $0x18] sm:$0xf]
        %v480 = vld [vmem:[%s382 + $0x1c] sm:$0xf]
        %v481 = vld [vmem:[%s382 + $0x20] sm:$0xf]
        %v482 = vld [vmem:[%s382 + $0x24] sm:$0xf]
        %v483 = vld [vmem:[%s382 + $0x28] sm:$0xf]
        %v484 = vld [vmem:[%s382 + $0x2c] sm:$0xf]
        %v485 = vld [vmem:[%s382 + $0x30] sm:$0xf]
        %v486 = vld [vmem:[%s382 + $0x34] sm:$0xf]
        %v487 = vld [vmem:[%s382 + $0x38] sm:$0xf]
        %v488 = vld [vmem:[%s382 + $0x3c] sm:$0xf]
        %v489 = vld [vmem:[%s382 + $0x40] sm:$0xf]
        %v490 = vld [vmem:[%s382 + $0x44] sm:$0xf]
        %v491 = vld [vmem:[%s382 + $0x48] sm:$0xf]
        %v492 = vld [vmem:[%s382 + $0x4c] sm:$0xf]
        %v493 = vld [vmem:[%s382 + $0x50] sm:$0xf]
        %v494 = vld [vmem:[%s382 + $0x54] sm:$0xf]
        %v495 = vld [vmem:[%s382 + $0x58] sm:$0xf]
        %v496 = vld [vmem:[%s382 + $0x5c] sm:$0xf]
        %v497 = vld [vmem:[%s382 + $0x60] sm:$0xf]
        %v498 = vld [vmem:[%s382 + $0x64] sm:$0xf]
        %v499 = vld [vmem:[%s382 + $0x68] sm:$0xf]
        %v500 = vld [vmem:[%s382 + $0x6c] sm:$0xf]
        %v501 = vld [vmem:[%s382 + $0x70] sm:$0xf]
        %v502 = vld [vmem:[%s382 + $0x74] sm:$0xf]
        %v503 = vld [vmem:[%s382 + $0x78] sm:$0xf]
        %v504 = vld [vmem:[%s382 + $0x7c] sm:$0xf]
        %v505 = vld [vmem:[%s382 + $0x80] sm:$0xf]
        %v506 = vld [vmem:[%s382 + $0x84] sm:$0xf]
        %v507 = vld [vmem:[%s382 + $0x88] sm:$0xf]
        %v508 = vld [vmem:[%s382 + $0x8c] sm:$0xf]
        %v509 = vld [vmem:[%s382 + $0x90] sm:$0xf]
        %v510 = vld [vmem:[%s382 + $0x94] sm:$0xf]
        %v511 = vld [vmem:[%s382 + $0x98] sm:$0xf]
        %v512 = vld [vmem:[%s382 + $0x9c] sm:$0xf]
        %v513 = vld [vmem:[%s382 + $0xa0] sm:$0xf]
        %v514 = vld [vmem:[%s382 + $0xa4] sm:$0xf]
        %v515 = vld [vmem:[%s382 + $0xa8] sm:$0xf]
        %v516 = vld [vmem:[%s382 + $0xac] sm:$0xf]
        %v517 = vld [vmem:[%s382 + $0xb0] sm:$0xf]
        %v518 = vld [vmem:[%s382 + $0xb4] sm:$0xf]
        %v519 = vld [vmem:[%s382 + $0xb8] sm:$0xf]
        %v520 = vld [vmem:[%s382 + $0xbc] sm:$0xf]
        %v553 = vunpack.c.l.b16 %v441
        %v554 = vunpack.c.h.b16 %v441
        %v555 = vunpack.c.l.b16 %v442
        %v556 = vunpack.c.l.b16 %v443
        %v557 = vunpack.c.h.b16 %v443
        %v558 = vunpack.c.l.b16 %v444
        %v559 = vunpack.c.l.b16 %v445
        %v560 = vunpack.c.h.b16 %v445
        %v561 = vunpack.c.l.b16 %v446
        %v562 = vunpack.c.l.b16 %v447
        %v563 = vunpack.c.h.b16 %v447
        %v564 = vunpack.c.l.b16 %v448
        %v565 = vunpack.c.l.b16 %v449
        %v566 = vunpack.c.h.b16 %v449
        %v567 = vunpack.c.l.b16 %v450
        %v568 = vunpack.c.l.b16 %v451
        %v569 = vunpack.c.h.b16 %v451
        %v570 = vunpack.c.l.b16 %v452
        %v571 = vunpack.c.l.b16 %v453
        %v572 = vunpack.c.h.b16 %v453
        %v573 = vunpack.c.l.b16 %v454
        %v574 = vunpack.c.l.b16 %v455
        %v575 = vunpack.c.h.b16 %v455
        %v576 = vunpack.c.l.b16 %v456
        %v577 = vunpack.c.l.b16 %v457
        %v578 = vunpack.c.h.b16 %v457
        %v579 = vunpack.c.l.b16 %v458
        %v580 = vunpack.c.l.b16 %v459
        %v581 = vunpack.c.h.b16 %v459
        %v582 = vunpack.c.l.b16 %v460
        %v583 = vunpack.c.l.b16 %v461
        %v584 = vunpack.c.h.b16 %v461
        %v585 = vunpack.c.l.b16 %v462
        %v586 = vunpack.c.l.b16 %v463
        %v587 = vunpack.c.h.b16 %v463
        %v588 = vunpack.c.l.b16 %v464
        %v589 = vunpack.c.l.b16 %v465
        %v590 = vunpack.c.h.b16 %v465
        %v591 = vunpack.c.l.b16 %v466
        %v592 = vunpack.c.l.b16 %v467
        %v593 = vunpack.c.h.b16 %v467
        %v594 = vunpack.c.l.b16 %v468
        %v595 = vunpack.c.l.b16 %v469
        %v596 = vunpack.c.h.b16 %v469
        %v597 = vunpack.c.l.b16 %v470
        %v598 = vunpack.c.l.b16 %v471
        %v599 = vunpack.c.h.b16 %v471
        %v600 = vunpack.c.l.b16 %v472
        %v601 = vpack.c.b16 %v556, %v553
        %v602 = vpack.c.b16 %v557, %v554
        %v603 = vpack.c.b16 %v558, %v555
        %v604 = vpack.c.b16 %v562, %v559
        %v605 = vpack.c.b16 %v563, %v560
        %v606 = vpack.c.b16 %v564, %v561
        %v607 = vpack.c.b16 %v568, %v565
        %v608 = vpack.c.b16 %v569, %v566
        %v609 = vpack.c.b16 %v570, %v567
        %v610 = vpack.c.b16 %v574, %v571
        %v611 = vpack.c.b16 %v575, %v572
        %v612 = vpack.c.b16 %v576, %v573
        %v613 = vpack.c.b16 %v580, %v577
        %v614 = vpack.c.b16 %v581, %v578
        %v615 = vpack.c.b16 %v582, %v579
        %v616 = vpack.c.b16 %v586, %v583
        %v617 = vpack.c.b16 %v587, %v584
        %v618 = vpack.c.b16 %v588, %v585
        %v619 = vpack.c.b16 %v592, %v589
        %v620 = vpack.c.b16 %v593, %v590
        %v621 = vpack.c.b16 %v594, %v591
        %v622 = vpack.c.b16 %v598, %v595
        %v623 = vpack.c.b16 %v599, %v596
        %v624 = vpack.c.b16 %v600, %v597
        %v697 = vunpack.c.l.b16 %v473
        %v698 = vunpack.c.l.b16 %v474
        %v699 = vunpack.c.l.b16 %v475
        %v700 = vunpack.c.l.b16 %v476
        %v701 = vunpack.c.l.b16 %v477
        %v702 = vunpack.c.l.b16 %v478
        %v703 = vunpack.c.l.b16 %v479
        %v704 = vunpack.c.l.b16 %v480
        %v705 = vunpack.c.l.b16 %v481
        %v706 = vunpack.c.l.b16 %v482
        %v707 = vunpack.c.l.b16 %v483
        %v708 = vunpack.c.l.b16 %v484
        %v709 = vunpack.c.l.b16 %v485
        %v710 = vunpack.c.l.b16 %v486
        %v711 = vunpack.c.l.b16 %v487
        %v712 = vunpack.c.l.b16 %v488
        %v713 = vunpack.c.l.b16 %v489
        %v714 = vunpack.c.l.b16 %v490
        %v715 = vunpack.c.l.b16 %v491
        %v716 = vunpack.c.l.b16 %v492
        %v717 = vunpack.c.l.b16 %v493
        %v718 = vunpack.c.l.b16 %v494
        %v719 = vunpack.c.l.b16 %v495
        %v720 = vunpack.c.l.b16 %v496
        %v721 = vunpack.c.l.b16 %v497
        %v722 = vunpack.c.l.b16 %v498
        %v723 = vunpack.c.l.b16 %v499
        %v724 = vunpack.c.l.b16 %v500
        %v725 = vunpack.c.l.b16 %v501
        %v726 = vunpack.c.l.b16 %v502
        %v727 = vunpack.c.l.b16 %v503
        %v728 = vunpack.c.l.b16 %v504
        %v729 = vunpack.c.l.b16 %v505
        %v730 = vunpack.c.l.b16 %v506
        %v731 = vunpack.c.l.b16 %v507
        %v732 = vunpack.c.l.b16 %v508
        %v733 = vunpack.c.l.b16 %v509
        %v734 = vunpack.c.l.b16 %v510
        %v735 = vunpack.c.l.b16 %v511
        %v736 = vunpack.c.l.b16 %v512
        %v737 = vunpack.c.l.b16 %v513
        %v738 = vunpack.c.l.b16 %v514
        %v739 = vunpack.c.l.b16 %v515
        %v740 = vunpack.c.l.b16 %v516
        %v741 = vunpack.c.l.b16 %v517
        %v742 = vunpack.c.l.b16 %v518
        %v743 = vunpack.c.l.b16 %v519
        %v744 = vunpack.c.l.b16 %v520
        %v745 = vpack.c.b16 %v698, %v697
        %v746 = vpack.c.b16 %v700, %v699
        %v747 = vpack.c.b16 %v702, %v701
        %v748 = vpack.c.b16 %v704, %v703
        %v749 = vpack.c.b16 %v706, %v705
        %v750 = vpack.c.b16 %v708, %v707
        %v751 = vpack.c.b16 %v710, %v709
        %v752 = vpack.c.b16 %v712, %v711
        %v753 = vpack.c.b16 %v714, %v713
        %v754 = vpack.c.b16 %v716, %v715
        %v755 = vpack.c.b16 %v718, %v717
        %v756 = vpack.c.b16 %v720, %v719
        %v757 = vpack.c.b16 %v722, %v721
        %v758 = vpack.c.b16 %v724, %v723
        %v759 = vpack.c.b16 %v726, %v725
        %v760 = vpack.c.b16 %v728, %v727
        %v761 = vpack.c.b16 %v730, %v729
        %v762 = vpack.c.b16 %v732, %v731
        %v763 = vpack.c.b16 %v734, %v733
        %v764 = vpack.c.b16 %v736, %v735
        %v765 = vpack.c.b16 %v738, %v737
        %v766 = vpack.c.b16 %v740, %v739
        %v767 = vpack.c.b16 %v742, %v741
        %v768 = vpack.c.b16 %v744, %v743
        %793 = vmatpush.bf16.msra.mxu0 %v752
        %794 = vmatpush.bf16.msra.mxu0 %v751
        %795 = vmatpush.bf16.msra.mxu0 %v750
        %796 = vmatpush.bf16.msra.mxu0 %v749
        %797 = vmatpush.bf16.msra.mxu0 %v748
        %798 = vmatpush.bf16.msra.mxu0 %v747
        %799 = vmatpush.bf16.msra.mxu0 %v746
        %800 = vmatpush.bf16.msra.mxu0 %v745
        %801 = vmatmul.bf16.gmra.mxu0 %v601
        %v802 = vpop.f32.mrf.mxu0
        %v803 = vadd.f32 0.0, %v802
        %v804 = vpop.f32.mrf.mxu0
        %v805 = vadd.f32 0.0, %v804
        %806 = vmatmul.bf16.gmra.mxu0 %v604
        %v807 = vpop.f32.mrf.mxu0
        %v808 = vadd.f32 0.0, %v807
        %v809 = vpop.f32.mrf.mxu0
        %v810 = vadd.f32 0.0, %v809
        %811 = vmatmul.bf16.gmra.mxu0 %v607
        %v812 = vpop.f32.mrf.mxu0
        %v813 = vadd.f32 0.0, %v812
        %v814 = vpop.f32.mrf.mxu0
        %v815 = vadd.f32 0.0, %v814
        %816 = vmatmul.bf16.gmra.mxu0 %v610
        %v817 = vpop.f32.mrf.mxu0
        %v818 = vadd.f32 0.0, %v817
        %v819 = vpop.f32.mrf.mxu0
        %v820 = vadd.f32 0.0, %v819
        %821 = vmatmul.bf16.gmra.mxu0 %v613
        %v822 = vpop.f32.mrf.mxu0
        %v823 = vadd.f32 0.0, %v822
        %v824 = vpop.f32.mrf.mxu0
        %v825 = vadd.f32 0.0, %v824
        %826 = vmatmul.bf16.gmra.mxu0 %v616
        %v827 = vpop.f32.mrf.mxu0
        %v828 = vadd.f32 0.0, %v827
        %v829 = vpop.f32.mrf.mxu0
        %v830 = vadd.f32 0.0, %v829
        %831 = vmatmul.bf16.gmra.mxu0 %v619
        %v832 = vpop.f32.mrf.mxu0
        %v833 = vadd.f32 0.0, %v832
        %v834 = vpop.f32.mrf.mxu0
        %v835 = vadd.f32 0.0, %v834
        %836 = vmatmul.bf16.gmra.mxu0 %v622
        %v837 = vpop.f32.mrf.mxu0
        %v838 = vadd.f32 0.0, %v837
        %v839 = vpop.f32.mrf.mxu0
        %v840 = vadd.f32 0.0, %v839
        %841 = vdwg.mxu0
        %842 = vmatpush.bf16.msra.mxu0 %v760
        %843 = vmatpush.bf16.msra.mxu0 %v759
        %844 = vmatpush.bf16.msra.mxu0 %v758
        %845 = vmatpush.bf16.msra.mxu0 %v757
        %846 = vmatpush.bf16.msra.mxu0 %v756
        %847 = vmatpush.bf16.msra.mxu0 %v755
        %848 = vmatpush.bf16.msra.mxu0 %v754
        %849 = vmatpush.bf16.msra.mxu0 %v753
        %850 = vmatmul.bf16.gmra.mxu0 %v602
        %v851 = vpop.f32.mrf.mxu0
        %v852 = vadd.f32 %v803, %v851
        %v853 = vpop.f32.mrf.mxu0
        %v854 = vadd.f32 %v805, %v853
        %855 = vmatmul.bf16.gmra.mxu0 %v605
        %v856 = vpop.f32.mrf.mxu0
        %v857 = vadd.f32 %v808, %v856
        %v858 = vpop.f32.mrf.mxu0
        %v859 = vadd.f32 %v810, %v858
        %860 = vmatmul.bf16.gmra.mxu0 %v608
        %v861 = vpop.f32.mrf.mxu0
        %v862 = vadd.f32 %v813, %v861
        %v863 = vpop.f32.mrf.mxu0
        %v864 = vadd.f32 %v815, %v863
        %865 = vmatmul.bf16.gmra.mxu0 %v611
        %v866 = vpop.f32.mrf.mxu0
        %v867 = vadd.f32 %v818, %v866
        %v868 = vpop.f32.mrf.mxu0
        %v869 = vadd.f32 %v820, %v868
        %870 = vmatmul.bf16.gmra.mxu0 %v614
        %v871 = vpop.f32.mrf.mxu0
        %v872 = vadd.f32 %v823, %v871
        %v873 = vpop.f32.mrf.mxu0
        %v874 = vadd.f32 %v825, %v873
        %875 = vmatmul.bf16.gmra.mxu0 %v617
        %v876 = vpop.f32.mrf.mxu0
        %v877 = vadd.f32 %v828, %v876
        %v878 = vpop.f32.mrf.mxu0
        %v879 = vadd.f32 %v830, %v878
        %880 = vmatmul.bf16.gmra.mxu0 %v620
        %v881 = vpop.f32.mrf.mxu0
        %v882 = vadd.f32 %v833, %v881
        %v883 = vpop.f32.mrf.mxu0
        %v884 = vadd.f32 %v835, %v883
        %885 = vmatmul.bf16.gmra.mxu0 %v623
        %v886 = vpop.f32.mrf.mxu0
        %v887 = vadd.f32 %v838, %v886
        %v888 = vpop.f32.mrf.mxu0
        %v889 = vadd.f32 %v840, %v888
        %890 = vdwg.mxu0
        %891 = vmatpush.bf16.msra.mxu0 %v768
        %892 = vmatpush.bf16.msra.mxu0 %v767
        %893 = vmatpush.bf16.msra.mxu0 %v766
        %894 = vmatpush.bf16.msra.mxu0 %v765
        %895 = vmatpush.bf16.msra.mxu0 %v764
        %896 = vmatpush.bf16.msra.mxu0 %v763
        %897 = vmatpush.bf16.msra.mxu0 %v762
        %898 = vmatpush.bf16.msra.mxu0 %v761
        %899 = vmatmul.bf16.gmra.mxu0 %v603
        %v900 = vpop.f32.mrf.mxu0
        %v901 = vadd.f32 %v852, %v900
        %v902 = vpop.f32.mrf.mxu0
        %v903 = vadd.f32 %v854, %v902
        %904 = vmatmul.bf16.gmra.mxu0 %v606
        %v905 = vpop.f32.mrf.mxu0
        %v906 = vadd.f32 %v857, %v905
        %v907 = vpop.f32.mrf.mxu0
        %v908 = vadd.f32 %v859, %v907
        %909 = vmatmul.bf16.gmra.mxu0 %v609
        %v910 = vpop.f32.mrf.mxu0
        %v911 = vadd.f32 %v862, %v910
        %v912 = vpop.f32.mrf.mxu0
        %v913 = vadd.f32 %v864, %v912
        %914 = vmatmul.bf16.gmra.mxu0 %v612
        %v915 = vpop.f32.mrf.mxu0
        %v916 = vadd.f32 %v867, %v915
        %v917 = vpop.f32.mrf.mxu0
        %v918 = vadd.f32 %v869, %v917
        %919 = vmatmul.bf16.gmra.mxu0 %v615
        %v920 = vpop.f32.mrf.mxu0
        %v921 = vadd.f32 %v872, %v920
        %v922 = vpop.f32.mrf.mxu0
        %v923 = vadd.f32 %v874, %v922
        %924 = vmatmul.bf16.gmra.mxu0 %v618
        %v925 = vpop.f32.mrf.mxu0
        %v926 = vadd.f32 %v877, %v925
        %v927 = vpop.f32.mrf.mxu0
        %v928 = vadd.f32 %v879, %v927
        %929 = vmatmul.bf16.gmra.mxu0 %v621
        %v930 = vpop.f32.mrf.mxu0
        %v931 = vadd.f32 %v882, %v930
        %v932 = vpop.f32.mrf.mxu0
        %v933 = vadd.f32 %v884, %v932
        %934 = vmatmul.bf16.gmra.mxu0 %v624
        %v935 = vpop.f32.mrf.mxu0
        %v936 = vadd.f32 %v887, %v935
        %v937 = vpop.f32.mrf.mxu0
        %v938 = vadd.f32 %v889, %v937
        %939 = vdwg.mxu0
        %v940 = vadd.f32 %v425, %v901
        %v941 = vadd.f32 %v426, %v903
        %v942 = vadd.f32 %v427, %v906
        %v943 = vadd.f32 %v428, %v908
        %v944 = vadd.f32 %v429, %v911
        %v945 = vadd.f32 %v430, %v913
        %v946 = vadd.f32 %v431, %v916
        %v947 = vadd.f32 %v432, %v918
        %v948 = vadd.f32 %v433, %v921
        %v949 = vadd.f32 %v434, %v923
        %v950 = vadd.f32 %v435, %v926
        %v951 = vadd.f32 %v436, %v928
        %v952 = vadd.f32 %v437, %v931
        %v953 = vadd.f32 %v438, %v933
        %v954 = vadd.f32 %v439, %v936
        %v955 = vadd.f32 %v440, %v938
        %956 = vst [vmem:[#allocation2] sm:$0xff] %v940
        %957 = vst [vmem:[#allocation2 + $0x8] sm:$0xff] %v941
        %958 = vst [vmem:[#allocation2 + $0x10] sm:$0xff] %v942
        %959 = vst [vmem:[#allocation2 + $0x18] sm:$0xff] %v943
        %960 = vst [vmem:[#allocation2 + $0x20] sm:$0xff] %v944
        %961 = vst [vmem:[#allocation2 + $0x28] sm:$0xff] %v945
        %962 = vst [vmem:[#allocation2 + $0x30] sm:$0xff] %v946
        %963 = vst [vmem:[#allocation2 + $0x38] sm:$0xff] %v947
        %964 = vst [vmem:[#allocation2 + $0x40] sm:$0xff] %v948
        %965 = vst [vmem:[#allocation2 + $0x48] sm:$0xff] %v949
        %966 = vst [vmem:[#allocation2 + $0x50] sm:$0xff] %v950
        %967 = vst [vmem:[#allocation2 + $0x58] sm:$0xff] %v951
        %968 = vst [vmem:[#allocation2 + $0x60] sm:$0xff] %v952
        %969 = vst [vmem:[#allocation2 + $0x68] sm:$0xff] %v953
        %970 = vst [vmem:[#allocation2 + $0x70] sm:$0xff] %v954
        %971 = vst [vmem:[#allocation2 + $0x78] sm:$0xff] %v955
        %p972 = scmp.eq.s32.totalorder %s22, 2
        // Predicated region
        $region67: #{_lambda_.22} parent=57 // pred_check
          %p973 = pneg %p972
        $region68: #{_lambda_.22} parent=57 // pred_check_branch
          %975 = sbr.rel (%p973) target = $region70
        $region69: #{_lambda_.22} parent=57 // pred_region
          %v976 = vld [vmem:[#allocation2] sm:$0xff]
          %v977 = vld [vmem:[#allocation2 + $0x8] sm:$0xff]
          %v978 = vld [vmem:[#allocation2 + $0x10] sm:$0xff]
          %v979 = vld [vmem:[#allocation2 + $0x18] sm:$0xff]
          %v980 = vld [vmem:[#allocation2 + $0x20] sm:$0xff]
          %v981 = vld [vmem:[#allocation2 + $0x28] sm:$0xff]
          %v982 = vld [vmem:[#allocation2 + $0x30] sm:$0xff]
          %v983 = vld [vmem:[#allocation2 + $0x38] sm:$0xff]
          %v984 = vld [vmem:[#allocation2 + $0x40] sm:$0xff]
          %v985 = vld [vmem:[#allocation2 + $0x48] sm:$0xff]
          %v986 = vld [vmem:[#allocation2 + $0x50] sm:$0xff]
          %v987 = vld [vmem:[#allocation2 + $0x58] sm:$0xff]
          %v988 = vld [vmem:[#allocation2 + $0x60] sm:$0xff]
          %v989 = vld [vmem:[#allocation2 + $0x68] sm:$0xff]
          %v990 = vld [vmem:[#allocation2 + $0x70] sm:$0xff]
          %v991 = vld [vmem:[#allocation2 + $0x78] sm:$0xff]
          %v992 = vld [vmem:[%s386] sm:$0x1]
          %v994 = vperm.slane %v992, 0
          %v996 = vadd.f32 %v976, %v994
          %v997 = vadd.f32 %v977, %v994
          %v998 = vadd.f32 %v978, %v994
          %v999 = vadd.f32 %v979, %v994
          %v1000 = vadd.f32 %v980, %v994
          %v1001 = vadd.f32 %v981, %v994
          %v1002 = vadd.f32 %v982, %v994
          %v1003 = vadd.f32 %v983, %v994
          %v1004 = vadd.f32 %v984, %v994
          %v1005 = vadd.f32 %v985, %v994
          %v1006 = vadd.f32 %v986, %v994
          %v1007 = vadd.f32 %v987, %v994
          %v1008 = vadd.f32 %v988, %v994
          %v1009 = vadd.f32 %v989, %v994
          %v1010 = vadd.f32 %v990, %v994
          %v1011 = vadd.f32 %v991, %v994
          %v1012 = vld [vmem:[%s394] sm:$0xf]
          %v1013 = vld [vmem:[%s394 + $0x4] sm:$0xf]
          %v1014 = vld [vmem:[%s394 + $0x8] sm:$0xf]
          %v1015 = vld [vmem:[%s394 + $0xc] sm:$0xf]
          %v1016 = vld [vmem:[%s394 + $0x10] sm:$0xf]
          %v1017 = vld [vmem:[%s394 + $0x14] sm:$0xf]
          %v1018 = vld [vmem:[%s394 + $0x18] sm:$0xf]
          %v1019 = vld [vmem:[%s394 + $0x1c] sm:$0xf]
          %v1020 = vld [vmem:[%s394 + $0x20] sm:$0xf]
          %v1021 = vld [vmem:[%s394 + $0x24] sm:$0xf]
          %v1022 = vld [vmem:[%s394 + $0x28] sm:$0xf]
          %v1023 = vld [vmem:[%s394 + $0x2c] sm:$0xf]
          %v1024 = vld [vmem:[%s394 + $0x30] sm:$0xf]
          %v1025 = vld [vmem:[%s394 + $0x34] sm:$0xf]
          %v1026 = vld [vmem:[%s394 + $0x38] sm:$0xf]
          %v1027 = vld [vmem:[%s394 + $0x3c] sm:$0xf]
          %v1028 = vunpack.c.l.bf16 %v1012
          %v1029 = vunpack.c.l.bf16 %v1013
          %v1030 = vunpack.c.l.bf16 %v1014
          %v1031 = vunpack.c.l.bf16 %v1015
          %v1032 = vunpack.c.l.bf16 %v1016
          %v1033 = vunpack.c.l.bf16 %v1017
          %v1034 = vunpack.c.l.bf16 %v1018
          %v1035 = vunpack.c.l.bf16 %v1019
          %v1036 = vunpack.c.l.bf16 %v1020
          %v1037 = vunpack.c.l.bf16 %v1021
          %v1038 = vunpack.c.l.bf16 %v1022
          %v1039 = vunpack.c.l.bf16 %v1023
          %v1040 = vunpack.c.l.bf16 %v1024
          %v1041 = vunpack.c.l.bf16 %v1025
          %v1042 = vunpack.c.l.bf16 %v1026
          %v1043 = vunpack.c.l.bf16 %v1027
          %v1044 = vadd.f32 %v996, %v1028
          %v1045 = vadd.f32 %v997, %v1029
          %v1046 = vadd.f32 %v998, %v1030
          %v1047 = vadd.f32 %v999, %v1031
          %v1048 = vadd.f32 %v1000, %v1032
          %v1049 = vadd.f32 %v1001, %v1033
          %v1050 = vadd.f32 %v1002, %v1034
          %v1051 = vadd.f32 %v1003, %v1035
          %v1052 = vadd.f32 %v1004, %v1036
          %v1053 = vadd.f32 %v1005, %v1037
          %v1054 = vadd.f32 %v1006, %v1038
          %v1055 = vadd.f32 %v1007, %v1039
          %v1056 = vadd.f32 %v1008, %v1040
          %v1057 = vadd.f32 %v1009, %v1041
          %v1058 = vadd.f32 %v1010, %v1042
          %v1059 = vadd.f32 %v1011, %v1043
          %v1060 = vmax.f32 %v1044, 0.0
          %v1061 = vmax.f32 %v1045, 0.0
          %v1062 = vmax.f32 %v1046, 0.0
          %v1063 = vmax.f32 %v1047, 0.0
          %v1064 = vmax.f32 %v1048, 0.0
          %v1065 = vmax.f32 %v1049, 0.0
          %v1066 = vmax.f32 %v1050, 0.0
          %v1067 = vmax.f32 %v1051, 0.0
          %v1068 = vmax.f32 %v1052, 0.0
          %v1069 = vmax.f32 %v1053, 0.0
          %v1070 = vmax.f32 %v1054, 0.0
          %v1071 = vmax.f32 %v1055, 0.0
          %v1072 = vmax.f32 %v1056, 0.0
          %v1073 = vmax.f32 %v1057, 0.0
          %v1074 = vmax.f32 %v1058, 0.0
          %v1075 = vmax.f32 %v1059, 0.0
          %v1076 = vpack.c.bf16 %v1060, %v1060
          %v1077 = vpack.c.bf16 %v1061, %v1061
          %v1078 = vpack.c.bf16 %v1062, %v1062
          %v1079 = vpack.c.bf16 %v1063, %v1063
          %v1080 = vpack.c.bf16 %v1064, %v1064
          %v1081 = vpack.c.bf16 %v1065, %v1065
          %v1082 = vpack.c.bf16 %v1066, %v1066
          %v1083 = vpack.c.bf16 %v1067, %v1067
          %v1084 = vpack.c.bf16 %v1068, %v1068
          %v1085 = vpack.c.bf16 %v1069, %v1069
          %v1086 = vpack.c.bf16 %v1070, %v1070
          %v1087 = vpack.c.bf16 %v1071, %v1071
          %v1088 = vpack.c.bf16 %v1072, %v1072
          %v1089 = vpack.c.bf16 %v1073, %v1073
          %v1090 = vpack.c.bf16 %v1074, %v1074
          %v1091 = vpack.c.bf16 %v1075, %v1075
          %1092 = vst [vmem:[%s403] sm:$0xf] %v1076
          %1093 = vst [vmem:[%s403 + $0x4] sm:$0xf] %v1077
          %1094 = vst [vmem:[%s403 + $0x8] sm:$0xf] %v1078
          %1095 = vst [vmem:[%s403 + $0xc] sm:$0xf] %v1079
          %1096 = vst [vmem:[%s403 + $0x10] sm:$0xf] %v1080
          %1097 = vst [vmem:[%s403 + $0x14] sm:$0xf] %v1081
          %1098 = vst [vmem:[%s403 + $0x18] sm:$0xf] %v1082
          %1099 = vst [vmem:[%s403 + $0x1c] sm:$0xf] %v1083
          %1100 = vst [vmem:[%s403 + $0x20] sm:$0xf] %v1084
          %1101 = vst [vmem:[%s403 + $0x24] sm:$0xf] %v1085
          %1102 = vst [vmem:[%s403 + $0x28] sm:$0xf] %v1086
          %1103 = vst [vmem:[%s403 + $0x2c] sm:$0xf] %v1087
          %1104 = vst [vmem:[%s403 + $0x30] sm:$0xf] %v1088
          %1105 = vst [vmem:[%s403 + $0x34] sm:$0xf] %v1089
          %1106 = vst [vmem:[%s403 + $0x38] sm:$0xf] %v1090
          %1107 = vst [vmem:[%s403 + $0x3c] sm:$0xf] %v1091
        $region70: #{_lambda_.22} parent=57 // pred_fallthru
          _
        %s1108 = smul.u32 16, %s20
        %p1109 = scmp.lt.s32.totalorder %s1108, 15
        %s1110 = scalar_select %p1109, %s1108, 15
        %p1111 = scmp.lt.s32.totalorder %s21, 0
        %s1112 = scalar_select %p1111, %s21, 0
        %s1113 = sadd.s32 %s1112, %s1110
        %s1114 = smul.addr %s1113, 4
        %s1115 = scalar_lea.vmem %s4, %s1114
        // Predicated region
        $region71: #{_lambda_.22} parent=57 // pred_check
          %p1116 = pneg %p164
        $region72: #{_lambda_.22} parent=57 // pred_check_branch
          %1118 = sbr.rel (%p1116) target = $region74
        $region73: #{_lambda_.22} parent=57 // pred_region
          %s1119 = smul.u32 16, %s20
        $region74: #{_lambda_.22} parent=57 // pred_fallthru
          _
        // Predicated region
        $region75: #{_lambda_.22} parent=57 // pred_check
          %p1120 = pneg %p164
        $region76: #{_lambda_.22} parent=57 // pred_check_branch
          %1122 = sbr.rel (%p1120) target = $region78
        $region77: #{_lambda_.22} parent=57 // pred_region
          %s1123 = smul.u32 16, %s20
          %p1124 = scmp.lt.s32.totalorder %s1123, 15
          %s1125 = scalar_select %p1124, %s1123, 15
          %p1126 = scmp.lt.s32.totalorder %s21, 0
          %s1127 = scalar_select %p1126, %s21, 0
          %s1128 = sadd.s32 %s1127, %s1125
          %s1129 = smul.addr %s1128, 4
          %s1130 = scalar_lea.vmem %s4, %s1129
        $region78: #{_lambda_.22} parent=57 // pred_fallthru
          _
      $region58: #{_lambda_.22} parent=5 // pred_fallthru
        _
      %p1131 = scmp.le.s32.totalorder 2, %s10
      // Predicated region
      $region79: #{_lambda_.22} parent=5 // pred_check
        %p1132 = pneg %p1131
      $region80: #{_lambda_.22} parent=5 // pred_check_branch
        %1134 = sbr.rel (%p1132) target = $region82
      $region81: #{_lambda_.22} parent=5 // pred_region
        %s1135 = ssub.s32 %s10, 2
      $region82: #{_lambda_.22} parent=5 // pred_fallthru
        _
    $region6: #{_lambda_.22} parent=1 // loop_footer
      %s14 = sadd.s32 1, %s10
    $region7: #{_lambda_.22} parent=1 // loop_footer_branch
      %9 = sbr.rel target = $region3
    $region8: #{_lambda_.22} parent=1 // loop_exit
      _

// kernel: _lambda_.25
$region0: #{_lambda_.25}
  #allocation0 [shape = 'u32[]', space=smem, size = 0x4, offset = 0x4, fixed_abs, tag = 'smem constant byte address 0x4 - core index']
  #allocation1 [shape = 'u32[72,128]{1,0:T(1,128)}', space=vmem, size = 0x9000, scoped, tag = 'internal scratch']
  #allocation2 [shape = 'f32[32,128]{1,0:T(8,128)}', space=vmem, size = 0x4000, scoped, tag = 'scratch operand']
  %s0 = inlined_call_operand.vmem [shape: bf16[32,1152], index: 0, kind: input, shape index: {}]
  %s1 = inlined_call_operand.vmem [shape: bf16[1152,128], index: 1, kind: input, shape index: {}]
  %s2 = inlined_call_operand.vmem [shape: f32[1,128], index: 2, kind: input, shape index: {}]
  %s3 = inlined_call_operand.vmem [shape: bf16[32,128], index: 3, kind: output, shape index: {}]
  %s4 = sld [smem:[#allocation0]]
  $region79: #{_lambda_.25} parent=0
    _
  %s6 = ssub.s32 1, %s4
  %s7 = scalar_select 0, %s6, %s4
  $region1: #{_lambda_.25} parent=0
    #allocation3 [shape = 'u8[49152]{0}', space=vmem, size = 0xc000, scoped, tag = 'input window, operand 0']
    loop: start=0, step=1, limit=5
    $region2: #{_lambda_.25} parent=1 // loop_pre_header
      _
    $region3: #{_lambda_.25} parent=1 // loop_header
      %s9 = sphi 0, %s13
      %p10 = scmp.ge.s32.totalorder %s9, 5
      %s16 = sphi 0, %s35
      %s17 = sphi 0, %s31
      %s18 = sphi 0, %s27
      %s19 = sphi 0, %s16
      %s20 = sphi 0, %s17
      %s21 = sphi 0, %s18
      %s22 = sphi 0, %s19
      %s23 = sphi 0, %s20
      %s24 = sphi 0, %s21
      %s40 = sphi 0, %s42
      %s43 = sphi 0, %s40
      %s44 = sphi 0, %s43
      %s60 = sphi 0, %s44
      %s68 = sphi 0, %s70
      %s71 = sphi 0, %s68
      %s72 = sphi 0, %s71
      %s88 = sphi 0, %s72
      %s94 = sphi 0, %s96
      %s97 = sphi 0, %s94
      %s98 = sphi 0, %s97
      %s114 = sphi 0, %s98
      %s122 = sphi 0, %s124
      %s125 = sphi 0, %s122
      %s126 = sphi 0, %s125
      %s142 = sphi 0, %s126
    $region4: #{_lambda_.25} parent=1 // loop_header_branch
      %12 = sbr.rel (%p10) target = $region8
    $region5: #{_lambda_.25} parent=1 // loop_body
      %s14 = ssub.s32 %s9, 1
      %s15 = ssub.s32 %s9, 2
      %s25 = sadd.s32 1, %s18
      %p26 = scmp.ge.s32.totalorder %s25, 3
      %s27 = scalar_select %p26, 0, %s25
      %s28 = sadd.s32 1, %s17
      %s29 = scalar_select %p26, %s28, %s17
      %p30 = scmp.ge.s32.totalorder %s29, 1
      %s31 = scalar_select %p30, 0, %s29
      %s32 = sadd.s32 1, %s16
      %s33 = scalar_select %p30, %s32, %s16
      %p34 = scmp.ge.s32.totalorder %s33, 1
      %s35 = scalar_select %p34, 0, %s33
      %s36 = ssub.s32 %s16, %s35
      %s37 = ssub.s32 %s18, %s27
      %s38 = sor.u32 %s36, %s37
      %p39 = scmp.eq.s32.totalorder %s38, 0
      %s41 = sadd.s32 %s40, 1
      %s42 = scalar_select %p39, %s40, %s41
      %p45 = pneg %p39
      %p46 = scmp.eq.s32.totalorder %s9, 2
      %p47 = por %p45, %p46
      %p48 = scmp.ne.s32.totalorder %s40, %s43
      %p49 = scmp.eq.s32.totalorder %s9, 0
      %p50 = por %p48, %p49
      %p51 = scmp.ne.s32.totalorder %s40, %s43
      %p52 = scmp.eq.s32.totalorder %s14, 2
      %p53 = por %p51, %p52
      %p54 = scmp.ne.s32.totalorder %s43, %s44
      %p55 = scmp.eq.s32.totalorder %s14, 0
      %p56 = por %p54, %p55
      %p57 = scmp.ne.s32.totalorder %s43, %s44
      %p58 = scmp.eq.s32.totalorder %s15, 2
      %p59 = por %p57, %p58
      %p61 = scmp.ne.s32.totalorder %s44, %s60
      %p62 = scmp.eq.s32.totalorder %s15, 0
      %p63 = por %p61, %p62
      %s64 = ssub.s32 %s18, %s27
      %s65 = ssub.s32 %s17, %s31
      %s66 = sor.u32 %s64, %s65
      %p67 = scmp.eq.s32.totalorder %s66, 0
      %s69 = sadd.s32 %s68, 1
      %s70 = scalar_select %p67, %s68, %s69
      %p73 = pneg %p67
      %p74 = scmp.eq.s32.totalorder %s9, 2
      %p75 = por %p73, %p74
      %p76 = scmp.ne.s32.totalorder %s68, %s71
      %p77 = scmp.eq.s32.totalorder %s9, 0
      %p78 = por %p76, %p77
      %p79 = scmp.ne.s32.totalorder %s68, %s71
      %p80 = scmp.eq.s32.totalorder %s14, 2
      %p81 = por %p79, %p80
      %p82 = scmp.ne.s32.totalorder %s71, %s72
      %p83 = scmp.eq.s32.totalorder %s14, 0
      %p84 = por %p82, %p83
      %p85 = scmp.ne.s32.totalorder %s71, %s72
      %p86 = scmp.eq.s32.totalorder %s15, 2
      %p87 = por %p85, %p86
      %p89 = scmp.ne.s32.totalorder %s72, %s88
      %p90 = scmp.eq.s32.totalorder %s15, 0
      %p91 = por %p89, %p90
      %s92 = ssub.s32 %s17, %s31
      %p93 = scmp.eq.s32.totalorder %s92, 0
      %s95 = sadd.s32 %s94, 1
      %s96 = scalar_select %p93, %s94, %s95
      %p99 = pneg %p93
      %p100 = scmp.eq.s32.totalorder %s9, 2
      %p101 = por %p99, %p100
      %p102 = scmp.ne.s32.totalorder %s94, %s97
      %p103 = scmp.eq.s32.totalorder %s9, 0
      %p104 = por %p102, %p103
      %p105 = scmp.ne.s32.totalorder %s94, %s97
      %p106 = scmp.eq.s32.totalorder %s14, 2
      %p107 = por %p105, %p106
      %p108 = scmp.ne.s32.totalorder %s97, %s98
      %p109 = scmp.eq.s32.totalorder %s14, 0
      %p110 = por %p108, %p109
      %p111 = scmp.ne.s32.totalorder %s97, %s98
      %p112 = scmp.eq.s32.totalorder %s15, 2
      %p113 = por %p111, %p112
      %p115 = scmp.ne.s32.totalorder %s98, %s114
      %p116 = scmp.eq.s32.totalorder %s15, 0
      %p117 = por %p115, %p116
      %s118 = ssub.s32 %s16, %s35
      %s119 = ssub.s32 %s17, %s31
      %s120 = sor.u32 %s118, %s119
      %p121 = scmp.eq.s32.totalorder %s120, 0
      %s123 = sadd.s32 %s122, 1
      %s124 = scalar_select %p121, %s122, %s123
      %p127 = pneg %p121
      %p128 = scmp.eq.s32.totalorder %s9, 2
      %p129 = por %p127, %p128
      %p130 = scmp.ne.s32.totalorder %s122, %s125
      %p131 = scmp.eq.s32.totalorder %s9, 0
      %p132 = por %p130, %p131
      %p133 = scmp.ne.s32.totalorder %s122, %s125
      %p134 = scmp.eq.s32.totalorder %s14, 2
      %p135 = por %p133, %p134
      %p136 = scmp.ne.s32.totalorder %s125, %s126
      %p137 = scmp.eq.s32.totalorder %s14, 0
      %p138 = por %p136, %p137
      %p139 = scmp.ne.s32.totalorder %s125, %s126
      %p140 = scmp.eq.s32.totalorder %s15, 2
      %p141 = por %p139, %p140
      %p143 = scmp.ne.s32.totalorder %s126, %s142
      %p144 = scmp.eq.s32.totalorder %s15, 0
      %p145 = por %p143, %p144
      %p146 = scmp.le.s32.totalorder 1, %s9
      %p147 = scmp.lt.s32.totalorder %s9, 4
      %p148 = pnand %p146, %p147
      %p149 = pneg %p148
      // Predicated region
      $region9: #{_lambda_.25} parent=5 // pred_check
        _
      $region10: #{_lambda_.25} parent=5 // pred_check_branch
        %151 = sbr.rel (%p148) target = $region12
      $region11: #{_lambda_.25} parent=5 // pred_region
        %s152 = ssub.s32 %s9, 1
        // Predicated region
        $region13: #{_lambda_.25} parent=11 // pred_check
          %p153 = pneg %p110
        $region14: #{_lambda_.25} parent=11 // pred_check_branch
          %155 = sbr.rel (%p153) target = $region16
        $region15: #{_lambda_.25} parent=11 // pred_region
          %p156 = scmp.lt.s32.totalorder %s20, 0
          %s157 = scalar_select %p156, %s20, 0
          %s158 = scalar_lea.vmem %s2, %s157
        $region16: #{_lambda_.25} parent=11 // pred_fallthru
          _
      $region12: #{_lambda_.25} parent=5 // pred_fallthru
        _
      %p159 = scmp.lt.s32.totalorder %s9, 3
      // Predicated region
      $region17: #{_lambda_.25} parent=5 // pred_check
        %p160 = pneg %p159
      $region18: #{_lambda_.25} parent=5 // pred_check_branch
        %162 = sbr.rel (%p160) target = $region20
      $region19: #{_lambda_.25} parent=5 // pred_region
        // Predicated region
        $region21: #{_lambda_.25} parent=19 // pred_check
          %p163 = pneg %p50
        $region22: #{_lambda_.25} parent=19 // pred_check_branch
          %165 = sbr.rel (%p163) target = $region24
        $region23: #{_lambda_.25} parent=19 // pred_region
          %s166 = sand.u32 %s40, 1
          %s167 = sand.u32 %s40, 1
          %s168 = smul.addr %s167, 48
          %s169 = scalar_lea.vmem [#allocation3], %s168
          %s170 = smul.u32 4, %s16
          %s171 = smul.u32 3, %s18
          %s172 = smul.addr %s170, 9
          %s173 = sadd.s32 %s171, %s172
          %s174 = smul.addr %s173, 4
          %s175 = scalar_lea.vmem %s0, %s174
          // Predicated region
          $region25: #{_lambda_.25} parent=23 // pred_check
            _
          $region26: #{_lambda_.25} parent=23 // pred_check_branch
            %177 = sbr.rel (0) target = $region28
          $region27: #{_lambda_.25} parent=23 // pred_region
            // Predicated region
            $region29: #{_lambda_.25} parent=27 // pred_check
              _
            $region30: #{_lambda_.25} parent=27 // pred_check_branch
              %179 = sbr.rel (0) target = $region32
            $region31: #{_lambda_.25} parent=27 // pred_region
              %s180 = scalar_lea.vmem %s175, 8
              %s181 = scalar_lea.vmem %s169, 8 [#allocation3]
              loop: start=0, step=1, limit=1
              $region33: #{_lambda_.25} parent=31 // loop_pre_header
                _
              $region34: #{_lambda_.25} parent=31 // loop_header
                %s183 = sphi 0, %s187
                %p184 = scmp.ge.s32.totalorder %s183, 1
                %s188 = sphi %s175, %s175
                %s189 = sphi %s169, %s169
              $region35: #{_lambda_.25} parent=31 // loop_header_branch
                %186 = sbr.rel (%p184) target = $region39
              $region36: #{_lambda_.25} parent=31 // loop_body
                %v190 = vld [vmem:[%s188] sm:$0xff]
                %191 = vst [vmem:[%s189] sm:$0xff] %v190
                %v192 = vld [vmem:[%s188 + $0x24] sm:$0xff]
                %193 = vst [vmem:[%s189 + $0xc] sm:$0xff] %v192
                %v194 = vld [vmem:[%s188 + $0x48] sm:$0xff]
                %195 = vst [vmem:[%s189 + $0x18] sm:$0xff] %v194
                %v196 = vld [vmem:[%s188 + $0x6c] sm:$0xff]
                %197 = vst [vmem:[%s189 + $0x24] sm:$0xff] %v196
              $region37: #{_lambda_.25} parent=31 // loop_footer
                %s187 = sadd.s32 1, %s183
              $region38: #{_lambda_.25} parent=31 // loop_footer_branch
                %182 = sbr.rel target = $region34
              $region39: #{_lambda_.25} parent=31 // loop_exit
                _
              %s199 = ssub.s32 16, 1
              loop: start=0, step=1, limit=1
              $region40: #{_lambda_.25} parent=31 // loop_pre_header
                _
              $region41: #{_lambda_.25} parent=31 // loop_header
                %s201 = sphi 0, %s205
                %p202 = scmp.ge.s32.totalorder %s201, 1
                %s206 = sphi %s180, %s180
                %s207 = sphi %s181, %s181
              $region42: #{_lambda_.25} parent=31 // loop_header_branch
                %204 = sbr.rel (%p202) target = $region46
              $region43: #{_lambda_.25} parent=31 // loop_body
                %v208 = vld [vmem:[%s206] sm:%s199]
                %209 = vst [vmem:[%s207] sm:%s199] %v208
                %v210 = vld [vmem:[%s206 + $0x24] sm:%s199]
                %211 = vst [vmem:[%s207 + $0xc] sm:%s199] %v210
                %v212 = vld [vmem:[%s206 + $0x48] sm:%s199]
                %213 = vst [vmem:[%s207 + $0x18] sm:%s199] %v212
                %v214 = vld [vmem:[%s206 + $0x6c] sm:%s199]
                %215 = vst [vmem:[%s207 + $0x24] sm:%s199] %v214
              $region44: #{_lambda_.25} parent=31 // loop_footer
                %s205 = sadd.s32 1, %s201
              $region45: #{_lambda_.25} parent=31 // loop_footer_branch
                %200 = sbr.rel target = $region41
              $region46: #{_lambda_.25} parent=31 // loop_exit
                _
            $region32: #{_lambda_.25} parent=27 // pred_fallthru
              _
          $region28: #{_lambda_.25} parent=23 // pred_fallthru
            _
          %216 = vnop
        $region24: #{_lambda_.25} parent=19 // pred_fallthru
          _
        // Predicated region
        $region47: #{_lambda_.25} parent=19 // pred_check
          %p217 = pneg %p78
        $region48: #{_lambda_.25} parent=19 // pred_check_branch
          %219 = sbr.rel (%p217) target = $region50
        $region49: #{_lambda_.25} parent=19 // pred_region
          %s220 = smul.u32 48, %s18
          %p221 = scmp.lt.s32.totalorder %s220, 143
          %s222 = scalar_select %p221, %s220, 143
          %p223 = scmp.lt.s32.totalorder %s17, 0
          %s224 = scalar_select %p223, %s17, 0
          %s225 = sadd.s32 %s224, %s222
          %s226 = smul.addr %s225, 4
          %s227 = scalar_lea.vmem %s1, %s226
          %s228 = smul.u32 48, %s18
        $region50: #{_lambda_.25} parent=19 // pred_fallthru
          _
      $region20: #{_lambda_.25} parent=5 // pred_fallthru
        _
      %p229 = scmp.le.s32.totalorder 1, %s9
      %p230 = scmp.lt.s32.totalorder %s9, 4
      %p231 = pnand %p229, %p230
      %p232 = pneg %p231
      // Predicated region
      $region51: #{_lambda_.25} parent=5 // pred_check
        _
      $region52: #{_lambda_.25} parent=5 // pred_check_branch
        %234 = sbr.rel (%p231) target = $region54
      $region53: #{_lambda_.25} parent=5 // pred_region
        %s235 = ssub.s32 %s9, 1
        %s236 = sand.u32 %s43, 1
        %s237 = sand.u32 %s43, 1
        %s238 = smul.addr %s237, 48
        %s239 = scalar_lea.vmem [#allocation3], %s238
        // Predicated region
        $region55: #{_lambda_.25} parent=53 // pred_check
          %p240 = pneg %p56
        $region56: #{_lambda_.25} parent=53 // pred_check_branch
          %242 = sbr.rel (%p240) target = $region58
        $region57: #{_lambda_.25} parent=53 // pred_region
          _
        $region58: #{_lambda_.25} parent=53 // pred_fallthru
          _
        %s243 = sand.u32 %s43, 1
        %s244 = sand.u32 %s43, 1
        %s245 = smul.addr %s244, 48
        %s246 = scalar_lea.vmem [#allocation3], %s245
        %p247 = pneg %p56
        %p248 = pneg %p53
        %s249 = smul.u32 48, %s21
        %p250 = scmp.lt.s32.totalorder %s249, 143
        %s251 = scalar_select %p250, %s249, 143
        %p252 = scmp.lt.s32.totalorder %s20, 0
        %s253 = scalar_select %p252, %s20, 0
        %s254 = sadd.s32 %s253, %s251
        %s255 = smul.addr %s254, 4
        %s256 = scalar_lea.vmem %s1, %s255
        %p257 = pneg %p84
        %p258 = pneg %p81
        %p259 = scmp.lt.s32.totalorder %s20, 0
        %s260 = scalar_select %p259, %s20, 0
        %s261 = scalar_lea.vmem %s2, %s260
        %p262 = pneg %p110
        %p263 = pneg %p107
        %p264 = pneg %p138
        %p265 = pneg %p135
        %s266 = smul.u32 4, %s19
        %p267 = scmp.lt.s32.totalorder %s266, 3
        %s268 = scalar_select %p267, %s266, 3
        %p269 = scmp.lt.s32.totalorder %s20, 0
        %s270 = scalar_select %p269, %s20, 0
        %s271 = sadd.s32 %s270, %s268
        %s272 = smul.addr %s271, 4
        %s273 = scalar_lea.vmem %s3, %s272
        %s274 = smul.u32 4, %s19
        %s275 = smul.u32 3, %s21
        %s276 = smul.u32 48, %s21
        %p277 = scmp.lt.s32.totalorder %s276, 143
        %s278 = scalar_select %p277, %s276, 143
        %p279 = scmp.lt.s32.totalorder %s20, 0
        %s280 = scalar_select %p279, %s20, 0
        %s281 = sadd.s32 %s280, %s278
        %s282 = smul.addr %s281, 4
        %s283 = scalar_lea.vmem %s1, %s282
        %s284 = smul.u32 48, %s21
        %p285 = scmp.lt.s32.totalorder %s20, 0
        %s286 = scalar_select %p285, %s20, 0
        %s287 = scalar_lea.vmem %s2, %s286
        %s288 = smul.u32 4, %s19
        %p289 = scmp.lt.s32.totalorder %s288, 3
        %s290 = scalar_select %p289, %s288, 3
        %p291 = scmp.lt.s32.totalorder %s20, 0
        %s292 = scalar_select %p291, %s20, 0
        %s293 = sadd.s32 %s292, %s290
        %s294 = smul.addr %s293, 4
        %s295 = scalar_lea.vmem %s3, %s294
        %s296 = smul.u32 4, %s19
        %p297 = scmp.eq.s32.totalorder %s21, 0
        // Predicated region
        $region59: #{_lambda_.25} parent=53 // pred_check
          %p298 = pneg %p297
        $region60: #{_lambda_.25} parent=53 // pred_check_branch
          %300 = sbr.rel (%p298) target = $region62
        $region61: #{_lambda_.25} parent=53 // pred_region
          %301 = vst [vmem:[#allocation2] sm:$0xff] 0.0
          %302 = vst [vmem:[#allocation2 + $0x8] sm:$0xff] 0.0
          %303 = vst [vmem:[#allocation2 + $0x10] sm:$0xff] 0.0
          %304 = vst [vmem:[#allocation2 + $0x18] sm:$0xff] 0.0
        $region62: #{_lambda_.25} parent=53 // pred_fallthru
          _
        %v305 = vld [vmem:[#allocation2] sm:$0xff]
        %v306 = vld [vmem:[#allocation2 + $0x8] sm:$0xff]
        %v307 = vld [vmem:[#allocation2 + $0x10] sm:$0xff]
        %v308 = vld [vmem:[#allocation2 + $0x18] sm:$0xff]
        %v309 = vld [vmem:[%s239] sm:$0xff]
        %v310 = vld [vmem:[%s239 + $0x8] sm:$0xf]
        %v311 = vld [vmem:[%s239 + $0xc] sm:$0xff]
        %v312 = vld [vmem:[%s239 + $0x14] sm:$0xf]
        %v313 = vld [vmem:[%s239 + $0x18] sm:$0xff]
        %v314 = vld [vmem:[%s239 + $0x20] sm:$0xf]
        %v315 = vld [vmem:[%s239 + $0x24] sm:$0xff]
        %v316 = vld [vmem:[%s239 + $0x2c] sm:$0xf]
        %v317 = vld [vmem:[%s283] sm:$0xf]
        %v318 = vld [vmem:[%s283 + $0x4] sm:$0xf]
        %v319 = vld [vmem:[%s283 + $0x8] sm:$0xf]
        %v320 = vld [vmem:[%s283 + $0xc] sm:$0xf]
        %v321 = vld [vmem:[%s283 + $0x10] sm:$0xf]
        %v322 = vld [vmem:[%s283 + $0x14] sm:$0xf]
        %v323 = vld [vmem:[%s283 + $0x18] sm:$0xf]
        %v324 = vld [vmem:[%s283 + $0x1c] sm:$0xf]
        %v325 = vld [vmem:[%s283 + $0x20] sm:$0xf]
        %v326 = vld [vmem:[%s283 + $0x24] sm:$0xf]
        %v327 = vld [vmem:[%s283 + $0x28] sm:$0xf]
        %v328 = vld [vmem:[%s283 + $0x2c] sm:$0xf]
        %v329 = vld [vmem:[%s283 + $0x30] sm:$0xf]
        %v330 = vld [vmem:[%s283 + $0x34] sm:$0xf]
        %v331 = vld [vmem:[%s283 + $0x38] sm:$0xf]
        %v332 = vld [vmem:[%s283 + $0x3c] sm:$0xf]
        %v333 = vld [vmem:[%s283 + $0x40] sm:$0xf]
        %v334 = vld [vmem:[%s283 + $0x44] sm:$0xf]
        %v335 = vld [vmem:[%s283 + $0x48] sm:$0xf]
        %v336 = vld [vmem:[%s283 + $0x4c] sm:$0xf]
        %v337 = vld [vmem:[%s283 + $0x50] sm:$0xf]
        %v338 = vld [vmem:[%s283 + $0x54] sm:$0xf]
        %v339 = vld [vmem:[%s283 + $0x58] sm:$0xf]
        %v340 = vld [vmem:[%s283 + $0x5c] sm:$0xf]
        %v341 = vld [vmem:[%s283 + $0x60] sm:$0xf]
        %v342 = vld [vmem:[%s283 + $0x64] sm:$0xf]
        %v343 = vld [vmem:[%s283 + $0x68] sm:$0xf]
        %v344 = vld [vmem:[%s283 + $0x6c] sm:$0xf]
        %v345 = vld [vmem:[%s283 + $0x70] sm:$0xf]
        %v346 = vld [vmem:[%s283 + $0x74] sm:$0xf]
        %v347 = vld [vmem:[%s283 + $0x78] sm:$0xf]
        %v348 = vld [vmem:[%s283 + $0x7c] sm:$0xf]
        %v349 = vld [vmem:[%s283 + $0x80] sm:$0xf]
        %v350 = vld [vmem:[%s283 + $0x84] sm:$0xf]
        %v351 = vld [vmem:[%s283 + $0x88] sm:$0xf]
        %v352 = vld [vmem:[%s283 + $0x8c] sm:$0xf]
        %v353 = vld [vmem:[%s283 + $0x90] sm:$0xf]
        %v354 = vld [vmem:[%s283 + $0x94] sm:$0xf]
        %v355 = vld [vmem:[%s283 + $0x98] sm:$0xf]
        %v356 = vld [vmem:[%s283 + $0x9c] sm:$0xf]
        %v357 = vld [vmem:[%s283 + $0xa0] sm:$0xf]
        %v358 = vld [vmem:[%s283 + $0xa4] sm:$0xf]
        %v359 = vld [vmem:[%s283 + $0xa8] sm:$0xf]
        %v360 = vld [vmem:[%s283 + $0xac] sm:$0xf]
        %v361 = vld [vmem:[%s283 + $0xb0] sm:$0xf]
        %v362 = vld [vmem:[%s283 + $0xb4] sm:$0xf]
        %v363 = vld [vmem:[%s283 + $0xb8] sm:$0xf]
        %v364 = vld [vmem:[%s283 + $0xbc] sm:$0xf]
        %v373 = vunpack.c.l.b16 %v309
        %v374 = vunpack.c.h.b16 %v309
        %v375 = vunpack.c.l.b16 %v310
        %v376 = vunpack.c.l.b16 %v311
        %v377 = vunpack.c.h.b16 %v311
        %v378 = vunpack.c.l.b16 %v312
        %v379 = vunpack.c.l.b16 %v313
        %v380 = vunpack.c.h.b16 %v313
        %v381 = vunpack.c.l.b16 %v314
        %v382 = vunpack.c.l.b16 %v315
        %v383 = vunpack.c.h.b16 %v315
        %v384 = vunpack.c.l.b16 %v316
        %v385 = vpack.c.b16 %v376, %v373
        %v386 = vpack.c.b16 %v377, %v374
        %v387 = vpack.c.b16 %v378, %v375
        %v388 = vpack.c.b16 %v382, %v379
        %v389 = vpack.c.b16 %v383, %v380
        %v390 = vpack.c.b16 %v384, %v381
        %v445 = vunpack.c.l.b16 %v317
        %v446 = vunpack.c.l.b16 %v318
        %v447 = vunpack.c.l.b16 %v319
        %v448 = vunpack.c.l.b16 %v320
        %v449 = vunpack.c.l.b16 %v321
        %v450 = vunpack.c.l.b16 %v322
        %v451 = vunpack.c.l.b16 %v323
        %v452 = vunpack.c.l.b16 %v324
        %v453 = vunpack.c.l.b16 %v325
        %v454 = vunpack.c.l.b16 %v326
        %v455 = vunpack.c.l.b16 %v327
        %v456 = vunpack.c.l.b16 %v328
        %v457 = vunpack.c.l.b16 %v329
        %v458 = vunpack.c.l.b16 %v330
        %v459 = vunpack.c.l.b16 %v331
        %v460 = vunpack.c.l.b16 %v332
        %v461 = vunpack.c.l.b16 %v333
        %v462 = vunpack.c.l.b16 %v334
        %v463 = vunpack.c.l.b16 %v335
        %v464 = vunpack.c.l.b16 %v336
        %v465 = vunpack.c.l.b16 %v337
        %v466 = vunpack.c.l.b16 %v338
        %v467 = vunpack.c.l.b16 %v339
        %v468 = vunpack.c.l.b16 %v340
        %v469 = vunpack.c.l.b16 %v341
        %v470 = vunpack.c.l.b16 %v342
        %v471 = vunpack.c.l.b16 %v343
        %v472 = vunpack.c.l.b16 %v344
        %v473 = vunpack.c.l.b16 %v345
        %v474 = vunpack.c.l.b16 %v346
        %v475 = vunpack.c.l.b16 %v347
        %v476 = vunpack.c.l.b16 %v348
        %v477 = vunpack.c.l.b16 %v349
        %v478 = vunpack.c.l.b16 %v350
        %v479 = vunpack.c.l.b16 %v351
        %v480 = vunpack.c.l.b16 %v352
        %v481 = vunpack.c.l.b16 %v353
        %v482 = vunpack.c.l.b16 %v354
        %v483 = vunpack.c.l.b16 %v355
        %v484 = vunpack.c.l.b16 %v356
        %v485 = vunpack.c.l.b16 %v357
        %v486 = vunpack.c.l.b16 %v358
        %v487 = vunpack.c.l.b16 %v359
        %v488 = vunpack.c.l.b16 %v360
        %v489 = vunpack.c.l.b16 %v361
        %v490 = vunpack.c.l.b16 %v362
        %v491 = vunpack.c.l.b16 %v363
        %v492 = vunpack.c.l.b16 %v364
        %v493 = vpack.c.b16 %v446, %v445
        %v494 = vpack.c.b16 %v448, %v447
        %v495 = vpack.c.b16 %v450, %v449
        %v496 = vpack.c.b16 %v452, %v451
        %v497 = vpack.c.b16 %v454, %v453
        %v498 = vpack.c.b16 %v456, %v455
        %v499 = vpack.c.b16 %v458, %v457
        %v500 = vpack.c.b16 %v460, %v459
        %v501 = vpack.c.b16 %v462, %v461
        %v502 = vpack.c.b16 %v464, %v463
        %v503 = vpack.c.b16 %v466, %v465
        %v504 = vpack.c.b16 %v468, %v467
        %v505 = vpack.c.b16 %v470, %v469
        %v506 = vpack.c.b16 %v472, %v471
        %v507 = vpack.c.b16 %v474, %v473
        %v508 = vpack.c.b16 %v476, %v475
        %v509 = vpack.c.b16 %v478, %v477
        %v510 = vpack.c.b16 %v480, %v479
        %v511 = vpack.c.b16 %v482, %v481
        %v512 = vpack.c.b16 %v484, %v483
        %v513 = vpack.c.b16 %v486, %v485
        %v514 = vpack.c.b16 %v488, %v487
        %v515 = vpack.c.b16 %v490, %v489
        %v516 = vpack.c.b16 %v492, %v491
        %541 = vmatpush.bf16.msra.mxu0 %v500
        %542 = vmatpush.bf16.msra.mxu0 %v499
        %543 = vmatpush.bf16.msra.mxu0 %v498
        %544 = vmatpush.bf16.msra.mxu0 %v497
        %545 = vmatpush.bf16.msra.mxu0 %v496
        %546 = vmatpush.bf16.msra.mxu0 %v495
        %547 = vmatpush.bf16.msra.mxu0 %v494
        %548 = vmatpush.bf16.msra.mxu0 %v493
        %549 = vmatmul.bf16.gmra.mxu0 %v385
        %v550 = vpop.f32.mrf.mxu0
        %v551 = vadd.f32 0.0, %v550
        %v552 = vpop.f32.mrf.mxu0
        %v553 = vadd.f32 0.0, %v552
        %554 = vmatmul.bf16.gmra.mxu0 %v388
        %v555 = vpop.f32.mrf.mxu0
        %v556 = vadd.f32 0.0, %v555
        %v557 = vpop.f32.mrf.mxu0
        %v558 = vadd.f32 0.0, %v557
        %559 = vdwg.mxu0
        %560 = vmatpush.bf16.msra.mxu0 %v508
        %561 = vmatpush.bf16.msra.mxu0 %v507
        %562 = vmatpush.bf16.msra.mxu0 %v506
        %563 = vmatpush.bf16.msra.mxu0 %v505
        %564 = vmatpush.bf16.msra.mxu0 %v504
        %565 = vmatpush.bf16.msra.mxu0 %v503
        %566 = vmatpush.bf16.msra.mxu0 %v502
        %567 = vmatpush.bf16.msra.mxu0 %v501
        %568 = vmatmul.bf16.gmra.mxu0 %v386
        %v569 = vpop.f32.mrf.mxu0
        %v570 = vadd.f32 %v551, %v569
        %v571 = vpop.f32.mrf.mxu0
        %v572 = vadd.f32 %v553, %v571
        %573 = vmatmul.bf16.gmra.mxu0 %v389
        %v574 = vpop.f32.mrf.mxu0
        %v575 = vadd.f32 %v556, %v574
        %v576 = vpop.f32.mrf.mxu0
        %v577 = vadd.f32 %v558, %v576
        %578 = vdwg.mxu0
        %579 = vmatpush.bf16.msra.mxu0 %v516
        %580 = vmatpush.bf16.msra.mxu0 %v515
        %581 = vmatpush.bf16.msra.mxu0 %v514
        %582 = vmatpush.bf16.msra.mxu0 %v513
        %583 = vmatpush.bf16.msra.mxu0 %v512
        %584 = vmatpush.bf16.msra.mxu0 %v511
        %585 = vmatpush.bf16.msra.mxu0 %v510
        %586 = vmatpush.bf16.msra.mxu0 %v509
        %587 = vmatmul.bf16.gmra.mxu0 %v387
        %v588 = vpop.f32.mrf.mxu0
        %v589 = vadd.f32 %v570, %v588
        %v590 = vpop.f32.mrf.mxu0
        %v591 = vadd.f32 %v572, %v590
        %592 = vmatmul.bf16.gmra.mxu0 %v390
        %v593 = vpop.f32.mrf.mxu0
        %v594 = vadd.f32 %v575, %v593
        %v595 = vpop.f32.mrf.mxu0
        %v596 = vadd.f32 %v577, %v595
        %597 = vdwg.mxu0
        %v598 = vadd.f32 %v305, %v589
        %v599 = vadd.f32 %v306, %v591
        %v600 = vadd.f32 %v307, %v594
        %v601 = vadd.f32 %v308, %v596
        %602 = vst [vmem:[#allocation2] sm:$0xff] %v598
        %603 = vst [vmem:[#allocation2 + $0x8] sm:$0xff] %v599
        %604 = vst [vmem:[#allocation2 + $0x10] sm:$0xff] %v600
        %605 = vst [vmem:[#allocation2 + $0x18] sm:$0xff] %v601
        %p606 = scmp.eq.s32.totalorder %s21, 2
        // Predicated region
        $region63: #{_lambda_.25} parent=53 // pred_check
          %p607 = pneg %p606
        $region64: #{_lambda_.25} parent=53 // pred_check_branch
          %609 = sbr.rel (%p607) target = $region66
        $region65: #{_lambda_.25} parent=53 // pred_region
          %v610 = vld [vmem:[#allocation2] sm:$0xff]
          %v611 = vld [vmem:[#allocation2 + $0x8] sm:$0xff]
          %v612 = vld [vmem:[#allocation2 + $0x10] sm:$0xff]
          %v613 = vld [vmem:[#allocation2 + $0x18] sm:$0xff]
          %v614 = vld [vmem:[%s287] sm:$0x1]
          %v616 = vperm.slane %v614, 0
          %v618 = vadd.f32 %v610, %v616
          %v619 = vadd.f32 %v611, %v616
          %v620 = vadd.f32 %v612, %v616
          %v621 = vadd.f32 %v613, %v616
          %v622 = vmax.f32 %v618, 0.0
          %v623 = vmax.f32 %v619, 0.0
          %v624 = vmax.f32 %v620, 0.0
          %v625 = vmax.f32 %v621, 0.0
          %v626 = vpack.c.bf16 %v622, %v622
          %v627 = vpack.c.bf16 %v623, %v623
          %v628 = vpack.c.bf16 %v624, %v624
          %v629 = vpack.c.bf16 %v625, %v625
          %630 = vst [vmem:[%s295] sm:$0xf] %v626
          %631 = vst [vmem:[%s295 + $0x4] sm:$0xf] %v627
          %632 = vst [vmem:[%s295 + $0x8] sm:$0xf] %v628
          %633 = vst [vmem:[%s295 + $0xc] sm:$0xf] %v629
        $region66: #{_lambda_.25} parent=53 // pred_fallthru
          _
        %s634 = smul.u32 4, %s19
        %p635 = scmp.lt.s32.totalorder %s634, 3
        %s636 = scalar_select %p635, %s634, 3
        %p637 = scmp.lt.s32.totalorder %s20, 0
        %s638 = scalar_select %p637, %s20, 0
        %s639 = sadd.s32 %s638, %s636
        %s640 = smul.addr %s639, 4
        %s641 = scalar_lea.vmem %s3, %s640
        // Predicated region
        $region67: #{_lambda_.25} parent=53 // pred_check
          %p642 = pneg %p135
        $region68: #{_lambda_.25} parent=53 // pred_check_branch
          %644 = sbr.rel (%p642) target = $region70
        $region69: #{_lambda_.25} parent=53 // pred_region
          %s645 = smul.u32 4, %s19
        $region70: #{_lambda_.25} parent=53 // pred_fallthru
          _
        // Predicated region
        $region71: #{_lambda_.25} parent=53 // pred_check
          %p646 = pneg %p135
        $region72: #{_lambda_.25} parent=53 // pred_check_branch
          %648 = sbr.rel (%p646) target = $region74
        $region73: #{_lambda_.25} parent=53 // pred_region
          %s649 = smul.u32 4, %s19
          %p650 = scmp.lt.s32.totalorder %s649, 3
          %s651 = scalar_select %p650, %s649, 3
          %p652 = scmp.lt.s32.totalorder %s20, 0
          %s653 = scalar_select %p652, %s20, 0
          %s654 = sadd.s32 %s653, %s651
          %s655 = smul.addr %s654, 4
          %s656 = scalar_lea.vmem %s3, %s655
        $region74: #{_lambda_.25} parent=53 // pred_fallthru
          _
      $region54: #{_lambda_.25} parent=5 // pred_fallthru
        _
      %p657 = scmp.le.s32.totalorder 2, %s9
      // Predicated region
      $region75: #{_lambda_.25} parent=5 // pred_check
        %p658 = pneg %p657
      $region76: #{_lambda_.25} parent=5 // pred_check_branch
        %660 = sbr.rel (%p658) target = $region78
      $region77: #{_lambda_.25} parent=5 // pred_region
        %s661 = ssub.s32 %s9, 2
      $region78: #{_lambda_.25} parent=5 // pred_fallthru
        _
    $region6: #{_lambda_.25} parent=1 // loop_footer
      %s13 = sadd.s32 1, %s9
    $region7: #{_lambda_.25} parent=1 // loop_footer_branch
      %8 = sbr.rel target = $region3
    $region8: #{_lambda_.25} parent=1 // loop_exit
      _

// kernel: _lambda_.26
$region0: #{_lambda_.26}
  #allocation0 [shape = 'u32[]', space=smem, size = 0x4, offset = 0x4, fixed_abs, tag = 'smem constant byte address 0x4 - core index']
  #allocation1 [shape = 'u32[72,128]{1,0:T(1,128)}', space=vmem, size = 0x9000, scoped, tag = 'internal scratch']
  #allocation2 [shape = 'f32[32,128]{1,0:T(8,128)}', space=vmem, size = 0x4000, scoped, tag = 'scratch operand']
  %s0 = inlined_call_operand.vmem [shape: bf16[32,128], index: 0, kind: input, shape index: {}]
  %s1 = inlined_call_operand.vmem [shape: bf16[128,128], index: 1, kind: input, shape index: {}]
  %s2 = inlined_call_operand.vmem [shape: f32[1,128], index: 2, kind: input, shape index: {}]
  %s3 = inlined_call_operand.vmem [shape: bf16[32,128], index: 3, kind: output, shape index: {}]
  %s4 = sld [smem:[#allocation0]]
  $region30: #{_lambda_.26} parent=0
    _
  %s6 = ssub.s32 1, %s4
  %s7 = scalar_select 0, %s6, %s4
  // Predicated region
  $region2: #{_lambda_.26} parent=0 // pred_check
    _
  $region3: #{_lambda_.26} parent=0 // pred_check_branch
    %9 = sbr.rel (0) target = $region5
  $region4: #{_lambda_.26} parent=0 // pred_region
    _
  $region5: #{_lambda_.26} parent=0 // pred_fallthru
    _
  // Predicated region
  $region6: #{_lambda_.26} parent=0 // pred_check
    _
  $region7: #{_lambda_.26} parent=0 // pred_check_branch
    %11 = sbr.rel (0) target = $region9
  $region8: #{_lambda_.26} parent=0 // pred_region
    _
  $region9: #{_lambda_.26} parent=0 // pred_fallthru
    _
  // Predicated region
  $region10: #{_lambda_.26} parent=0 // pred_check
    _
  $region11: #{_lambda_.26} parent=0 // pred_check_branch
    %13 = sbr.rel (0) target = $region13
  $region12: #{_lambda_.26} parent=0 // pred_region
    _
  $region13: #{_lambda_.26} parent=0 // pred_fallthru
    _
  %p14 = scmp.eq.s32.totalorder 0, 0
  // Predicated region
  $region14: #{_lambda_.26} parent=0 // pred_check
    %p15 = pneg %p14
  $region15: #{_lambda_.26} parent=0 // pred_check_branch
    %17 = sbr.rel (%p15) target = $region17
  $region16: #{_lambda_.26} parent=0 // pred_region
    %18 = vst [vmem:[#allocation2] sm:$0xff] 0.0
    %19 = vst [vmem:[#allocation2 + $0x8] sm:$0xff] 0.0
    %20 = vst [vmem:[#allocation2 + $0x10] sm:$0xff] 0.0
    %21 = vst [vmem:[#allocation2 + $0x18] sm:$0xff] 0.0
  $region17: #{_lambda_.26} parent=0 // pred_fallthru
    _
  %v22 = vld [vmem:[#allocation2] sm:$0xff]
  %v23 = vld [vmem:[#allocation2 + $0x8] sm:$0xff]
  %v24 = vld [vmem:[#allocation2 + $0x10] sm:$0xff]
  %v25 = vld [vmem:[#allocation2 + $0x18] sm:$0xff]
  %v26 = vld [vmem:[%s0] sm:$0xf]
  %v27 = vld [vmem:[%s0 + $0x4] sm:$0xf]
  %v28 = vld [vmem:[%s0 + $0x8] sm:$0xf]
  %v29 = vld [vmem:[%s0 + $0xc] sm:$0xf]
  %v30 = vld [vmem:[%s1] sm:$0xf]
  %v31 = vld [vmem:[%s1 + $0x4] sm:$0xf]
  %v32 = vld [vmem:[%s1 + $0x8] sm:$0xf]
  %v33 = vld [vmem:[%s1 + $0xc] sm:$0xf]
  %v34 = vld [vmem:[%s1 + $0x10] sm:$0xf]
  %v35 = vld [vmem:[%s1 + $0x14] sm:$0xf]
  %v36 = vld [vmem:[%s1 + $0x18] sm:$0xf]
  %v37 = vld [vmem:[%s1 + $0x1c] sm:$0xf]
  %v38 = vld [vmem:[%s1 + $0x20] sm:$0xf]
  %v39 = vld [vmem:[%s1 + $0x24] sm:$0xf]
  %v40 = vld [vmem:[%s1 + $0x28] sm:$0xf]
  %v41 = vld [vmem:[%s1 + $0x2c] sm:$0xf]
  %v42 = vld [vmem:[%s1 + $0x30] sm:$0xf]
  %v43 = vld [vmem:[%s1 + $0x34] sm:$0xf]
  %v44 = vld [vmem:[%s1 + $0x38] sm:$0xf]
  %v45 = vld [vmem:[%s1 + $0x3c] sm:$0xf]
  %v50 = vunpack.c.l.b16 %v26
  %v51 = vunpack.c.l.b16 %v27
  %v52 = vunpack.c.l.b16 %v28
  %v53 = vunpack.c.l.b16 %v29
  %v54 = vpack.c.b16 %v51, %v50
  %v55 = vpack.c.b16 %v53, %v52
  %v74 = vunpack.c.l.b16 %v30
  %v75 = vunpack.c.l.b16 %v31
  %v76 = vunpack.c.l.b16 %v32
  %v77 = vunpack.c.l.b16 %v33
  %v78 = vunpack.c.l.b16 %v34
  %v79 = vunpack.c.l.b16 %v35
  %v80 = vunpack.c.l.b16 %v36
  %v81 = vunpack.c.l.b16 %v37
  %v82 = vunpack.c.l.b16 %v38
  %v83 = vunpack.c.l.b16 %v39
  %v84 = vunpack.c.l.b16 %v40
  %v85 = vunpack.c.l.b16 %v41
  %v86 = vunpack.c.l.b16 %v42
  %v87 = vunpack.c.l.b16 %v43
  %v88 = vunpack.c.l.b16 %v44
  %v89 = vunpack.c.l.b16 %v45
  %v90 = vpack.c.b16 %v75, %v74
  %v91 = vpack.c.b16 %v77, %v76
  %v92 = vpack.c.b16 %v79, %v78
  %v93 = vpack.c.b16 %v81, %v80
  %v94 = vpack.c.b16 %v83, %v82
  %v95 = vpack.c.b16 %v85, %v84
  %v96 = vpack.c.b16 %v87, %v86
  %v97 = vpack.c.b16 %v89, %v88
  %106 = vmatpush.bf16.msra.mxu0 %v97
  %107 = vmatpush.bf16.msra.mxu0 %v96
  %108 = vmatpush.bf16.msra.mxu0 %v95
  %109 = vmatpush.bf16.msra.mxu0 %v94
  %110 = vmatpush.bf16.msra.mxu0 %v93
  %111 = vmatpush.bf16.msra.mxu0 %v92
  %112 = vmatpush.bf16.msra.mxu0 %v91
  %113 = vmatpush.bf16.msra.mxu0 %v90
  %114 = vmatmul.bf16.gmra.mxu0 %v54
  %v115 = vpop.f32.mrf.mxu0
  %v116 = vadd.f32 0.0, %v115
  %v117 = vpop.f32.mrf.mxu0
  %v118 = vadd.f32 0.0, %v117
  %119 = vmatmul.bf16.gmra.mxu0 %v55
  %v120 = vpop.f32.mrf.mxu0
  %v121 = vadd.f32 0.0, %v120
  %v122 = vpop.f32.mrf.mxu0
  %v123 = vadd.f32 0.0, %v122
  %124 = vdwg.mxu0
  %v125 = vadd.f32 %v22, %v116
  %v126 = vadd.f32 %v23, %v118
  %v127 = vadd.f32 %v24, %v121
  %v128 = vadd.f32 %v25, %v123
  %129 = vst [vmem:[#allocation2] sm:$0xff] %v125
  %130 = vst [vmem:[#allocation2 + $0x8] sm:$0xff] %v126
  %131 = vst [vmem:[#allocation2 + $0x10] sm:$0xff] %v127
  %132 = vst [vmem:[#allocation2 + $0x18] sm:$0xff] %v128
  // Predicated region
  $region18: #{_lambda_.26} parent=0 // pred_check
    %p133 = pneg %p14
  $region19: #{_lambda_.26} parent=0 // pred_check_branch
    %135 = sbr.rel (%p133) target = $region21
  $region20: #{_lambda_.26} parent=0 // pred_region
    %v136 = vld [vmem:[#allocation2] sm:$0xff]
    %v137 = vld [vmem:[#allocation2 + $0x8] sm:$0xff]
    %v138 = vld [vmem:[#allocation2 + $0x10] sm:$0xff]
    %v139 = vld [vmem:[#allocation2 + $0x18] sm:$0xff]
    %v140 = vld [vmem:[%s2] sm:$0x1]
    %v142 = vperm.slane %v140, 0
    %v144 = vadd.f32 %v136, %v142
    %v145 = vadd.f32 %v137, %v142
    %v146 = vadd.f32 %v138, %v142
    %v147 = vadd.f32 %v139, %v142
    %v148 = vpack.c.bf16 %v144, %v144
    %v149 = vpack.c.bf16 %v145, %v145
    %v150 = vpack.c.bf16 %v146, %v146
    %v151 = vpack.c.bf16 %v147, %v147
    %152 = vst [vmem:[%s3] sm:$0xf] %v148
    %153 = vst [vmem:[%s3 + $0x4] sm:$0xf] %v149
    %154 = vst [vmem:[%s3 + $0x8] sm:$0xf] %v150
    %155 = vst [vmem:[%s3 + $0xc] sm:$0xf] %v151
  $region21: #{_lambda_.26} parent=0 // pred_fallthru
    _
  // Predicated region
  $region22: #{_lambda_.26} parent=0 // pred_check
    _
  $region23: #{_lambda_.26} parent=0 // pred_check_branch
    %157 = sbr.rel (0) target = $region25
  $region24: #{_lambda_.26} parent=0 // pred_region
    _
  $region25: #{_lambda_.26} parent=0 // pred_fallthru
    _
  // Predicated region
  $region26: #{_lambda_.26} parent=0 // pred_check
    _
  $region27: #{_lambda_.26} parent=0 // pred_check_branch
    %159 = sbr.rel (0) target = $region29
  $region28: #{_lambda_.26} parent=0 // pred_region
    _
  $region29: #{_lambda_.26} parent=0 // pred_fallthru
    _

// kernel: _lambda_.27
$region0: #{_lambda_.27}
  #allocation0 [shape = 'u32[]', space=smem, size = 0x4, offset = 0x4, fixed_abs, tag = 'smem constant byte address 0x4 - core index']
  #allocation1 [shape = 'u32[72,128]{1,0:T(1,128)}', space=vmem, size = 0x9000, scoped, tag = 'internal scratch']
  #allocation2 [shape = 'f32[32,128]{1,0:T(8,128)}', space=vmem, size = 0x4000, scoped, tag = 'scratch operand']
  %s0 = inlined_call_operand.vmem [shape: bf16[32,1152], index: 0, kind: input, shape index: {}]
  %s1 = inlined_call_operand.vmem [shape: bf16[1152,128], index: 1, kind: input, shape index: {}]
  %s2 = inlined_call_operand.vmem [shape: f32[1,128], index: 2, kind: input, shape index: {}]
  %s3 = inlined_call_operand.vmem [shape: bf16[32,128], index: 3, kind: input, shape index: {}]
  %s4 = inlined_call_operand.vmem [shape: bf16[32,128], index: 4, kind: output, shape index: {}]
  %s5 = sld [smem:[#allocation0]]
  $region83: #{_lambda_.27} parent=0
    _
  %s7 = ssub.s32 1, %s5
  %s8 = scalar_select 0, %s7, %s5
  $region1: #{_lambda_.27} parent=0
    #allocation3 [shape = 'u8[49152]{0}', space=vmem, size = 0xc000, scoped, tag = 'input window, operand 0']
    loop: start=0, step=1, limit=5
    $region2: #{_lambda_.27} parent=1 // loop_pre_header
      _
    $region3: #{_lambda_.27} parent=1 // loop_header
      %s10 = sphi 0, %s14
      %p11 = scmp.ge.s32.totalorder %s10, 5
      %s17 = sphi 0, %s36
      %s18 = sphi 0, %s32
      %s19 = sphi 0, %s28
      %s20 = sphi 0, %s17
      %s21 = sphi 0, %s18
      %s22 = sphi 0, %s19
      %s23 = sphi 0, %s20
      %s24 = sphi 0, %s21
      %s25 = sphi 0, %s22
      %s41 = sphi 0, %s43
      %s44 = sphi 0, %s41
      %s45 = sphi 0, %s44
      %s61 = sphi 0, %s45
      %s69 = sphi 0, %s71
      %s72 = sphi 0, %s69
      %s73 = sphi 0, %s72
      %s89 = sphi 0, %s73
      %s95 = sphi 0, %s97
      %s98 = sphi 0, %s95
      %s99 = sphi 0, %s98
      %s115 = sphi 0, %s99
      %s123 = sphi 0, %s125
      %s126 = sphi 0, %s123
      %s127 = sphi 0, %s126
      %s143 = sphi 0, %s127
      %s151 = sphi 0, %s153
      %s154 = sphi 0, %s151
      %s155 = sphi 0, %s154
      %s171 = sphi 0, %s155
    $region4: #{_lambda_.27} parent=1 // loop_header_branch
      %13 = sbr.rel (%p11) target = $region8
    $region5: #{_lambda_.27} parent=1 // loop_body
      %s15 = ssub.s32 %s10, 1
      %s16 = ssub.s32 %s10, 2
      %s26 = sadd.s32 1, %s19
      %p27 = scmp.ge.s32.totalorder %s26, 3
      %s28 = scalar_select %p27, 0, %s26
      %s29 = sadd.s32 1, %s18
      %s30 = scalar_select %p27, %s29, %s18
      %p31 = scmp.ge.s32.totalorder %s30, 1
      %s32 = scalar_select %p31, 0, %s30
      %s33 = sadd.s32 1, %s17
      %s34 = scalar_select %p31, %s33, %s17
      %p35 = scmp.ge.s32.totalorder %s34, 1
      %s36 = scalar_select %p35, 0, %s34
      %s37 = ssub.s32 %s17, %s36
      %s38 = ssub.s32 %s19, %s28
      %s39 = sor.u32 %s37, %s38
      %p40 = scmp.eq.s32.totalorder %s39, 0
      %s42 = sadd.s32 %s41, 1
      %s43 = scalar_select %p40, %s41, %s42
      %p46 = pneg %p40
      %p47 = scmp.eq.s32.totalorder %s10, 2
      %p48 = por %p46, %p47
      %p49 = scmp.ne.s32.totalorder %s41, %s44
      %p50 = scmp.eq.s32.totalorder %s10, 0
      %p51 = por %p49, %p50
      %p52 = scmp.ne.s32.totalorder %s41, %s44
      %p53 = scmp.eq.s32.totalorder %s15, 2
      %p54 = por %p52, %p53
      %p55 = scmp.ne.s32.totalorder %s44, %s45
      %p56 = scmp.eq.s32.totalorder %s15, 0
      %p57 = por %p55, %p56
      %p58 = scmp.ne.s32.totalorder %s44, %s45
      %p59 = scmp.eq.s32.totalorder %s16, 2
      %p60 = por %p58, %p59
      %p62 = scmp.ne.s32.totalorder %s45, %s61
      %p63 = scmp.eq.s32.totalorder %s16, 0
      %p64 = por %p62, %p63
      %s65 = ssub.s32 %s19, %s28
      %s66 = ssub.s32 %s18, %s32
      %s67 = sor.u32 %s65, %s66
      %p68 = scmp.eq.s32.totalorder %s67, 0
      %s70 = sadd.s32 %s69, 1
      %s71 = scalar_select %p68, %s69, %s70
      %p74 = pneg %p68
      %p75 = scmp.eq.s32.totalorder %s10, 2
      %p76 = por %p74, %p75
      %p77 = scmp.ne.s32.totalorder %s69, %s72
      %p78 = scmp.eq.s32.totalorder %s10, 0
      %p79 = por %p77, %p78
      %p80 = scmp.ne.s32.totalorder %s69, %s72
      %p81 = scmp.eq.s32.totalorder %s15, 2
      %p82 = por %p80, %p81
      %p83 = scmp.ne.s32.totalorder %s72, %s73
      %p84 = scmp.eq.s32.totalorder %s15, 0
      %p85 = por %p83, %p84
      %p86 = scmp.ne.s32.totalorder %s72, %s73
      %p87 = scmp.eq.s32.totalorder %s16, 2
      %p88 = por %p86, %p87
      %p90 = scmp.ne.s32.totalorder %s73, %s89
      %p91 = scmp.eq.s32.totalorder %s16, 0
      %p92 = por %p90, %p91
      %s93 = ssub.s32 %s18, %s32
      %p94 = scmp.eq.s32.totalorder %s93, 0
      %s96 = sadd.s32 %s95, 1
      %s97 = scalar_select %p94, %s95, %s96
      %p100 = pneg %p94
      %p101 = scmp.eq.s32.totalorder %s10, 2
      %p102 = por %p100, %p101
      %p103 = scmp.ne.s32.totalorder %s95, %s98
      %p104 = scmp.eq.s32.totalorder %s10, 0
      %p105 = por %p103, %p104
      %p106 = scmp.ne.s32.totalorder %s95, %s98
      %p107 = scmp.eq.s32.totalorder %s15, 2
      %p108 = por %p106, %p107
      %p109 = scmp.ne.s32.totalorder %s98, %s99
      %p110 = scmp.eq.s32.totalorder %s15, 0
      %p111 = por %p109, %p110
      %p112 = scmp.ne.s32.totalorder %s98, %s99
      %p113 = scmp.eq.s32.totalorder %s16, 2
      %p114 = por %p112, %p113
      %p116 = scmp.ne.s32.totalorder %s99, %s115
      %p117 = scmp.eq.s32.totalorder %s16, 0
      %p118 = por %p116, %p117
      %s119 = ssub.s32 %s17, %s36
      %s120 = ssub.s32 %s18, %s32
      %s121 = sor.u32 %s119, %s120
      %p122 = scmp.eq.s32.totalorder %s121, 0
      %s124 = sadd.s32 %s123, 1
      %s125 = scalar_select %p122, %s123, %s124
      %p128 = pneg %p122
      %p129 = scmp.eq.s32.totalorder %s10, 2
      %p130 = por %p128, %p129
      %p131 = scmp.ne.s32.totalorder %s123, %s126
      %p132 = scmp.eq.s32.totalorder %s10, 0
      %p133 = por %p131, %p132
      %p134 = scmp.ne.s32.totalorder %s123, %s126
      %p135 = scmp.eq.s32.totalorder %s15, 2
      %p136 = por %p134, %p135
      %p137 = scmp.ne.s32.totalorder %s126, %s127
      %p138 = scmp.eq.s32.totalorder %s15, 0
      %p139 = por %p137, %p138
      %p140 = scmp.ne.s32.totalorder %s126, %s127
      %p141 = scmp.eq.s32.totalorder %s16, 2
      %p142 = por %p140, %p141
      %p144 = scmp.ne.s32.totalorder %s127, %s143
      %p145 = scmp.eq.s32.totalorder %s16, 0
      %p146 = por %p144, %p145
      %s147 = ssub.s32 %s17, %s36
      %s148 = ssub.s32 %s18, %s32
      %s149 = sor.u32 %s147, %s148
      %p150 = scmp.eq.s32.totalorder %s149, 0
      %s152 = sadd.s32 %s151, 1
      %s153 = scalar_select %p150, %s151, %s152
      %p156 = pneg %p150
      %p157 = scmp.eq.s32.totalorder %s10, 2
      %p158 = por %p156, %p157
      %p159 = scmp.ne.s32.totalorder %s151, %s154
      %p160 = scmp.eq.s32.totalorder %s10, 0
      %p161 = por %p159, %p160
      %p162 = scmp.ne.s32.totalorder %s151, %s154
      %p163 = scmp.eq.s32.totalorder %s15, 2
      %p164 = por %p162, %p163
      %p165 = scmp.ne.s32.totalorder %s154, %s155
      %p166 = scmp.eq.s32.totalorder %s15, 0
      %p167 = por %p165, %p166
      %p168 = scmp.ne.s32.totalorder %s154, %s155
      %p169 = scmp.eq.s32.totalorder %s16, 2
      %p170 = por %p168, %p169
      %p172 = scmp.ne.s32.totalorder %s155, %s171
      %p173 = scmp.eq.s32.totalorder %s16, 0
      %p174 = por %p172, %p173
      %p175 = scmp.le.s32.totalorder 1, %s10
      %p176 = scmp.lt.s32.totalorder %s10, 4
      %p177 = pnand %p175, %p176
      %p178 = pneg %p177
      // Predicated region
      $region9: #{_lambda_.27} parent=5 // pred_check
        _
      $region10: #{_lambda_.27} parent=5 // pred_check_branch
        %180 = sbr.rel (%p177) target = $region12
      $region11: #{_lambda_.27} parent=5 // pred_region
        %s181 = ssub.s32 %s10, 1
        // Predicated region
        $region13: #{_lambda_.27} parent=11 // pred_check
          %p182 = pneg %p111
        $region14: #{_lambda_.27} parent=11 // pred_check_branch
          %184 = sbr.rel (%p182) target = $region16
        $region15: #{_lambda_.27} parent=11 // pred_region
          %p185 = scmp.lt.s32.totalorder %s21, 0
          %s186 = scalar_select %p185, %s21, 0
          %s187 = scalar_lea.vmem %s2, %s186
        $region16: #{_lambda_.27} parent=11 // pred_fallthru
          _
        // Predicated region
        $region17: #{_lambda_.27} parent=11 // pred_check
          %p188 = pneg %p139
        $region18: #{_lambda_.27} parent=11 // pred_check_branch
          %190 = sbr.rel (%p188) target = $region20
        $region19: #{_lambda_.27} parent=11 // pred_region
          %s191 = smul.u32 4, %s20
          %p192 = scmp.lt.s32.totalorder %s191, 3
          %s193 = scalar_select %p192, %s191, 3
          %p194 = scmp.lt.s32.totalorder %s21, 0
          %s195 = scalar_select %p194, %s21, 0
          %s196 = sadd.s32 %s195, %s193
          %s197 = smul.addr %s196, 4
          %s198 = scalar_lea.vmem %s3, %s197
          %s199 = smul.u32 4, %s20
        $region20: #{_lambda_.27} parent=11 // pred_fallthru
          _
      $region12: #{_lambda_.27} parent=5 // pred_fallthru
        _
      %p200 = scmp.lt.s32.totalorder %s10, 3
      // Predicated region
      $region21: #{_lambda_.27} parent=5 // pred_check
        %p201 = pneg %p200
      $region22: #{_lambda_.27} parent=5 // pred_check_branch
        %203 = sbr.rel (%p201) target = $region24
      $region23: #{_lambda_.27} parent=5 // pred_region
        // Predicated region
        $region25: #{_lambda_.27} parent=23 // pred_check
          %p204 = pneg %p51
        $region26: #{_lambda_.27} parent=23 // pred_check_branch
          %206 = sbr.rel (%p204) target = $region28
        $region27: #{_lambda_.27} parent=23 // pred_region
          %s207 = sand.u32 %s41, 1
          %s208 = sand.u32 %s41, 1
          %s209 = smul.addr %s208, 48
          %s210 = scalar_lea.vmem [#allocation3], %s209
          %s211 = smul.u32 4, %s17
          %s212 = smul.u32 3, %s19
          %s213 = smul.addr %s211, 9
          %s214 = sadd.s32 %s212, %s213
          %s215 = smul.addr %s214, 4
          %s216 = scalar_lea.vmem %s0, %s215
          // Predicated region
          $region29: #{_lambda_.27} parent=27 // pred_check
            _
          $region30: #{_lambda_.27} parent=27 // pred_check_branch
            %218 = sbr.rel (0) target = $region32
          $region31: #{_lambda_.27} parent=27 // pred_region
            // Predicated region
            $region33: #{_lambda_.27} parent=31 // pred_check
              _
            $region34: #{_lambda_.27} parent=31 // pred_check_branch
              %220 = sbr.rel (0) target = $region36
            $region35: #{_lambda_.27} parent=31 // pred_region
              %s221 = scalar_lea.vmem %s216, 8
              %s222 = scalar_lea.vmem %s210, 8 [#allocation3]
              loop: start=0, step=1, limit=1
              $region37: #{_lambda_.27} parent=35 // loop_pre_header
                _
              $region38: #{_lambda_.27} parent=35 // loop_header
                %s224 = sphi 0, %s228
                %p225 = scmp.ge.s32.totalorder %s224, 1
                %s229 = sphi %s216, %s216
                %s230 = sphi %s210, %s210
              $region39: #{_lambda_.27} parent=35 // loop_header_branch
                %227 = sbr.rel (%p225) target = $region43
              $region40: #{_lambda_.27} parent=35 // loop_body
                %v231 = vld [vmem:[%s229] sm:$0xff]
                %232 = vst [vmem:[%s230] sm:$0xff] %v231
                %v233 = vld [vmem:[%s229 + $0x24] sm:$0xff]
                %234 = vst [vmem:[%s230 + $0xc] sm:$0xff] %v233
                %v235 = vld [vmem:[%s229 + $0x48] sm:$0xff]
                %236 = vst [vmem:[%s230 + $0x18] sm:$0xff] %v235
                %v237 = vld [vmem:[%s229 + $0x6c] sm:$0xff]
                %238 = vst [vmem:[%s230 + $0x24] sm:$0xff] %v237
              $region41: #{_lambda_.27} parent=35 // loop_footer
                %s228 = sadd.s32 1, %s224
              $region42: #{_lambda_.27} parent=35 // loop_footer_branch
                %223 = sbr.rel target = $region38
              $region43: #{_lambda_.27} parent=35 // loop_exit
                _
              %s240 = ssub.s32 16, 1
              loop: start=0, step=1, limit=1
              $region44: #{_lambda_.27} parent=35 // loop_pre_header
                _
              $region45: #{_lambda_.27} parent=35 // loop_header
                %s242 = sphi 0, %s246
                %p243 = scmp.ge.s32.totalorder %s242, 1
                %s247 = sphi %s221, %s221
                %s248 = sphi %s222, %s222
              $region46: #{_lambda_.27} parent=35 // loop_header_branch
                %245 = sbr.rel (%p243) target = $region50
              $region47: #{_lambda_.27} parent=35 // loop_body
                %v249 = vld [vmem:[%s247] sm:%s240]
                %250 = vst [vmem:[%s248] sm:%s240] %v249
                %v251 = vld [vmem:[%s247 + $0x24] sm:%s240]
                %252 = vst [vmem:[%s248 + $0xc] sm:%s240] %v251
                %v253 = vld [vmem:[%s247 + $0x48] sm:%s240]
                %254 = vst [vmem:[%s248 + $0x18] sm:%s240] %v253
                %v255 = vld [vmem:[%s247 + $0x6c] sm:%s240]
                %256 = vst [vmem:[%s248 + $0x24] sm:%s240] %v255
              $region48: #{_lambda_.27} parent=35 // loop_footer
                %s246 = sadd.s32 1, %s242
              $region49: #{_lambda_.27} parent=35 // loop_footer_branch
                %241 = sbr.rel target = $region45
              $region50: #{_lambda_.27} parent=35 // loop_exit
                _
            $region36: #{_lambda_.27} parent=31 // pred_fallthru
              _
          $region32: #{_lambda_.27} parent=27 // pred_fallthru
            _
          %257 = vnop
        $region28: #{_lambda_.27} parent=23 // pred_fallthru
          _
        // Predicated region
        $region51: #{_lambda_.27} parent=23 // pred_check
          %p258 = pneg %p79
        $region52: #{_lambda_.27} parent=23 // pred_check_branch
          %260 = sbr.rel (%p258) target = $region54
        $region53: #{_lambda_.27} parent=23 // pred_region
          %s261 = smul.u32 48, %s19
          %p262 = scmp.lt.s32.totalorder %s261, 143
          %s263 = scalar_select %p262, %s261, 143
          %p264 = scmp.lt.s32.totalorder %s18, 0
          %s265 = scalar_select %p264, %s18, 0
          %s266 = sadd.s32 %s265, %s263
          %s267 = smul.addr %s266, 4
          %s268 = scalar_lea.vmem %s1, %s267
          %s269 = smul.u32 48, %s19
        $region54: #{_lambda_.27} parent=23 // pred_fallthru
          _
      $region24: #{_lambda_.27} parent=5 // pred_fallthru
        _
      %p270 = scmp.le.s32.totalorder 1, %s10
      %p271 = scmp.lt.s32.totalorder %s10, 4
      %p272 = pnand %p270, %p271
      %p273 = pneg %p272
      // Predicated region
      $region55: #{_lambda_.27} parent=5 // pred_check
        _
      $region56: #{_lambda_.27} parent=5 // pred_check_branch
        %275 = sbr.rel (%p272) target = $region58
      $region57: #{_lambda_.27} parent=5 // pred_region
        %s276 = ssub.s32 %s10, 1
        %s277 = sand.u32 %s44, 1
        %s278 = sand.u32 %s44, 1
        %s279 = smul.addr %s278, 48
        %s280 = scalar_lea.vmem [#allocation3], %s279
        // Predicated region
        $region59: #{_lambda_.27} parent=57 // pred_check
          %p281 = pneg %p57
        $region60: #{_lambda_.27} parent=57 // pred_check_branch
          %283 = sbr.rel (%p281) target = $region62
        $region61: #{_lambda_.27} parent=57 // pred_region
          _
        $region62: #{_lambda_.27} parent=57 // pred_fallthru
          _
        %s284 = sand.u32 %s44, 1
        %s285 = sand.u32 %s44, 1
        %s286 = smul.addr %s285, 48
        %s287 = scalar_lea.vmem [#allocation3], %s286
        %p288 = pneg %p57
        %p289 = pneg %p54
        %s290 = smul.u32 48, %s22
        %p291 = scmp.lt.s32.totalorder %s290, 143
        %s292 = scalar_select %p291, %s290, 143
        %p293 = scmp.lt.s32.totalorder %s21, 0
        %s294 = scalar_select %p293, %s21, 0
        %s295 = sadd.s32 %s294, %s292
        %s296 = smul.addr %s295, 4
        %s297 = scalar_lea.vmem %s1, %s296
        %p298 = pneg %p85
        %p299 = pneg %p82
        %p300 = scmp.lt.s32.totalorder %s21, 0
        %s301 = scalar_select %p300, %s21, 0
        %s302 = scalar_lea.vmem %s2, %s301
        %p303 = pneg %p111
        %p304 = pneg %p108
        %s305 = smul.u32 4, %s20
        %p306 = scmp.lt.s32.totalorder %s305, 3
        %s307 = scalar_select %p306, %s305, 3
        %p308 = scmp.lt.s32.totalorder %s21, 0
        %s309 = scalar_select %p308, %s21, 0
        %s310 = sadd.s32 %s309, %s307
        %s311 = smul.addr %s310, 4
        %s312 = scalar_lea.vmem %s3, %s311
        %p313 = pneg %p139
        %p314 = pneg %p136
        %p315 = pneg %p167
        %p316 = pneg %p164
        %s317 = smul.u32 4, %s20
        %p318 = scmp.lt.s32.totalorder %s317, 3
        %s319 = scalar_select %p318, %s317, 3
        %p320 = scmp.lt.s32.totalorder %s21, 0
        %s321 = scalar_select %p320, %s21, 0
        %s322 = sadd.s32 %s321, %s319
        %s323 = smul.addr %s322, 4
        %s324 = scalar_lea.vmem %s4, %s323
        %s325 = smul.u32 4, %s20
        %s326 = smul.u32 3, %s22
        %s327 = smul.u32 48, %s22
        %p328 = scmp.lt.s32.totalorder %s327, 143
        %s329 = scalar_select %p328, %s327, 143
        %p330 = scmp.lt.s32.totalorder %s21, 0
        %s331 = scalar_select %p330, %s21, 0
        %s332 = sadd.s32 %s331, %s329
        %s333 = smul.addr %s332, 4
        %s334 = scalar_lea.vmem %s1, %s333
        %s335 = smul.u32 48, %s22
        %p336 = scmp.lt.s32.totalorder %s21, 0
        %s337 = scalar_select %p336, %s21, 0
        %s338 = scalar_lea.vmem %s2, %s337
        %s339 = smul.u32 4, %s20
        %p340 = scmp.lt.s32.totalorder %s339, 3
        %s341 = scalar_select %p340, %s339, 3
        %p342 = scmp.lt.s32.totalorder %s21, 0
        %s343 = scalar_select %p342, %s21, 0
        %s344 = sadd.s32 %s343, %s341
        %s345 = smul.addr %s344, 4
        %s346 = scalar_lea.vmem %s3, %s345
        %s347 = smul.u32 4, %s20
        %s348 = smul.u32 4, %s20
        %p349 = scmp.lt.s32.totalorder %s348, 3
        %s350 = scalar_select %p349, %s348, 3
        %p351 = scmp.lt.s32.totalorder %s21, 0
        %s352 = scalar_select %p351, %s21, 0
        %s353 = sadd.s32 %s352, %s350
        %s354 = smul.addr %s353, 4
        %s355 = scalar_lea.vmem %s4, %s354
        %s356 = smul.u32 4, %s20
        %p357 = scmp.eq.s32.totalorder %s22, 0
        // Predicated region
        $region63: #{_lambda_.27} parent=57 // pred_check
          %p358 = pneg %p357
        $region64: #{_lambda_.27} parent=57 // pred_check_branch
          %360 = sbr.rel (%p358) target = $region66
        $region65: #{_lambda_.27} parent=57 // pred_region
          %361 = vst [vmem:[#allocation2] sm:$0xff] 0.0
          %362 = vst [vmem:[#allocation2 + $0x8] sm:$0xff] 0.0
          %363 = vst [vmem:[#allocation2 + $0x10] sm:$0xff] 0.0
          %364 = vst [vmem:[#allocation2 + $0x18] sm:$0xff] 0.0
        $region66: #{_lambda_.27} parent=57 // pred_fallthru
          _
        %v365 = vld [vmem:[#allocation2] sm:$0xff]
        %v366 = vld [vmem:[#allocation2 + $0x8] sm:$0xff]
        %v367 = vld [vmem:[#allocation2 + $0x10] sm:$0xff]
        %v368 = vld [vmem:[#allocation2 + $0x18] sm:$0xff]
        %v369 = vld [vmem:[%s280] sm:$0xff]
        %v370 = vld [vmem:[%s280 + $0x8] sm:$0xf]
        %v371 = vld [vmem:[%s280 + $0xc] sm:$0xff]
        %v372 = vld [vmem:[%s280 + $0x14] sm:$0xf]
        %v373 = vld [vmem:[%s280 + $0x18] sm:$0xff]
        %v374 = vld [vmem:[%s280 + $0x20] sm:$0xf]
        %v375 = vld [vmem:[%s280 + $0x24] sm:$0xff]
        %v376 = vld [vmem:[%s280 + $0x2c] sm:$0xf]
        %v377 = vld [vmem:[%s334] sm:$0xf]
        %v378 = vld [vmem:[%s334 + $0x4] sm:$0xf]
        %v379 = vld [vmem:[%s334 + $0x8] sm:$0xf]
        %v380 = vld [vmem:[%s334 + $0xc] sm:$0xf]
        %v381 = vld [vmem:[%s334 + $0x10] sm:$0xf]
        %v382 = vld [vmem:[%s334 + $0x14] sm:$0xf]
        %v383 = vld [vmem:[%s334 + $0x18] sm:$0xf]
        %v384 = vld [vmem:[%s334 + $0x1c] sm:$0xf]
        %v385 = vld [vmem:[%s334 + $0x20] sm:$0xf]
        %v386 = vld [vmem:[%s334 + $0x24] sm:$0xf]
        %v387 = vld [vmem:[%s334 + $0x28] sm:$0xf]
        %v388 = vld [vmem:[%s334 + $0x2c] sm:$0xf]
        %v389 = vld [vmem:[%s334 + $0x30] sm:$0xf]
        %v390 = vld [vmem:[%s334 + $0x34] sm:$0xf]
        %v391 = vld [vmem:[%s334 + $0x38] sm:$0xf]
        %v392 = vld [vmem:[%s334 + $0x3c] sm:$0xf]
        %v393 = vld [vmem:[%s334 + $0x40] sm:$0xf]
        %v394 = vld [vmem:[%s334 + $0x44] sm:$0xf]
        %v395 = vld [vmem:[%s334 + $0x48] sm:$0xf]
        %v396 = vld [vmem:[%s334 + $0x4c] sm:$0xf]
        %v397 = vld [vmem:[%s334 + $0x50] sm:$0xf]
        %v398 = vld [vmem:[%s334 + $0x54] sm:$0xf]
        %v399 = vld [vmem:[%s334 + $0x58] sm:$0xf]
        %v400 = vld [vmem:[%s334 + $0x5c] sm:$0xf]
        %v401 = vld [vmem:[%s334 + $0x60] sm:$0xf]
        %v402 = vld [vmem:[%s334 + $0x64] sm:$0xf]
        %v403 = vld [vmem:[%s334 + $0x68] sm:$0xf]
        %v404 = vld [vmem:[%s334 + $0x6c] sm:$0xf]
        %v405 = vld [vmem:[%s334 + $0x70] sm:$0xf]
        %v406 = vld [vmem:[%s334 + $0x74] sm:$0xf]
        %v407 = vld [vmem:[%s334 + $0x78] sm:$0xf]
        %v408 = vld [vmem:[%s334 + $0x7c] sm:$0xf]
        %v409 = vld [vmem:[%s334 + $0x80] sm:$0xf]
        %v410 = vld [vmem:[%s334 + $0x84] sm:$0xf]
        %v411 = vld [vmem:[%s334 + $0x88] sm:$0xf]
        %v412 = vld [vmem:[%s334 + $0x8c] sm:$0xf]
        %v413 = vld [vmem:[%s334 + $0x90] sm:$0xf]
        %v414 = vld [vmem:[%s334 + $0x94] sm:$0xf]
        %v415 = vld [vmem:[%s334 + $0x98] sm:$0xf]
        %v416 = vld [vmem:[%s334 + $0x9c] sm:$0xf]
        %v417 = vld [vmem:[%s334 + $0xa0] sm:$0xf]
        %v418 = vld [vmem:[%s334 + $0xa4] sm:$0xf]
        %v419 = vld [vmem:[%s334 + $0xa8] sm:$0xf]
        %v420 = vld [vmem:[%s334 + $0xac] sm:$0xf]
        %v421 = vld [vmem:[%s334 + $0xb0] sm:$0xf]
        %v422 = vld [vmem:[%s334 + $0xb4] sm:$0xf]
        %v423 = vld [vmem:[%s334 + $0xb8] sm:$0xf]
        %v424 = vld [vmem:[%s334 + $0xbc] sm:$0xf]
        %v433 = vunpack.c.l.b16 %v369
        %v434 = vunpack.c.h.b16 %v369
        %v435 = vunpack.c.l.b16 %v370
        %v436 = vunpack.c.l.b16 %v371
        %v437 = vunpack.c.h.b16 %v371
        %v438 = vunpack.c.l.b16 %v372
        %v439 = vunpack.c.l.b16 %v373
        %v440 = vunpack.c.h.b16 %v373
        %v441 = vunpack.c.l.b16 %v374
        %v442 = vunpack.c.l.b16 %v375
        %v443 = vunpack.c.h.b16 %v375
        %v444 = vunpack.c.l.b16 %v376
        %v445 = vpack.c.b16 %v436, %v433
        %v446 = vpack.c.b16 %v437, %v434
        %v447 = vpack.c.b16 %v438, %v435
        %v448 = vpack.c.b16 %v442, %v439
        %v449 = vpack.c.b16 %v443, %v440
        %v450 = vpack.c.b16 %v444, %v441
        %v505 = vunpack.c.l.b16 %v377
        %v506 = vunpack.c.l.b16 %v378
        %v507 = vunpack.c.l.b16 %v379
        %v508 = vunpack.c.l.b16 %v380
        %v509 = vunpack.c.l.b16 %v381
        %v510 = vunpack.c.l.b16 %v382
        %v511 = vunpack.c.l.b16 %v383
        %v512 = vunpack.c.l.b16 %v384
        %v513 = vunpack.c.l.b16 %v385
        %v514 = vunpack.c.l.b16 %v386
        %v515 = vunpack.c.l.b16 %v387
        %v516 = vunpack.c.l.b16 %v388
        %v517 = vunpack.c.l.b16 %v389
        %v518 = vunpack.c.l.b16 %v390
        %v519 = vunpack.c.l.b16 %v391
        %v520 = vunpack.c.l.b16 %v392
        %v521 = vunpack.c.l.b16 %v393
        %v522 = vunpack.c.l.b16 %v394
        %v523 = vunpack.c.l.b16 %v395
        %v524 = vunpack.c.l.b16 %v396
        %v525 = vunpack.c.l.b16 %v397
        %v526 = vunpack.c.l.b16 %v398
        %v527 = vunpack.c.l.b16 %v399
        %v528 = vunpack.c.l.b16 %v400
        %v529 = vunpack.c.l.b16 %v401
        %v530 = vunpack.c.l.b16 %v402
        %v531 = vunpack.c.l.b16 %v403
        %v532 = vunpack.c.l.b16 %v404
        %v533 = vunpack.c.l.b16 %v405
        %v534 = vunpack.c.l.b16 %v406
        %v535 = vunpack.c.l.b16 %v407
        %v536 = vunpack.c.l.b16 %v408
        %v537 = vunpack.c.l.b16 %v409
        %v538 = vunpack.c.l.b16 %v410
        %v539 = vunpack.c.l.b16 %v411
        %v540 = vunpack.c.l.b16 %v412
        %v541 = vunpack.c.l.b16 %v413
        %v542 = vunpack.c.l.b16 %v414
        %v543 = vunpack.c.l.b16 %v415
        %v544 = vunpack.c.l.b16 %v416
        %v545 = vunpack.c.l.b16 %v417
        %v546 = vunpack.c.l.b16 %v418
        %v547 = vunpack.c.l.b16 %v419
        %v548 = vunpack.c.l.b16 %v420
        %v549 = vunpack.c.l.b16 %v421
        %v550 = vunpack.c.l.b16 %v422
        %v551 = vunpack.c.l.b16 %v423
        %v552 = vunpack.c.l.b16 %v424
        %v553 = vpack.c.b16 %v506, %v505
        %v554 = vpack.c.b16 %v508, %v507
        %v555 = vpack.c.b16 %v510, %v509
        %v556 = vpack.c.b16 %v512, %v511
        %v557 = vpack.c.b16 %v514, %v513
        %v558 = vpack.c.b16 %v516, %v515
        %v559 = vpack.c.b16 %v518, %v517
        %v560 = vpack.c.b16 %v520, %v519
        %v561 = vpack.c.b16 %v522, %v521
        %v562 = vpack.c.b16 %v524, %v523
        %v563 = vpack.c.b16 %v526, %v525
        %v564 = vpack.c.b16 %v528, %v527
        %v565 = vpack.c.b16 %v530, %v529
        %v566 = vpack.c.b16 %v532, %v531
        %v567 = vpack.c.b16 %v534, %v533
        %v568 = vpack.c.b16 %v536, %v535
        %v569 = vpack.c.b16 %v538, %v537
        %v570 = vpack.c.b16 %v540, %v539
        %v571 = vpack.c.b16 %v542, %v541
        %v572 = vpack.c.b16 %v544, %v543
        %v573 = vpack.c.b16 %v546, %v545
        %v574 = vpack.c.b16 %v548, %v547
        %v575 = vpack.c.b16 %v550, %v549
        %v576 = vpack.c.b16 %v552, %v551
        %601 = vmatpush.bf16.msra.mxu0 %v560
        %602 = vmatpush.bf16.msra.mxu0 %v559
        %603 = vmatpush.bf16.msra.mxu0 %v558
        %604 = vmatpush.bf16.msra.mxu0 %v557
        %605 = vmatpush.bf16.msra.mxu0 %v556
        %606 = vmatpush.bf16.msra.mxu0 %v555
        %607 = vmatpush.bf16.msra.mxu0 %v554
        %608 = vmatpush.bf16.msra.mxu0 %v553
        %609 = vmatmul.bf16.gmra.mxu0 %v445
        %v610 = vpop.f32.mrf.mxu0
        %v611 = vadd.f32 0.0, %v610
        %v612 = vpop.f32.mrf.mxu0
        %v613 = vadd.f32 0.0, %v612
        %614 = vmatmul.bf16.gmra.mxu0 %v448
        %v615 = vpop.f32.mrf.mxu0
        %v616 = vadd.f32 0.0, %v615
        %v617 = vpop.f32.mrf.mxu0
        %v618 = vadd.f32 0.0, %v617
        %619 = vdwg.mxu0
        %620 = vmatpush.bf16.msra.mxu0 %v568
        %621 = vmatpush.bf16.msra.mxu0 %v567
        %622 = vmatpush.bf16.msra.mxu0 %v566
        %623 = vmatpush.bf16.msra.mxu0 %v565
        %624 = vmatpush.bf16.msra.mxu0 %v564
        %625 = vmatpush.bf16.msra.mxu0 %v563
        %626 = vmatpush.bf16.msra.mxu0 %v562
        %627 = vmatpush.bf16.msra.mxu0 %v561
        %628 = vmatmul.bf16.gmra.mxu0 %v446
        %v629 = vpop.f32.mrf.mxu0
        %v630 = vadd.f32 %v611, %v629
        %v631 = vpop.f32.mrf.mxu0
        %v632 = vadd.f32 %v613, %v631
        %633 = vmatmul.bf16.gmra.mxu0 %v449
        %v634 = vpop.f32.mrf.mxu0
        %v635 = vadd.f32 %v616, %v634
        %v636 = vpop.f32.mrf.mxu0
        %v637 = vadd.f32 %v618, %v636
        %638 = vdwg.mxu0
        %639 = vmatpush.bf16.msra.mxu0 %v576
        %640 = vmatpush.bf16.msra.mxu0 %v575
        %641 = vmatpush.bf16.msra.mxu0 %v574
        %642 = vmatpush.bf16.msra.mxu0 %v573
        %643 = vmatpush.bf16.msra.mxu0 %v572
        %644 = vmatpush.bf16.msra.mxu0 %v571
        %645 = vmatpush.bf16.msra.mxu0 %v570
        %646 = vmatpush.bf16.msra.mxu0 %v569
        %647 = vmatmul.bf16.gmra.mxu0 %v447
        %v648 = vpop.f32.mrf.mxu0
        %v649 = vadd.f32 %v630, %v648
        %v650 = vpop.f32.mrf.mxu0
        %v651 = vadd.f32 %v632, %v650
        %652 = vmatmul.bf16.gmra.mxu0 %v450
        %v653 = vpop.f32.mrf.mxu0
        %v654 = vadd.f32 %v635, %v653
        %v655 = vpop.f32.mrf.mxu0
        %v656 = vadd.f32 %v637, %v655
        %657 = vdwg.mxu0
        %v658 = vadd.f32 %v365, %v649
        %v659 = vadd.f32 %v366, %v651
        %v660 = vadd.f32 %v367, %v654
        %v661 = vadd.f32 %v368, %v656
        %662 = vst [vmem:[#allocation2] sm:$0xff] %v658
        %663 = vst [vmem:[#allocation2 + $0x8] sm:$0xff] %v659
        %664 = vst [vmem:[#allocation2 + $0x10] sm:$0xff] %v660
        %665 = vst [vmem:[#allocation2 + $0x18] sm:$0xff] %v661
        %p666 = scmp.eq.s32.totalorder %s22, 2
        // Predicated region
        $region67: #{_lambda_.27} parent=57 // pred_check
          %p667 = pneg %p666
        $region68: #{_lambda_.27} parent=57 // pred_check_branch
          %669 = sbr.rel (%p667) target = $region70
        $region69: #{_lambda_.27} parent=57 // pred_region
          %v670 = vld [vmem:[#allocation2] sm:$0xff]
          %v671 = vld [vmem:[#allocation2 + $0x8] sm:$0xff]
          %v672 = vld [vmem:[#allocation2 + $0x10] sm:$0xff]
          %v673 = vld [vmem:[#allocation2 + $0x18] sm:$0xff]
          %v674 = vld [vmem:[%s338] sm:$0x1]
          %v676 = vperm.slane %v674, 0
          %v678 = vadd.f32 %v670, %v676
          %v679 = vadd.f32 %v671, %v676
          %v680 = vadd.f32 %v672, %v676
          %v681 = vadd.f32 %v673, %v676
          %v682 = vld [vmem:[%s346] sm:$0xf]
          %v683 = vld [vmem:[%s346 + $0x4] sm:$0xf]
          %v684 = vld [vmem:[%s346 + $0x8] sm:$0xf]
          %v685 = vld [vmem:[%s346 + $0xc] sm:$0xf]
          %v686 = vunpack.c.l.bf16 %v682
          %v687 = vunpack.c.l.bf16 %v683
          %v688 = vunpack.c.l.bf16 %v684
          %v689 = vunpack.c.l.bf16 %v685
          %v690 = vadd.f32 %v678, %v686
          %v691 = vadd.f32 %v679, %v687
          %v692 = vadd.f32 %v680, %v688
          %v693 = vadd.f32 %v681, %v689
          %v694 = vmax.f32 %v690, 0.0
          %v695 = vmax.f32 %v691, 0.0
          %v696 = vmax.f32 %v692, 0.0
          %v697 = vmax.f32 %v693, 0.0
          %v698 = vpack.c.bf16 %v694, %v694
          %v699 = vpack.c.bf16 %v695, %v695
          %v700 = vpack.c.bf16 %v696, %v696
          %v701 = vpack.c.bf16 %v697, %v697
          %702 = vst [vmem:[%s355] sm:$0xf] %v698
          %703 = vst [vmem:[%s355 + $0x4] sm:$0xf] %v699
          %704 = vst [vmem:[%s355 + $0x8] sm:$0xf] %v700
          %705 = vst [vmem:[%s355 + $0xc] sm:$0xf] %v701
        $region70: #{_lambda_.27} parent=57 // pred_fallthru
          _
        %s706 = smul.u32 4, %s20
        %p707 = scmp.lt.s32.totalorder %s706, 3
        %s708 = scalar_select %p707, %s706, 3
        %p709 = scmp.lt.s32.totalorder %s21, 0
        %s710 = scalar_select %p709, %s21, 0
        %s711 = sadd.s32 %s710, %s708
        %s712 = smul.addr %s711, 4
        %s713 = scalar_lea.vmem %s4, %s712
        // Predicated region
        $region71: #{_lambda_.27} parent=57 // pred_check
          %p714 = pneg %p164
        $region72: #{_lambda_.27} parent=57 // pred_check_branch
          %716 = sbr.rel (%p714) target = $region74
        $region73: #{_lambda_.27} parent=57 // pred_region
          %s717 = smul.u32 4, %s20
        $region74: #{_lambda_.27} parent=57 // pred_fallthru
          _
        // Predicated region
        $region75: #{_lambda_.27} parent=57 // pred_check
          %p718 = pneg %p164
        $region76: #{_lambda_.27} parent=57 // pred_check_branch
          %720 = sbr.rel (%p718) target = $region78
        $region77: #{_lambda_.27} parent=57 // pred_region
          %s721 = smul.u32 4, %s20
          %p722 = scmp.lt.s32.totalorder %s721, 3
          %s723 = scalar_select %p722, %s721, 3
          %p724 = scmp.lt.s32.totalorder %s21, 0
          %s725 = scalar_select %p724, %s21, 0
          %s726 = sadd.s32 %s725, %s723
          %s727 = smul.addr %s726, 4
          %s728 = scalar_lea.vmem %s4, %s727
        $region78: #{_lambda_.27} parent=57 // pred_fallthru
          _
      $region58: #{_lambda_.27} parent=5 // pred_fallthru
        _
      %p729 = scmp.le.s32.totalorder 2, %s10
      // Predicated region
      $region79: #{_lambda_.27} parent=5 // pred_check
        %p730 = pneg %p729
      $region80: #{_lambda_.27} parent=5 // pred_check_branch
        %732 = sbr.rel (%p730) target = $region82
      $region81: #{_lambda_.27} parent=5 // pred_region
        %s733 = ssub.s32 %s10, 2
      $region82: #{_lambda_.27} parent=5 // pred_fallthru
        _
    $region6: #{_lambda_.27} parent=1 // loop_footer
      %s14 = sadd.s32 1, %s10
    $region7: #{_lambda_.27} parent=1 // loop_footer_branch
      %9 = sbr.rel target = $region3
    $region8: #{_lambda_.27} parent=1 // loop_exit
      _

// kernel: _lambda_.30
$region0: #{_lambda_.30}
  #allocation0 [shape = 'u32[]', space=smem, size = 0x4, offset = 0x4, fixed_abs, tag = 'smem constant byte address 0x4 - core index']
  #allocation1 [shape = 'u32[72,128]{1,0:T(1,128)}', space=vmem, size = 0x9000, scoped, tag = 'internal scratch']
  #allocation2 [shape = 'f32[8,128]{1,0:T(8,128)}', space=vmem, size = 0x1000, scoped, tag = 'scratch operand']
  %s0 = inlined_call_operand.vmem [shape: bf16[8,1152], index: 0, kind: input, shape index: {}]
  %s1 = inlined_call_operand.vmem [shape: bf16[1152,128], index: 1, kind: input, shape index: {}]
  %s2 = inlined_call_operand.vmem [shape: f32[1,128], index: 2, kind: input, shape index: {}]
  %s3 = inlined_call_operand.vmem [shape: bf16[8,128], index: 3, kind: output, shape index: {}]
  %s4 = sld [smem:[#allocation0]]
  $region53: #{_lambda_.30} parent=0
    _
  %s6 = ssub.s32 1, %s4
  %s7 = scalar_select 0, %s6, %s4
  loop: start=0, step=1, limit=5
  $region2: #{_lambda_.30} parent=0 // loop_pre_header
    _
  $region3: #{_lambda_.30} parent=0 // loop_header
    %s9 = sphi 0, %s13
    %p10 = scmp.ge.s32.totalorder %s9, 5
    %s16 = sphi 0, %s35
    %s17 = sphi 0, %s31
    %s18 = sphi 0, %s27
    %s19 = sphi 0, %s16
    %s20 = sphi 0, %s17
    %s21 = sphi 0, %s18
    %s22 = sphi 0, %s19
    %s23 = sphi 0, %s20
    %s24 = sphi 0, %s21
    %s40 = sphi 0, %s42
    %s43 = sphi 0, %s40
    %s44 = sphi 0, %s43
    %s60 = sphi 0, %s44
    %s68 = sphi 0, %s70
    %s71 = sphi 0, %s68
    %s72 = sphi 0, %s71
    %s88 = sphi 0, %s72
    %s94 = sphi 0, %s96
    %s97 = sphi 0, %s94
    %s98 = sphi 0, %s97
    %s114 = sphi 0, %s98
    %s122 = sphi 0, %s124
    %s125 = sphi 0, %s122
    %s126 = sphi 0, %s125
    %s142 = sphi 0, %s126
  $region4: #{_lambda_.30} parent=0 // loop_header_branch
    %12 = sbr.rel (%p10) target = $region8
  $region5: #{_lambda_.30} parent=0 // loop_body
    %s14 = ssub.s32 %s9, 1
    %s15 = ssub.s32 %s9, 2
    %s25 = sadd.s32 1, %s18
    %p26 = scmp.ge.s32.totalorder %s25, 3
    %s27 = scalar_select %p26, 0, %s25
    %s28 = sadd.s32 1, %s17
    %s29 = scalar_select %p26, %s28, %s17
    %p30 = scmp.ge.s32.totalorder %s29, 1
    %s31 = scalar_select %p30, 0, %s29
    %s32 = sadd.s32 1, %s16
    %s33 = scalar_select %p30, %s32, %s16
    %p34 = scmp.ge.s32.totalorder %s33, 1
    %s35 = scalar_select %p34, 0, %s33
    %s36 = ssub.s32 %s16, %s35
    %s37 = ssub.s32 %s18, %s27
    %s38 = sor.u32 %s36, %s37
    %p39 = scmp.eq.s32.totalorder %s38, 0
    %s41 = sadd.s32 %s40, 1
    %s42 = scalar_select %p39, %s40, %s41
    %p45 = pneg %p39
    %p46 = scmp.eq.s32.totalorder %s9, 2
    %p47 = por %p45, %p46
    %p48 = scmp.ne.s32.totalorder %s40, %s43
    %p49 = scmp.eq.s32.totalorder %s9, 0
    %p50 = por %p48, %p49
    %p51 = scmp.ne.s32.totalorder %s40, %s43
    %p52 = scmp.eq.s32.totalorder %s14, 2
    %p53 = por %p51, %p52
    %p54 = scmp.ne.s32.totalorder %s43, %s44
    %p55 = scmp.eq.s32.totalorder %s14, 0
    %p56 = por %p54, %p55
    %p57 = scmp.ne.s32.totalorder %s43, %s44
    %p58 = scmp.eq.s32.totalorder %s15, 2
    %p59 = por %p57, %p58
    %p61 = scmp.ne.s32.totalorder %s44, %s60
    %p62 = scmp.eq.s32.totalorder %s15, 0
    %p63 = por %p61, %p62
    %s64 = ssub.s32 %s18, %s27
    %s65 = ssub.s32 %s17, %s31
    %s66 = sor.u32 %s64, %s65
    %p67 = scmp.eq.s32.totalorder %s66, 0
    %s69 = sadd.s32 %s68, 1
    %s70 = scalar_select %p67, %s68, %s69
    %p73 = pneg %p67
    %p74 = scmp.eq.s32.totalorder %s9, 2
    %p75 = por %p73, %p74
    %p76 = scmp.ne.s32.totalorder %s68, %s71
    %p77 = scmp.eq.s32.totalorder %s9, 0
    %p78 = por %p76, %p77
    %p79 = scmp.ne.s32.totalorder %s68, %s71
    %p80 = scmp.eq.s32.totalorder %s14, 2
    %p81 = por %p79, %p80
    %p82 = scmp.ne.s32.totalorder %s71, %s72
    %p83 = scmp.eq.s32.totalorder %s14, 0
    %p84 = por %p82, %p83
    %p85 = scmp.ne.s32.totalorder %s71, %s72
    %p86 = scmp.eq.s32.totalorder %s15, 2
    %p87 = por %p85, %p86
    %p89 = scmp.ne.s32.totalorder %s72, %s88
    %p90 = scmp.eq.s32.totalorder %s15, 0
    %p91 = por %p89, %p90
    %s92 = ssub.s32 %s17, %s31
    %p93 = scmp.eq.s32.totalorder %s92, 0
    %s95 = sadd.s32 %s94, 1
    %s96 = scalar_select %p93, %s94, %s95
    %p99 = pneg %p93
    %p100 = scmp.eq.s32.totalorder %s9, 2
    %p101 = por %p99, %p100
    %p102 = scmp.ne.s32.totalorder %s94, %s97
    %p103 = scmp.eq.s32.totalorder %s9, 0
    %p104 = por %p102, %p103
    %p105 = scmp.ne.s32.totalorder %s94, %s97
    %p106 = scmp.eq.s32.totalorder %s14, 2
    %p107 = por %p105, %p106
    %p108 = scmp.ne.s32.totalorder %s97, %s98
    %p109 = scmp.eq.s32.totalorder %s14, 0
    %p110 = por %p108, %p109
    %p111 = scmp.ne.s32.totalorder %s97, %s98
    %p112 = scmp.eq.s32.totalorder %s15, 2
    %p113 = por %p111, %p112
    %p115 = scmp.ne.s32.totalorder %s98, %s114
    %p116 = scmp.eq.s32.totalorder %s15, 0
    %p117 = por %p115, %p116
    %s118 = ssub.s32 %s16, %s35
    %s119 = ssub.s32 %s17, %s31
    %s120 = sor.u32 %s118, %s119
    %p121 = scmp.eq.s32.totalorder %s120, 0
    %s123 = sadd.s32 %s122, 1
    %s124 = scalar_select %p121, %s122, %s123
    %p127 = pneg %p121
    %p128 = scmp.eq.s32.totalorder %s9, 2
    %p129 = por %p127, %p128
    %p130 = scmp.ne.s32.totalorder %s122, %s125
    %p131 = scmp.eq.s32.totalorder %s9, 0
    %p132 = por %p130, %p131
    %p133 = scmp.ne.s32.totalorder %s122, %s125
    %p134 = scmp.eq.s32.totalorder %s14, 2
    %p135 = por %p133, %p134
    %p136 = scmp.ne.s32.totalorder %s125, %s126
    %p137 = scmp.eq.s32.totalorder %s14, 0
    %p138 = por %p136, %p137
    %p139 = scmp.ne.s32.totalorder %s125, %s126
    %p140 = scmp.eq.s32.totalorder %s15, 2
    %p141 = por %p139, %p140
    %p143 = scmp.ne.s32.totalorder %s126, %s142
    %p144 = scmp.eq.s32.totalorder %s15, 0
    %p145 = por %p143, %p144
    %p146 = scmp.le.s32.totalorder 1, %s9
    %p147 = scmp.lt.s32.totalorder %s9, 4
    %p148 = pnand %p146, %p147
    %p149 = pneg %p148
    // Predicated region
    $region9: #{_lambda_.30} parent=5 // pred_check
      _
    $region10: #{_lambda_.30} parent=5 // pred_check_branch
      %151 = sbr.rel (%p148) target = $region12
    $region11: #{_lambda_.30} parent=5 // pred_region
      %s152 = ssub.s32 %s9, 1
      // Predicated region
      $region13: #{_lambda_.30} parent=11 // pred_check
        %p153 = pneg %p110
      $region14: #{_lambda_.30} parent=11 // pred_check_branch
        %155 = sbr.rel (%p153) target = $region16
      $region15: #{_lambda_.30} parent=11 // pred_region
        %p156 = scmp.lt.s32.totalorder %s20, 0
        %s157 = scalar_select %p156, %s20, 0
        %s158 = scalar_lea.vmem %s2, %s157
      $region16: #{_lambda_.30} parent=11 // pred_fallthru
        _
    $region12: #{_lambda_.30} parent=5 // pred_fallthru
      _
    %p159 = scmp.lt.s32.totalorder %s9, 3
    // Predicated region
    $region17: #{_lambda_.30} parent=5 // pred_check
      %p160 = pneg %p159
    $region18: #{_lambda_.30} parent=5 // pred_check_branch
      %162 = sbr.rel (%p160) target = $region20
    $region19: #{_lambda_.30} parent=5 // pred_region
      // Predicated region
      $region21: #{_lambda_.30} parent=19 // pred_check
        %p163 = pneg %p50
      $region22: #{_lambda_.30} parent=19 // pred_check_branch
        %165 = sbr.rel (%p163) target = $region24
      $region23: #{_lambda_.30} parent=19 // pred_region
        %s166 = smul.u32 3, %s18
        %p167 = scmp.lt.s32.totalorder %s16, 0
        %s168 = scalar_select %p167, %s16, 0
        %p169 = scmp.lt.s32.totalorder %s166, 8
        %s170 = scalar_select %p169, %s166, 8
        %s171 = smul.addr %s168, 9
        %s172 = sadd.s32 %s170, %s171
        %s173 = smul.addr %s172, 4
        %s174 = scalar_lea.vmem %s0, %s173
        %s175 = smul.u32 3, %s18
      $region24: #{_lambda_.30} parent=19 // pred_fallthru
        _
      // Predicated region
      $region25: #{_lambda_.30} parent=19 // pred_check
        %p176 = pneg %p78
      $region26: #{_lambda_.30} parent=19 // pred_check_branch
        %178 = sbr.rel (%p176) target = $region28
      $region27: #{_lambda_.30} parent=19 // pred_region
        %s179 = smul.u32 48, %s18
        %p180 = scmp.lt.s32.totalorder %s179, 143
        %s181 = scalar_select %p180, %s179, 143
        %p182 = scmp.lt.s32.totalorder %s17, 0
        %s183 = scalar_select %p182, %s17, 0
        %s184 = sadd.s32 %s183, %s181
        %s185 = smul.addr %s184, 4
        %s186 = scalar_lea.vmem %s1, %s185
        %s187 = smul.u32 48, %s18
      $region28: #{_lambda_.30} parent=19 // pred_fallthru
        _
    $region20: #{_lambda_.30} parent=5 // pred_fallthru
      _
    %p188 = scmp.le.s32.totalorder 1, %s9
    %p189 = scmp.lt.s32.totalorder %s9, 4
    %p190 = pnand %p188, %p189
    %p191 = pneg %p190
    // Predicated region
    $region29: #{_lambda_.30} parent=5 // pred_check
      _
    $region30: #{_lambda_.30} parent=5 // pred_check_branch
      %193 = sbr.rel (%p190) target = $region32
    $region31: #{_lambda_.30} parent=5 // pred_region
      %s194 = ssub.s32 %s9, 1
      %s195 = smul.u32 3, %s21
      %p196 = scmp.lt.s32.totalorder %s19, 0
      %s197 = scalar_select %p196, %s19, 0
      %p198 = scmp.lt.s32.totalorder %s195, 8
      %s199 = scalar_select %p198, %s195, 8
      %s200 = smul.addr %s197, 9
      %s201 = sadd.s32 %s199, %s200
      %s202 = smul.addr %s201, 4
      %s203 = scalar_lea.vmem %s0, %s202
      %p204 = pneg %p56
      %p205 = pneg %p53
      %s206 = smul.u32 48, %s21
      %p207 = scmp.lt.s32.totalorder %s206, 143
      %s208 = scalar_select %p207, %s206, 143
      %p209 = scmp.lt.s32.totalorder %s20, 0
      %s210 = scalar_select %p209, %s20, 0
      %s211 = sadd.s32 %s210, %s208
      %s212 = smul.addr %s211, 4
      %s213 = scalar_lea.vmem %s1, %s212
      %p214 = pneg %p84
      %p215 = pneg %p81
      %p216 = scmp.lt.s32.totalorder %s20, 0
      %s217 = scalar_select %p216, %s20, 0
      %s218 = scalar_lea.vmem %s2, %s217
      %p219 = pneg %p110
      %p220 = pneg %p107
      %p221 = pneg %p138
      %p222 = pneg %p135
      %p223 = scmp.lt.s32.totalorder %s19, 0
      %s224 = scalar_select %p223, %s19, 0
      %p225 = scmp.lt.s32.totalorder %s20, 0
      %s226 = scalar_select %p225, %s20, 0
      %s227 = sadd.s32 %s226, %s224
      %s228 = smul.addr %s227, 4
      %s229 = scalar_lea.vmem %s3, %s228
      %s230 = smul.u32 3, %s21
      %p231 = scmp.lt.s32.totalorder %s19, 0
      %s232 = scalar_select %p231, %s19, 0
      %p233 = scmp.lt.s32.totalorder %s230, 8
      %s234 = scalar_select %p233, %s230, 8
      %s235 = smul.addr %s232, 9
      %s236 = sadd.s32 %s234, %s235
      %s237 = smul.addr %s236, 4
      %s238 = scalar_lea.vmem %s0, %s237
      %s239 = smul.u32 3, %s21
      %s240 = smul.u32 48, %s21
      %p241 = scmp.lt.s32.totalorder %s240, 143
      %s242 = scalar_select %p241, %s240, 143
      %p243 = scmp.lt.s32.totalorder %s20, 0
      %s244 = scalar_select %p243, %s20, 0
      %s245 = sadd.s32 %s244, %s242
      %s246 = smul.addr %s245, 4
      %s247 = scalar_lea.vmem %s1, %s246
      %s248 = smul.u32 48, %s21
      %p249 = scmp.lt.s32.totalorder %s20, 0
      %s250 = scalar_select %p249, %s20, 0
      %s251 = scalar_lea.vmem %s2, %s250
      %p252 = scmp.lt.s32.totalorder %s19, 0
      %s253 = scalar_select %p252, %s19, 0
      %p254 = scmp.lt.s32.totalorder %s20, 0
      %s255 = scalar_select %p254, %s20, 0
      %s256 = sadd.s32 %s255, %s253
      %s257 = smul.addr %s256, 4
      %s258 = scalar_lea.vmem %s3, %s257
      %p259 = scmp.eq.s32.totalorder %s21, 0
      // Predicated region
      $region33: #{_lambda_.30} parent=31 // pred_check
        %p260 = pneg %p259
      $region34: #{_lambda_.30} parent=31 // pred_check_branch
        %262 = sbr.rel (%p260) target = $region36
      $region35: #{_lambda_.30} parent=31 // pred_region
        %263 = vst [vmem:[#allocation2] sm:$0xff] 0.0
      $region36: #{_lambda_.30} parent=31 // pred_fallthru
        _
      %v264 = vld [vmem:[#allocation2] sm:$0xff]
      %v265 = vld [vmem:[%s238] sm:$0xff]
      %v266 = vld [vmem:[%s238 + $0x8] sm:$0xf]
      %v267 = vld [vmem:[%s247] sm:$0xf]
      %v268 = vld [vmem:[%s247 + $0x4] sm:$0xf]
      %v269 = vld [vmem:[%s247 + $0x8] sm:$0xf]
      %v270 = vld [vmem:[%s247 + $0xc] sm:$0xf]
      %v271 = vld [vmem:[%s247 + $0x10] sm:$0xf]
      %v272 = vld [vmem:[%s247 + $0x14] sm:$0xf]
      %v273 = vld [vmem:[%s247 + $0x18] sm:$0xf]
      %v274 = vld [vmem:[%s247 + $0x1c] sm:$0xf]
      %v275 = vld [vmem:[%s247 + $0x20] sm:$0xf]
      %v276 = vld [vmem:[%s247 + $0x24] sm:$0xf]
      %v277 = vld [vmem:[%s247 + $0x28] sm:$0xf]
      %v278 = vld [vmem:[%s247 + $0x2c] sm:$0xf]
      %v279 = vld [vmem:[%s247 + $0x30] sm:$0xf]
      %v280 = vld [vmem:[%s247 + $0x34] sm:$0xf]
      %v281 = vld [vmem:[%s247 + $0x38] sm:$0xf]
      %v282 = vld [vmem:[%s247 + $0x3c] sm:$0xf]
      %v283 = vld [vmem:[%s247 + $0x40] sm:$0xf]
      %v284 = vld [vmem:[%s247 + $0x44] sm:$0xf]
      %v285 = vld [vmem:[%s247 + $0x48] sm:$0xf]
      %v286 = vld [vmem:[%s247 + $0x4c] sm:$0xf]
      %v287 = vld [vmem:[%s247 + $0x50] sm:$0xf]
      %v288 = vld [vmem:[%s247 + $0x54] sm:$0xf]
      %v289 = vld [vmem:[%s247 + $0x58] sm:$0xf]
      %v290 = vld [vmem:[%s247 + $0x5c] sm:$0xf]
      %v291 = vld [vmem:[%s247 + $0x60] sm:$0xf]
      %v292 = vld [vmem:[%s247 + $0x64] sm:$0xf]
      %v293 = vld [vmem:[%s247 + $0x68] sm:$0xf]
      %v294 = vld [vmem:[%s247 + $0x6c] sm:$0xf]
      %v295 = vld [vmem:[%s247 + $0x70] sm:$0xf]
      %v296 = vld [vmem:[%s247 + $0x74] sm:$0xf]
      %v297 = vld [vmem:[%s247 + $0x78] sm:$0xf]
      %v298 = vld [vmem:[%s247 + $0x7c] sm:$0xf]
      %v299 = vld [vmem:[%s247 + $0x80] sm:$0xf]
      %v300 = vld [vmem:[%s247 + $0x84] sm:$0xf]
      %v301 = vld [vmem:[%s247 + $0x88] sm:$0xf]
      %v302 = vld [vmem:[%s247 + $0x8c] sm:$0xf]
      %v303 = vld [vmem:[%s247 + $0x90] sm:$0xf]
      %v304 = vld [vmem:[%s247 + $0x94] sm:$0xf]
      %v305 = vld [vmem:[%s247 + $0x98] sm:$0xf]
      %v306 = vld [vmem:[%s247 + $0x9c] sm:$0xf]
      %v307 = vld [vmem:[%s247 + $0xa0] sm:$0xf]
      %v308 = vld [vmem:[%s247 + $0xa4] sm:$0xf]
      %v309 = vld [vmem:[%s247 + $0xa8] sm:$0xf]
      %v310 = vld [vmem:[%s247 + $0xac] sm:$0xf]
      %v311 = vld [vmem:[%s247 + $0xb0] sm:$0xf]
      %v312 = vld [vmem:[%s247 + $0xb4] sm:$0xf]
      %v313 = vld [vmem:[%s247 + $0xb8] sm:$0xf]
      %v314 = vld [vmem:[%s247 + $0xbc] sm:$0xf]
      %v317 = vunpack.c.l.b16 %v265
      %v318 = vunpack.c.h.b16 %v265
      %v319 = vunpack.c.l.b16 %v266
      %v320 = vpack.c.b16 %v317, %v317
      %v321 = vpack.c.b16 %v318, %v318
      %v322 = vpack.c.b16 %v319, %v319
      %v374 = vunpack.c.l.b16 %v267
      %v375 = vunpack.c.l.b16 %v268
      %v376 = vunpack.c.l.b16 %v269
      %v377 = vunpack.c.l.b16 %v270
      %v378 = vunpack.c.l.b16 %v271
      %v379 = vunpack.c.l.b16 %v272
      %v380 = vunpack.c.l.b16 %v273
      %v381 = vunpack.c.l.b16 %v274
      %v382 = vunpack.c.l.b16 %v275
      %v383 = vunpack.c.l.b16 %v276
      %v384 = vunpack.c.l.b16 %v277
      %v385 = vunpack.c.l.b16 %v278
      %v386 = vunpack.c.l.b16 %v279
      %v387 = vunpack.c.l.b16 %v280
      %v388 = vunpack.c.l.b16 %v281
      %v389 = vunpack.c.l.b16 %v282
      %v390 = vunpack.c.l.b16 %v283
      %v391 = vunpack.c.l.b16 %v284
      %v392 = vunpack.c.l.b16 %v285
      %v393 = vunpack.c.l.b16 %v286
      %v394 = vunpack.c.l.b16 %v287
      %v395 = vunpack.c.l.b16 %v288
      %v396 = vunpack.c.l.b16 %v289
      %v397 = vunpack.c.l.b16 %v290
      %v398 = vunpack.c.l.b16 %v291
      %v399 = vunpack.c.l.b16 %v292
      %v400 = vunpack.c.l.b16 %v293
      %v401 = vunpack.c.l.b16 %v294
      %v402 = vunpack.c.l.b16 %v295
      %v403 = vunpack.c.l.b16 %v296
      %v404 = vunpack.c.l.b16 %v297
      %v405 = vunpack.c.l.b16 %v298
      %v406 = vunpack.c.l.b16 %v299
      %v407 = vunpack.c.l.b16 %v300
      %v408 = vunpack.c.l.b16 %v301
      %v409 = vunpack.c.l.b16 %v302
      %v410 = vunpack.c.l.b16 %v303
      %v411 = vunpack.c.l.b16 %v304
      %v412 = vunpack.c.l.b16 %v305
      %v413 = vunpack.c.l.b16 %v306
      %v414 = vunpack.c.l.b16 %v307
      %v415 = vunpack.c.l.b16 %v308
      %v416 = vunpack.c.l.b16 %v309
      %v417 = vunpack.c.l.b16 %v310
      %v418 = vunpack.c.l.b16 %v311
      %v419 = vunpack.c.l.b16 %v312
      %v420 = vunpack.c.l.b16 %v313
      %v421 = vunpack.c.l.b16 %v314
      %v422 = vpack.c.b16 %v375, %v374
      %v423 = vpack.c.b16 %v377, %v376
      %v424 = vpack.c.b16 %v379, %v378
      %v425 = vpack.c.b16 %v381, %v380
      %v426 = vpack.c.b16 %v383, %v382
      %v427 = vpack.c.b16 %v385, %v384
      %v428 = vpack.c.b16 %v387, %v386
      %v429 = vpack.c.b16 %v389, %v388
      %v430 = vpack.c.b16 %v391, %v390
      %v431 = vpack.c.b16 %v393, %v392
      %v432 = vpack.c.b16 %v395, %v394
      %v433 = vpack.c.b16 %v397, %v396
      %v434 = vpack.c.b16 %v399, %v398
      %v435 = vpack.c.b16 %v401, %v400
      %v436 = vpack.c.b16 %v403, %v402
      %v437 = vpack.c.b16 %v405, %v404
      %v438 = vpack.c.b16 %v407, %v406
      %v439 = vpack.c.b16 %v409, %v408
      %v440 = vpack.c.b16 %v411, %v410
      %v441 = vpack.c.b16 %v413, %v412
      %v442 = vpack.c.b16 %v415, %v414
      %v443 = vpack.c.b16 %v417, %v416
      %v444 = vpack.c.b16 %v419, %v418
      %v445 = vpack.c.b16 %v421, %v420
      %470 = vmatpush.bf16.msra.mxu0 %v429
      %471 = vmatpush.bf16.msra.mxu0 %v428
      %472 = vmatpush.bf16.msra.mxu0 %v427
      %473 = vmatpush.bf16.msra.mxu0 %v426
      %474 = vmatpush.bf16.msra.mxu0 %v425
      %475 = vmatpush.bf16.msra.mxu0 %v424
      %476 = vmatpush.bf16.msra.mxu0 %v423
      %477 = vmatpush.bf16.msra.mxu0 %v422
      %478 = vmatmul.bf16.gmra.mxu0 %v320
      %v479 = vpop.f32.mrf.mxu0
      %v480 = vadd.f32 0.0, %v479
      %v481 = vpop.f32.mrf.mxu0
      %482 = vdwg.mxu0
      %483 = vmatpush.bf16.msra.mxu0 %v437
      %484 = vmatpush.bf16.msra.mxu0 %v436
      %485 = vmatpush.bf16.msra.mxu0 %v435
      %486 = vmatpush.bf16.msra.mxu0 %v434
      %487 = vmatpush.bf16.msra.mxu0 %v433
      %488 = vmatpush.bf16.msra.mxu0 %v432
      %489 = vmatpush.bf16.msra.mxu0 %v431
      %490 = vmatpush.bf16.msra.mxu0 %v430
      %491 = vmatmul.bf16.gmra.mxu0 %v321
      %v492 = vpop.f32.mrf.mxu0
      %v493 = vadd.f32 %v480, %v492
      %v494 = vpop.f32.mrf.mxu0
      %495 = vdwg.mxu0
      %496 = vmatpush.bf16.msra.mxu0 %v445
      %497 = vmatpush.bf16.msra.mxu0 %v444
      %498 = vmatpush.bf16.msra.mxu0 %v443
      %499 = vmatpush.bf16.msra.mxu0 %v442
      %500 = vmatpush.bf16.msra.mxu0 %v441
      %501 = vmatpush.bf16.msra.mxu0 %v440
      %502 = vmatpush.bf16.msra.mxu0 %v439
      %503 = vmatpush.bf16.msra.mxu0 %v438
      %504 = vmatmul.bf16.gmra.mxu0 %v322
      %v505 = vpop.f32.mrf.mxu0
      %v506 = vadd.f32 %v493, %v505
      %v507 = vpop.f32.mrf.mxu0
      %508 = vdwg.mxu0
      %v509 = vadd.f32 %v264, %v506
      %510 = vst [vmem:[#allocation2] sm:$0xff] %v509
      %p511 = scmp.eq.s32.totalorder %s21, 2
      // Predicated region
      $region37: #{_lambda_.30} parent=31 // pred_check
        %p512 = pneg %p511
      $region38: #{_lambda_.30} parent=31 // pred_check_branch
        %514 = sbr.rel (%p512) target = $region40
      $region39: #{_lambda_.30} parent=31 // pred_region
        %v515 = vld [vmem:[#allocation2] sm:$0xff]
        %v516 = vld [vmem:[%s251] sm:$0x1]
        %v518 = vperm.slane %v516, 0
        %v520 = vadd.f32 %v515, %v518
        %v521 = vmax.f32 %v520, 0.0
        %v522 = vpack.c.bf16 %v521, %v521
        %523 = vst [vmem:[%s258] sm:$0xf] %v522
      $region40: #{_lambda_.30} parent=31 // pred_fallthru
        _
      %p524 = scmp.lt.s32.totalorder %s19, 0
      %s525 = scalar_select %p524, %s19, 0
      %p526 = scmp.lt.s32.totalorder %s20, 0
      %s527 = scalar_select %p526, %s20, 0
      %s528 = sadd.s32 %s527, %s525
      %s529 = smul.addr %s528, 4
      %s530 = scalar_lea.vmem %s3, %s529
      // Predicated region
      $region41: #{_lambda_.30} parent=31 // pred_check
        %p531 = pneg %p135
      $region42: #{_lambda_.30} parent=31 // pred_check_branch
        %533 = sbr.rel (%p531) target = $region44
      $region43: #{_lambda_.30} parent=31 // pred_region
        _
      $region44: #{_lambda_.30} parent=31 // pred_fallthru
        _
      // Predicated region
      $region45: #{_lambda_.30} parent=31 // pred_check
        %p534 = pneg %p135
      $region46: #{_lambda_.30} parent=31 // pred_check_branch
        %536 = sbr.rel (%p534) target = $region48
      $region47: #{_lambda_.30} parent=31 // pred_region
        %p537 = scmp.lt.s32.totalorder %s19, 0
        %s538 = scalar_select %p537, %s19, 0
        %p539 = scmp.lt.s32.totalorder %s20, 0
        %s540 = scalar_select %p539, %s20, 0
        %s541 = sadd.s32 %s540, %s538
        %s542 = smul.addr %s541, 4
        %s543 = scalar_lea.vmem %s3, %s542
      $region48: #{_lambda_.30} parent=31 // pred_fallthru
        _
    $region32: #{_lambda_.30} parent=5 // pred_fallthru
      _
    %p544 = scmp.le.s32.totalorder 2, %s9
    // Predicated region
    $region49: #{_lambda_.30} parent=5 // pred_check
      %p545 = pneg %p544
    $region50: #{_lambda_.30} parent=5 // pred_check_branch
      %547 = sbr.rel (%p545) target = $region52
    $region51: #{_lambda_.30} parent=5 // pred_region
      %s548 = ssub.s32 %s9, 2
    $region52: #{_lambda_.30} parent=5 // pred_fallthru
      _
  $region6: #{_lambda_.30} parent=0 // loop_footer
    %s13 = sadd.s32 1, %s9
  $region7: #{_lambda_.30} parent=0 // loop_footer_branch
    %8 = sbr.rel target = $region3
  $region8: #{_lambda_.30} parent=0 // loop_exit
    _

// kernel: _lambda_.31
$region0: #{_lambda_.31}
  #allocation0 [shape = 'u32[]', space=smem, size = 0x4, offset = 0x4, fixed_abs, tag = 'smem constant byte address 0x4 - core index']
  #allocation1 [shape = 'u32[72,128]{1,0:T(1,128)}', space=vmem, size = 0x9000, scoped, tag = 'internal scratch']
  #allocation2 [shape = 'f32[8,128]{1,0:T(8,128)}', space=vmem, size = 0x1000, scoped, tag = 'scratch operand']
  %s0 = inlined_call_operand.vmem [shape: bf16[8,128], index: 0, kind: input, shape index: {}]
  %s1 = inlined_call_operand.vmem [shape: bf16[128,128], index: 1, kind: input, shape index: {}]
  %s2 = inlined_call_operand.vmem [shape: f32[1,128], index: 2, kind: input, shape index: {}]
  %s3 = inlined_call_operand.vmem [shape: bf16[8,128], index: 3, kind: output, shape index: {}]
  %s4 = sld [smem:[#allocation0]]
  $region30: #{_lambda_.31} parent=0
    _
  %s6 = ssub.s32 1, %s4
  %s7 = scalar_select 0, %s6, %s4
  // Predicated region
  $region2: #{_lambda_.31} parent=0 // pred_check
    _
  $region3: #{_lambda_.31} parent=0 // pred_check_branch
    %9 = sbr.rel (0) target = $region5
  $region4: #{_lambda_.31} parent=0 // pred_region
    _
  $region5: #{_lambda_.31} parent=0 // pred_fallthru
    _
  // Predicated region
  $region6: #{_lambda_.31} parent=0 // pred_check
    _
  $region7: #{_lambda_.31} parent=0 // pred_check_branch
    %11 = sbr.rel (0) target = $region9
  $region8: #{_lambda_.31} parent=0 // pred_region
    _
  $region9: #{_lambda_.31} parent=0 // pred_fallthru
    _
  // Predicated region
  $region10: #{_lambda_.31} parent=0 // pred_check
    _
  $region11: #{_lambda_.31} parent=0 // pred_check_branch
    %13 = sbr.rel (0) target = $region13
  $region12: #{_lambda_.31} parent=0 // pred_region
    _
  $region13: #{_lambda_.31} parent=0 // pred_fallthru
    _
  %p14 = scmp.eq.s32.totalorder 0, 0
  // Predicated region
  $region14: #{_lambda_.31} parent=0 // pred_check
    %p15 = pneg %p14
  $region15: #{_lambda_.31} parent=0 // pred_check_branch
    %17 = sbr.rel (%p15) target = $region17
  $region16: #{_lambda_.31} parent=0 // pred_region
    %18 = vst [vmem:[#allocation2] sm:$0xff] 0.0
  $region17: #{_lambda_.31} parent=0 // pred_fallthru
    _
  %v19 = vld [vmem:[#allocation2] sm:$0xff]
  %v20 = vld [vmem:[%s0] sm:$0xf]
  %v21 = vld [vmem:[%s1] sm:$0xf]
  %v22 = vld [vmem:[%s1 + $0x4] sm:$0xf]
  %v23 = vld [vmem:[%s1 + $0x8] sm:$0xf]
  %v24 = vld [vmem:[%s1 + $0xc] sm:$0xf]
  %v25 = vld [vmem:[%s1 + $0x10] sm:$0xf]
  %v26 = vld [vmem:[%s1 + $0x14] sm:$0xf]
  %v27 = vld [vmem:[%s1 + $0x18] sm:$0xf]
  %v28 = vld [vmem:[%s1 + $0x1c] sm:$0xf]
  %v29 = vld [vmem:[%s1 + $0x20] sm:$0xf]
  %v30 = vld [vmem:[%s1 + $0x24] sm:$0xf]
  %v31 = vld [vmem:[%s1 + $0x28] sm:$0xf]
  %v32 = vld [vmem:[%s1 + $0x2c] sm:$0xf]
  %v33 = vld [vmem:[%s1 + $0x30] sm:$0xf]
  %v34 = vld [vmem:[%s1 + $0x34] sm:$0xf]
  %v35 = vld [vmem:[%s1 + $0x38] sm:$0xf]
  %v36 = vld [vmem:[%s1 + $0x3c] sm:$0xf]
  %v53 = vunpack.c.l.b16 %v21
  %v54 = vunpack.c.l.b16 %v22
  %v55 = vunpack.c.l.b16 %v23
  %v56 = vunpack.c.l.b16 %v24
  %v57 = vunpack.c.l.b16 %v25
  %v58 = vunpack.c.l.b16 %v26
  %v59 = vunpack.c.l.b16 %v27
  %v60 = vunpack.c.l.b16 %v28
  %v61 = vunpack.c.l.b16 %v29
  %v62 = vunpack.c.l.b16 %v30
  %v63 = vunpack.c.l.b16 %v31
  %v64 = vunpack.c.l.b16 %v32
  %v65 = vunpack.c.l.b16 %v33
  %v66 = vunpack.c.l.b16 %v34
  %v67 = vunpack.c.l.b16 %v35
  %v68 = vunpack.c.l.b16 %v36
  %v69 = vpack.c.b16 %v54, %v53
  %v70 = vpack.c.b16 %v56, %v55
  %v71 = vpack.c.b16 %v58, %v57
  %v72 = vpack.c.b16 %v60, %v59
  %v73 = vpack.c.b16 %v62, %v61
  %v74 = vpack.c.b16 %v64, %v63
  %v75 = vpack.c.b16 %v66, %v65
  %v76 = vpack.c.b16 %v68, %v67
  %85 = vmatpush.bf16.msra.mxu0 %v76
  %86 = vmatpush.bf16.msra.mxu0 %v75
  %87 = vmatpush.bf16.msra.mxu0 %v74
  %88 = vmatpush.bf16.msra.mxu0 %v73
  %89 = vmatpush.bf16.msra.mxu0 %v72
  %90 = vmatpush.bf16.msra.mxu0 %v71
  %91 = vmatpush.bf16.msra.mxu0 %v70
  %92 = vmatpush.bf16.msra.mxu0 %v69
  %93 = vmatmul.bf16.gmra.mxu0 %v20
  %v94 = vpop.f32.mrf.mxu0
  %v95 = vadd.f32 0.0, %v94
  %v96 = vpop.f32.mrf.mxu0
  %97 = vdwg.mxu0
  %v98 = vadd.f32 %v19, %v95
  %99 = vst [vmem:[#allocation2] sm:$0xff] %v98
  // Predicated region
  $region18: #{_lambda_.31} parent=0 // pred_check
    %p100 = pneg %p14
  $region19: #{_lambda_.31} parent=0 // pred_check_branch
    %102 = sbr.rel (%p100) target = $region21
  $region20: #{_lambda_.31} parent=0 // pred_region
    %v103 = vld [vmem:[#allocation2] sm:$0xff]
    %v104 = vld [vmem:[%s2] sm:$0x1]
    %v106 = vperm.slane %v104, 0
    %v108 = vadd.f32 %v103, %v106
    %v109 = vpack.c.bf16 %v108, %v108
    %110 = vst [vmem:[%s3] sm:$0xf] %v109
  $region21: #{_lambda_.31} parent=0 // pred_fallthru
    _
  // Predicated region
  $region22: #{_lambda_.31} parent=0 // pred_check
    _
  $region23: #{_lambda_.31} parent=0 // pred_check_branch
    %112 = sbr.rel (0) target = $region25
  $region24: #{_lambda_.31} parent=0 // pred_region
    _
  $region25: #{_lambda_.31} parent=0 // pred_fallthru
    _
  // Predicated region
  $region26: #{_lambda_.31} parent=0 // pred_check
    _
  $region27: #{_lambda_.31} parent=0 // pred_check_branch
    %114 = sbr.rel (0) target = $region29
  $region28: #{_lambda_.31} parent=0 // pred_region
    _
  $region29: #{_lambda_.31} parent=0 // pred_fallthru
    _

// kernel: _lambda_.32
$region0: #{_lambda_.32}
  #allocation0 [shape = 'u32[]', space=smem, size = 0x4, offset = 0x4, fixed_abs, tag = 'smem constant byte address 0x4 - core index']
  #allocation1 [shape = 'u32[72,128]{1,0:T(1,128)}', space=vmem, size = 0x9000, scoped, tag = 'internal scratch']
  #allocation2 [shape = 'f32[8,128]{1,0:T(8,128)}', space=vmem, size = 0x1000, scoped, tag = 'scratch operand']
  %s0 = inlined_call_operand.vmem [shape: bf16[8,1152], index: 0, kind: input, shape index: {}]
  %s1 = inlined_call_operand.vmem [shape: bf16[1152,128], index: 1, kind: input, shape index: {}]
  %s2 = inlined_call_operand.vmem [shape: f32[1,128], index: 2, kind: input, shape index: {}]
  %s3 = inlined_call_operand.vmem [shape: bf16[8,128], index: 3, kind: input, shape index: {}]
  %s4 = inlined_call_operand.vmem [shape: bf16[8,128], index: 4, kind: output, shape index: {}]
  %s5 = sld [smem:[#allocation0]]
  $region57: #{_lambda_.32} parent=0
    _
  %s7 = ssub.s32 1, %s5
  %s8 = scalar_select 0, %s7, %s5
  loop: start=0, step=1, limit=5
  $region2: #{_lambda_.32} parent=0 // loop_pre_header
    _
  $region3: #{_lambda_.32} parent=0 // loop_header
    %s10 = sphi 0, %s14
    %p11 = scmp.ge.s32.totalorder %s10, 5
    %s17 = sphi 0, %s36
    %s18 = sphi 0, %s32
    %s19 = sphi 0, %s28
    %s20 = sphi 0, %s17
    %s21 = sphi 0, %s18
    %s22 = sphi 0, %s19
    %s23 = sphi 0, %s20
    %s24 = sphi 0, %s21
    %s25 = sphi 0, %s22
    %s41 = sphi 0, %s43
    %s44 = sphi 0, %s41
    %s45 = sphi 0, %s44
    %s61 = sphi 0, %s45
    %s69 = sphi 0, %s71
    %s72 = sphi 0, %s69
    %s73 = sphi 0, %s72
    %s89 = sphi 0, %s73
    %s95 = sphi 0, %s97
    %s98 = sphi 0, %s95
    %s99 = sphi 0, %s98
    %s115 = sphi 0, %s99
    %s123 = sphi 0, %s125
    %s126 = sphi 0, %s123
    %s127 = sphi 0, %s126
    %s143 = sphi 0, %s127
    %s151 = sphi 0, %s153
    %s154 = sphi 0, %s151
    %s155 = sphi 0, %s154
    %s171 = sphi 0, %s155
  $region4: #{_lambda_.32} parent=0 // loop_header_branch
    %13 = sbr.rel (%p11) target = $region8
  $region5: #{_lambda_.32} parent=0 // loop_body
    %s15 = ssub.s32 %s10, 1
    %s16 = ssub.s32 %s10, 2
    %s26 = sadd.s32 1, %s19
    %p27 = scmp.ge.s32.totalorder %s26, 3
    %s28 = scalar_select %p27, 0, %s26
    %s29 = sadd.s32 1, %s18
    %s30 = scalar_select %p27, %s29, %s18
    %p31 = scmp.ge.s32.totalorder %s30, 1
    %s32 = scalar_select %p31, 0, %s30
    %s33 = sadd.s32 1, %s17
    %s34 = scalar_select %p31, %s33, %s17
    %p35 = scmp.ge.s32.totalorder %s34, 1
    %s36 = scalar_select %p35, 0, %s34
    %s37 = ssub.s32 %s17, %s36
    %s38 = ssub.s32 %s19, %s28
    %s39 = sor.u32 %s37, %s38
    %p40 = scmp.eq.s32.totalorder %s39, 0
    %s42 = sadd.s32 %s41, 1
    %s43 = scalar_select %p40, %s41, %s42
    %p46 = pneg %p40
    %p47 = scmp.eq.s32.totalorder %s10, 2
    %p48 = por %p46, %p47
    %p49 = scmp.ne.s32.totalorder %s41, %s44
    %p50 = scmp.eq.s32.totalorder %s10, 0
    %p51 = por %p49, %p50
    %p52 = scmp.ne.s32.totalorder %s41, %s44
    %p53 = scmp.eq.s32.totalorder %s15, 2
    %p54 = por %p52, %p53
    %p55 = scmp.ne.s32.totalorder %s44, %s45
    %p56 = scmp.eq.s32.totalorder %s15, 0
    %p57 = por %p55, %p56
    %p58 = scmp.ne.s32.totalorder %s44, %s45
    %p59 = scmp.eq.s32.totalorder %s16, 2
    %p60 = por %p58, %p59
    %p62 = scmp.ne.s32.totalorder %s45, %s61
    %p63 = scmp.eq.s32.totalorder %s16, 0
    %p64 = por %p62, %p63
    %s65 = ssub.s32 %s19, %s28
    %s66 = ssub.s32 %s18, %s32
    %s67 = sor.u32 %s65, %s66
    %p68 = scmp.eq.s32.totalorder %s67, 0
    %s70 = sadd.s32 %s69, 1
    %s71 = scalar_select %p68, %s69, %s70
    %p74 = pneg %p68
    %p75 = scmp.eq.s32.totalorder %s10, 2
    %p76 = por %p74, %p75
    %p77 = scmp.ne.s32.totalorder %s69, %s72
    %p78 = scmp.eq.s32.totalorder %s10, 0
    %p79 = por %p77, %p78
    %p80 = scmp.ne.s32.totalorder %s69, %s72
    %p81 = scmp.eq.s32.totalorder %s15, 2
    %p82 = por %p80, %p81
    %p83 = scmp.ne.s32.totalorder %s72, %s73
    %p84 = scmp.eq.s32.totalorder %s15, 0
    %p85 = por %p83, %p84
    %p86 = scmp.ne.s32.totalorder %s72, %s73
    %p87 = scmp.eq.s32.totalorder %s16, 2
    %p88 = por %p86, %p87
    %p90 = scmp.ne.s32.totalorder %s73, %s89
    %p91 = scmp.eq.s32.totalorder %s16, 0
    %p92 = por %p90, %p91
    %s93 = ssub.s32 %s18, %s32
    %p94 = scmp.eq.s32.totalorder %s93, 0
    %s96 = sadd.s32 %s95, 1
    %s97 = scalar_select %p94, %s95, %s96
    %p100 = pneg %p94
    %p101 = scmp.eq.s32.totalorder %s10, 2
    %p102 = por %p100, %p101
    %p103 = scmp.ne.s32.totalorder %s95, %s98
    %p104 = scmp.eq.s32.totalorder %s10, 0
    %p105 = por %p103, %p104
    %p106 = scmp.ne.s32.totalorder %s95, %s98
    %p107 = scmp.eq.s32.totalorder %s15, 2
    %p108 = por %p106, %p107
    %p109 = scmp.ne.s32.totalorder %s98, %s99
    %p110 = scmp.eq.s32.totalorder %s15, 0
    %p111 = por %p109, %p110
    %p112 = scmp.ne.s32.totalorder %s98, %s99
    %p113 = scmp.eq.s32.totalorder %s16, 2
    %p114 = por %p112, %p113
    %p116 = scmp.ne.s32.totalorder %s99, %s115
    %p117 = scmp.eq.s32.totalorder %s16, 0
    %p118 = por %p116, %p117
    %s119 = ssub.s32 %s17, %s36
    %s120 = ssub.s32 %s18, %s32
    %s121 = sor.u32 %s119, %s120
    %p122 = scmp.eq.s32.totalorder %s121, 0
    %s124 = sadd.s32 %s123, 1
    %s125 = scalar_select %p122, %s123, %s124
    %p128 = pneg %p122
    %p129 = scmp.eq.s32.totalorder %s10, 2
    %p130 = por %p128, %p129
    %p131 = scmp.ne.s32.totalorder %s123, %s126
    %p132 = scmp.eq.s32.totalorder %s10, 0
    %p133 = por %p131, %p132
    %p134 = scmp.ne.s32.totalorder %s123, %s126
    %p135 = scmp.eq.s32.totalorder %s15, 2
    %p136 = por %p134, %p135
    %p137 = scmp.ne.s32.totalorder %s126, %s127
    %p138 = scmp.eq.s32.totalorder %s15, 0
    %p139 = por %p137, %p138
    %p140 = scmp.ne.s32.totalorder %s126, %s127
    %p141 = scmp.eq.s32.totalorder %s16, 2
    %p142 = por %p140, %p141
    %p144 = scmp.ne.s32.totalorder %s127, %s143
    %p145 = scmp.eq.s32.totalorder %s16, 0
    %p146 = por %p144, %p145
    %s147 = ssub.s32 %s17, %s36
    %s148 = ssub.s32 %s18, %s32
    %s149 = sor.u32 %s147, %s148
    %p150 = scmp.eq.s32.totalorder %s149, 0
    %s152 = sadd.s32 %s151, 1
    %s153 = scalar_select %p150, %s151, %s152
    %p156 = pneg %p150
    %p157 = scmp.eq.s32.totalorder %s10, 2
    %p158 = por %p156, %p157
    %p159 = scmp.ne.s32.totalorder %s151, %s154
    %p160 = scmp.eq.s32.totalorder %s10, 0
    %p161 = por %p159, %p160
    %p162 = scmp.ne.s32.totalorder %s151, %s154
    %p163 = scmp.eq.s32.totalorder %s15, 2
    %p164 = por %p162, %p163
    %p165 = scmp.ne.s32.totalorder %s154, %s155
    %p166 = scmp.eq.s32.totalorder %s15, 0
    %p167 = por %p165, %p166
    %p168 = scmp.ne.s32.totalorder %s154, %s155
    %p169 = scmp.eq.s32.totalorder %s16, 2
    %p170 = por %p168, %p169
    %p172 = scmp.ne.s32.totalorder %s155, %s171
    %p173 = scmp.eq.s32.totalorder %s16, 0
    %p174 = por %p172, %p173
    %p175 = scmp.le.s32.totalorder 1, %s10
    %p176 = scmp.lt.s32.totalorder %s10, 4
    %p177 = pnand %p175, %p176
    %p178 = pneg %p177
    // Predicated region
    $region9: #{_lambda_.32} parent=5 // pred_check
      _
    $region10: #{_lambda_.32} parent=5 // pred_check_branch
      %180 = sbr.rel (%p177) target = $region12
    $region11: #{_lambda_.32} parent=5 // pred_region
      %s181 = ssub.s32 %s10, 1
      // Predicated region
      $region13: #{_lambda_.32} parent=11 // pred_check
        %p182 = pneg %p111
      $region14: #{_lambda_.32} parent=11 // pred_check_branch
        %184 = sbr.rel (%p182) target = $region16
      $region15: #{_lambda_.32} parent=11 // pred_region
        %p185 = scmp.lt.s32.totalorder %s21, 0
        %s186 = scalar_select %p185, %s21, 0
        %s187 = scalar_lea.vmem %s2, %s186
      $region16: #{_lambda_.32} parent=11 // pred_fallthru
        _
      // Predicated region
      $region17: #{_lambda_.32} parent=11 // pred_check
        %p188 = pneg %p139
      $region18: #{_lambda_.32} parent=11 // pred_check_branch
        %190 = sbr.rel (%p188) target = $region20
      $region19: #{_lambda_.32} parent=11 // pred_region
        %p191 = scmp.lt.s32.totalorder %s20, 0
        %s192 = scalar_select %p191, %s20, 0
        %p193 = scmp.lt.s32.totalorder %s21, 0
        %s194 = scalar_select %p193, %s21, 0
        %s195 = sadd.s32 %s194, %s192
        %s196 = smul.addr %s195, 4
        %s197 = scalar_lea.vmem %s3, %s196
      $region20: #{_lambda_.32} parent=11 // pred_fallthru
        _
    $region12: #{_lambda_.32} parent=5 // pred_fallthru
      _
    %p198 = scmp.lt.s32.totalorder %s10, 3
    // Predicated region
    $region21: #{_lambda_.32} parent=5 // pred_check
      %p199 = pneg %p198
    $region22: #{_lambda_.32} parent=5 // pred_check_branch
      %201 = sbr.rel (%p199) target = $region24
    $region23: #{_lambda_.32} parent=5 // pred_region
      // Predicated region
      $region25: #{_lambda_.32} parent=23 // pred_check
        %p202 = pneg %p51
      $region26: #{_lambda_.32} parent=23 // pred_check_branch
        %204 = sbr.rel (%p202) target = $region28
      $region27: #{_lambda_.32} parent=23 // pred_region
        %s205 = smul.u32 3, %s19
        %p206 = scmp.lt.s32.totalorder %s17, 0
        %s207 = scalar_select %p206, %s17, 0
        %p208 = scmp.lt.s32.totalorder %s205, 8
        %s209 = scalar_select %p208, %s205, 8
        %s210 = smul.addr %s207, 9
        %s211 = sadd.s32 %s209, %s210
        %s212 = smul.addr %s211, 4
        %s213 = scalar_lea.vmem %s0, %s212
        %s214 = smul.u32 3, %s19
      $region28: #{_lambda_.32} parent=23 // pred_fallthru
        _
      // Predicated region
      $region29: #{_lambda_.32} parent=23 // pred_check
        %p215 = pneg %p79
      $region30: #{_lambda_.32} parent=23 // pred_check_branch
        %217 = sbr.rel (%p215) target = $region32
      $region31: #{_lambda_.32} parent=23 // pred_region
        %s218 = smul.u32 48, %s19
        %p219 = scmp.lt.s32.totalorder %s218, 143
        %s220 = scalar_select %p219, %s218, 143
        %p221 = scmp.lt.s32.totalorder %s18, 0
        %s222 = scalar_select %p221, %s18, 0
        %s223 = sadd.s32 %s222, %s220
        %s224 = smul.addr %s223, 4
        %s225 = scalar_lea.vmem %s1, %s224
        %s226 = smul.u32 48, %s19
      $region32: #{_lambda_.32} parent=23 // pred_fallthru
        _
    $region24: #{_lambda_.32} parent=5 // pred_fallthru
      _
    %p227 = scmp.le.s32.totalorder 1, %s10
    %p228 = scmp.lt.s32.totalorder %s10, 4
    %p229 = pnand %p227, %p228
    %p230 = pneg %p229
    // Predicated region
    $region33: #{_lambda_.32} parent=5 // pred_check
      _
    $region34: #{_lambda_.32} parent=5 // pred_check_branch
      %232 = sbr.rel (%p229) target = $region36
    $region35: #{_lambda_.32} parent=5 // pred_region
      %s233 = ssub.s32 %s10, 1
      %s234 = smul.u32 3, %s22
      %p235 = scmp.lt.s32.totalorder %s20, 0
      %s236 = scalar_select %p235, %s20, 0
      %p237 = scmp.lt.s32.totalorder %s234, 8
      %s238 = scalar_select %p237, %s234, 8
      %s239 = smul.addr %s236, 9
      %s240 = sadd.s32 %s238, %s239
      %s241 = smul.addr %s240, 4
      %s242 = scalar_lea.vmem %s0, %s241
      %p243 = pneg %p57
      %p244 = pneg %p54
      %s245 = smul.u32 48, %s22
      %p246 = scmp.lt.s32.totalorder %s245, 143
      %s247 = scalar_select %p246, %s245, 143
      %p248 = scmp.lt.s32.totalorder %s21, 0
      %s249 = scalar_select %p248, %s21, 0
      %s250 = sadd.s32 %s249, %s247
      %s251 = smul.addr %s250, 4
      %s252 = scalar_lea.vmem %s1, %s251
      %p253 = pneg %p85
      %p254 = pneg %p82
      %p255 = scmp.lt.s32.totalorder %s21, 0
      %s256 = scalar_select %p255, %s21, 0
      %s257 = scalar_lea.vmem %s2, %s256
      %p258 = pneg %p111
      %p259 = pneg %p108
      %p260 = scmp.lt.s32.totalorder %s20, 0
      %s261 = scalar_select %p260, %s20, 0
      %p262 = scmp.lt.s32.totalorder %s21, 0
      %s263 = scalar_select %p262, %s21, 0
      %s264 = sadd.s32 %s263, %s261
      %s265 = smul.addr %s264, 4
      %s266 = scalar_lea.vmem %s3, %s265
      %p267 = pneg %p139
      %p268 = pneg %p136
      %p269 = pneg %p167
      %p270 = pneg %p164
      %p271 = scmp.lt.s32.totalorder %s20, 0
      %s272 = scalar_select %p271, %s20, 0
      %p273 = scmp.lt.s32.totalorder %s21, 0
      %s274 = scalar_select %p273, %s21, 0
      %s275 = sadd.s32 %s274, %s272
      %s276 = smul.addr %s275, 4
      %s277 = scalar_lea.vmem %s4, %s276
      %s278 = smul.u32 3, %s22
      %p279 = scmp.lt.s32.totalorder %s20, 0
      %s280 = scalar_select %p279, %s20, 0
      %p281 = scmp.lt.s32.totalorder %s278, 8
      %s282 = scalar_select %p281, %s278, 8
      %s283 = smul.addr %s280, 9
      %s284 = sadd.s32 %s282, %s283
      %s285 = smul.addr %s284, 4
      %s286 = scalar_lea.vmem %s0, %s285
      %s287 = smul.u32 3, %s22
      %s288 = smul.u32 48, %s22
      %p289 = scmp.lt.s32.totalorder %s288, 143
      %s290 = scalar_select %p289, %s288, 143
      %p291 = scmp.lt.s32.totalorder %s21, 0
      %s292 = scalar_select %p291, %s21, 0
      %s293 = sadd.s32 %s292, %s290
      %s294 = smul.addr %s293, 4
      %s295 = scalar_lea.vmem %s1, %s294
      %s296 = smul.u32 48, %s22
      %p297 = scmp.lt.s32.totalorder %s21, 0
      %s298 = scalar_select %p297, %s21, 0
      %s299 = scalar_lea.vmem %s2, %s298
      %p300 = scmp.lt.s32.totalorder %s20, 0
      %s301 = scalar_select %p300, %s20, 0
      %p302 = scmp.lt.s32.totalorder %s21, 0
      %s303 = scalar_select %p302, %s21, 0
      %s304 = sadd.s32 %s303, %s301
      %s305 = smul.addr %s304, 4
      %s306 = scalar_lea.vmem %s3, %s305
      %p307 = scmp.lt.s32.totalorder %s20, 0
      %s308 = scalar_select %p307, %s20, 0
      %p309 = scmp.lt.s32.totalorder %s21, 0
      %s310 = scalar_select %p309, %s21, 0
      %s311 = sadd.s32 %s310, %s308
      %s312 = smul.addr %s311, 4
      %s313 = scalar_lea.vmem %s4, %s312
      %p314 = scmp.eq.s32.totalorder %s22, 0
      // Predicated region
      $region37: #{_lambda_.32} parent=35 // pred_check
        %p315 = pneg %p314
      $region38: #{_lambda_.32} parent=35 // pred_check_branch
        %317 = sbr.rel (%p315) target = $region40
      $region39: #{_lambda_.32} parent=35 // pred_region
        %318 = vst [vmem:[#allocation2] sm:$0xff] 0.0
      $region40: #{_lambda_.32} parent=35 // pred_fallthru
        _
      %v319 = vld [vmem:[#allocation2] sm:$0xff]
      %v320 = vld [vmem:[%s286] sm:$0xff]
      %v321 = vld [vmem:[%s286 + $0x8] sm:$0xf]
      %v322 = vld [vmem:[%s295] sm:$0xf]
      %v323 = vld [vmem:[%s295 + $0x4] sm:$0xf]
      %v324 = vld [vmem:[%s295 + $0x8] sm:$0xf]
      %v325 = vld [vmem:[%s295 + $0xc] sm:$0xf]
      %v326 = vld [vmem:[%s295 + $0x10] sm:$0xf]
      %v327 = vld [vmem:[%s295 + $0x14] sm:$0xf]
      %v328 = vld [vmem:[%s295 + $0x18] sm:$0xf]
      %v329 = vld [vmem:[%s295 + $0x1c] sm:$0xf]
      %v330 = vld [vmem:[%s295 + $0x20] sm:$0xf]
      %v331 = vld [vmem:[%s295 + $0x24] sm:$0xf]
      %v332 = vld [vmem:[%s295 + $0x28] sm:$0xf]
      %v333 = vld [vmem:[%s295 + $0x2c] sm:$0xf]
      %v334 = vld [vmem:[%s295 + $0x30] sm:$0xf]
      %v335 = vld [vmem:[%s295 + $0x34] sm:$0xf]
      %v336 = vld [vmem:[%s295 + $0x38] sm:$0xf]
      %v337 = vld [vmem:[%s295 + $0x3c] sm:$0xf]
      %v338 = vld [vmem:[%s295 + $0x40] sm:$0xf]
      %v339 = vld [vmem:[%s295 + $0x44] sm:$0xf]
      %v340 = vld [vmem:[%s295 + $0x48] sm:$0xf]
      %v341 = vld [vmem:[%s295 + $0x4c] sm:$0xf]
      %v342 = vld [vmem:[%s295 + $0x50] sm:$0xf]
      %v343 = vld [vmem:[%s295 + $0x54] sm:$0xf]
      %v344 = vld [vmem:[%s295 + $0x58] sm:$0xf]
      %v345 = vld [vmem:[%s295 + $0x5c] sm:$0xf]
      %v346 = vld [vmem:[%s295 + $0x60] sm:$0xf]
      %v347 = vld [vmem:[%s295 + $0x64] sm:$0xf]
      %v348 = vld [vmem:[%s295 + $0x68] sm:$0xf]
      %v349 = vld [vmem:[%s295 + $0x6c] sm:$0xf]
      %v350 = vld [vmem:[%s295 + $0x70] sm:$0xf]
      %v351 = vld [vmem:[%s295 + $0x74] sm:$0xf]
      %v352 = vld [vmem:[%s295 + $0x78] sm:$0xf]
      %v353 = vld [vmem:[%s295 + $0x7c] sm:$0xf]
      %v354 = vld [vmem:[%s295 + $0x80] sm:$0xf]
      %v355 = vld [vmem:[%s295 + $0x84] sm:$0xf]
      %v356 = vld [vmem:[%s295 + $0x88] sm:$0xf]
      %v357 = vld [vmem:[%s295 + $0x8c] sm:$0xf]
      %v358 = vld [vmem:[%s295 + $0x90] sm:$0xf]
      %v359 = vld [vmem:[%s295 + $0x94] sm:$0xf]
      %v360 = vld [vmem:[%s295 + $0x98] sm:$0xf]
      %v361 = vld [vmem:[%s295 + $0x9c] sm:$0xf]
      %v362 = vld [vmem:[%s295 + $0xa0] sm:$0xf]
      %v363 = vld [vmem:[%s295 + $0xa4] sm:$0xf]
      %v364 = vld [vmem:[%s295 + $0xa8] sm:$0xf]
      %v365 = vld [vmem:[%s295 + $0xac] sm:$0xf]
      %v366 = vld [vmem:[%s295 + $0xb0] sm:$0xf]
      %v367 = vld [vmem:[%s295 + $0xb4] sm:$0xf]
      %v368 = vld [vmem:[%s295 + $0xb8] sm:$0xf]
      %v369 = vld [vmem:[%s295 + $0xbc] sm:$0xf]
      %v372 = vunpack.c.l.b16 %v320
      %v373 = vunpack.c.h.b16 %v320
      %v374 = vunpack.c.l.b16 %v321
      %v375 = vpack.c.b16 %v372, %v372
      %v376 = vpack.c.b16 %v373, %v373
      %v377 = vpack.c.b16 %v374, %v374
      %v429 = vunpack.c.l.b16 %v322
      %v430 = vunpack.c.l.b16 %v323
      %v431 = vunpack.c.l.b16 %v324
      %v432 = vunpack.c.l.b16 %v325
      %v433 = vunpack.c.l.b16 %v326
      %v434 = vunpack.c.l.b16 %v327
      %v435 = vunpack.c.l.b16 %v328
      %v436 = vunpack.c.l.b16 %v329
      %v437 = vunpack.c.l.b16 %v330
      %v438 = vunpack.c.l.b16 %v331
      %v439 = vunpack.c.l.b16 %v332
      %v440 = vunpack.c.l.b16 %v333
      %v441 = vunpack.c.l.b16 %v334
      %v442 = vunpack.c.l.b16 %v335
      %v443 = vunpack.c.l.b16 %v336
      %v444 = vunpack.c.l.b16 %v337
      %v445 = vunpack.c.l.b16 %v338
      %v446 = vunpack.c.l.b16 %v339
      %v447 = vunpack.c.l.b16 %v340
      %v448 = vunpack.c.l.b16 %v341
      %v449 = vunpack.c.l.b16 %v342
      %v450 = vunpack.c.l.b16 %v343
      %v451 = vunpack.c.l.b16 %v344
      %v452 = vunpack.c.l.b16 %v345
      %v453 = vunpack.c.l.b16 %v346
      %v454 = vunpack.c.l.b16 %v347
      %v455 = vunpack.c.l.b16 %v348
      %v456 = vunpack.c.l.b16 %v349
      %v457 = vunpack.c.l.b16 %v350
      %v458 = vunpack.c.l.b16 %v351
      %v459 = vunpack.c.l.b16 %v352
      %v460 = vunpack.c.l.b16 %v353
      %v461 = vunpack.c.l.b16 %v354
      %v462 = vunpack.c.l.b16 %v355
      %v463 = vunpack.c.l.b16 %v356
      %v464 = vunpack.c.l.b16 %v357
      %v465 = vunpack.c.l.b16 %v358
      %v466 = vunpack.c.l.b16 %v359
      %v467 = vunpack.c.l.b16 %v360
      %v468 = vunpack.c.l.b16 %v361
      %v469 = vunpack.c.l.b16 %v362
      %v470 = vunpack.c.l.b16 %v363
      %v471 = vunpack.c.l.b16 %v364
      %v472 = vunpack.c.l.b16 %v365
      %v473 = vunpack.c.l.b16 %v366
      %v474 = vunpack.c.l.b16 %v367
      %v475 = vunpack.c.l.b16 %v368
      %v476 = vunpack.c.l.b16 %v369
      %v477 = vpack.c.b16 %v430, %v429
      %v478 = vpack.c.b16 %v432, %v431
      %v479 = vpack.c.b16 %v434, %v433
      %v480 = vpack.c.b16 %v436, %v435
      %v481 = vpack.c.b16 %v438, %v437
      %v482 = vpack.c.b16 %v440, %v439
      %v483 = vpack.c.b16 %v442, %v441
      %v484 = vpack.c.b16 %v444, %v443
      %v485 = vpack.c.b16 %v446, %v445
      %v486 = vpack.c.b16 %v448, %v447
      %v487 = vpack.c.b16 %v450, %v449
      %v488 = vpack.c.b16 %v452, %v451
      %v489 = vpack.c.b16 %v454, %v453
      %v490 = vpack.c.b16 %v456, %v455
      %v491 = vpack.c.b16 %v458, %v457
      %v492 = vpack.c.b16 %v460, %v459
      %v493 = vpack.c.b16 %v462, %v461
      %v494 = vpack.c.b16 %v464, %v463
      %v495 = vpack.c.b16 %v466, %v465
      %v496 = vpack.c.b16 %v468, %v467
      %v497 = vpack.c.b16 %v470, %v469
      %v498 = vpack.c.b16 %v472, %v471
      %v499 = vpack.c.b16 %v474, %v473
      %v500 = vpack.c.b16 %v476, %v475
      %525 = vmatpush.bf16.msra.mxu0 %v484
      %526 = vmatpush.bf16.msra.mxu0 %v483
      %527 = vmatpush.bf16.msra.mxu0 %v482
      %528 = vmatpush.bf16.msra.mxu0 %v481
      %529 = vmatpush.bf16.msra.mxu0 %v480
      %530 = vmatpush.bf16.msra.mxu0 %v479
      %531 = vmatpush.bf16.msra.mxu0 %v478
      %532 = vmatpush.bf16.msra.mxu0 %v477
      %533 = vmatmul.bf16.gmra.mxu0 %v375
      %v534 = vpop.f32.mrf.mxu0
      %v535 = vadd.f32 0.0, %v534
      %v536 = vpop.f32.mrf.mxu0
      %537 = vdwg.mxu0
      %538 = vmatpush.bf16.msra.mxu0 %v492
      %539 = vmatpush.bf16.msra.mxu0 %v491
      %540 = vmatpush.bf16.msra.mxu0 %v490
      %541 = vmatpush.bf16.msra.mxu0 %v489
      %542 = vmatpush.bf16.msra.mxu0 %v488
      %543 = vmatpush.bf16.msra.mxu0 %v487
      %544 = vmatpush.bf16.msra.mxu0 %v486
      %545 = vmatpush.bf16.msra.mxu0 %v485
      %546 = vmatmul.bf16.gmra.mxu0 %v376
      %v547 = vpop.f32.mrf.mxu0
      %v548 = vadd.f32 %v535, %v547
      %v549 = vpop.f32.mrf.mxu0
      %550 = vdwg.mxu0
      %551 = vmatpush.bf16.msra.mxu0 %v500
      %552 = vmatpush.bf16.msra.mxu0 %v499
      %553 = vmatpush.bf16.msra.mxu0 %v498
      %554 = vmatpush.bf16.msra.mxu0 %v497
      %555 = vmatpush.bf16.msra.mxu0 %v496
      %556 = vmatpush.bf16.msra.mxu0 %v495
      %557 = vmatpush.bf16.msra.mxu0 %v494
      %558 = vmatpush.bf16.msra.mxu0 %v493
      %559 = vmatmul.bf16.gmra.mxu0 %v377
      %v560 = vpop.f32.mrf.mxu0
      %v561 = vadd.f32 %v548, %v560
      %v562 = vpop.f32.mrf.mxu0
      %563 = vdwg.mxu0
      %v564 = vadd.f32 %v319, %v561
      %565 = vst [vmem:[#allocation2] sm:$0xff] %v564
      %p566 = scmp.eq.s32.totalorder %s22, 2
      // Predicated region
      $region41: #{_lambda_.32} parent=35 // pred_check
        %p567 = pneg %p566
      $region42: #{_lambda_.32} parent=35 // pred_check_branch
        %569 = sbr.rel (%p567) target = $region44
      $region43: #{_lambda_.32} parent=35 // pred_region
        %v570 = vld [vmem:[#allocation2] sm:$0xff]
        %v571 = vld [vmem:[%s299] sm:$0x1]
        %v573 = vperm.slane %v571, 0
        %v575 = vadd.f32 %v570, %v573
        %v576 = vld [vmem:[%s306] sm:$0xf]
        %v577 = vunpack.c.l.bf16 %v576
        %v578 = vadd.f32 %v575, %v577
        %v579 = vmax.f32 %v578, 0.0
        %v580 = vpack.c.bf16 %v579, %v579
        %581 = vst [vmem:[%s313] sm:$0xf] %v580
      $region44: #{_lambda_.32} parent=35 // pred_fallthru
        _
      %p582 = scmp.lt.s32.totalorder %s20, 0
      %s583 = scalar_select %p582, %s20, 0
      %p584 = scmp.lt.s32.totalorder %s21, 0
      %s585 = scalar_select %p584, %s21, 0
      %s586 = sadd.s32 %s585, %s583
      %s587 = smul.addr %s586, 4
      %s588 = scalar_lea.vmem %s4, %s587
      // Predicated region
      $region45: #{_lambda_.32} parent=35 // pred_check
        %p589 = pneg %p164
      $region46: #{_lambda_.32} parent=35 // pred_check_branch
        %591 = sbr.rel (%p589) target = $region48
      $region47: #{_lambda_.32} parent=35 // pred_region
        _
      $region48: #{_lambda_.32} parent=35 // pred_fallthru
        _
      // Predicated region
      $region49: #{_lambda_.32} parent=35 // pred_check
        %p592 = pneg %p164
      $region50: #{_lambda_.32} parent=35 // pred_check_branch
        %594 = sbr.rel (%p592) target = $region52
      $region51: #{_lambda_.32} parent=35 // pred_region
        %p595 = scmp.lt.s32.totalorder %s20, 0
        %s596 = scalar_select %p595, %s20, 0
        %p597 = scmp.lt.s32.totalorder %s21, 0
        %s598 = scalar_select %p597, %s21, 0
        %s599 = sadd.s32 %s598, %s596
        %s600 = smul.addr %s599, 4
        %s601 = scalar_lea.vmem %s4, %s600
      $region52: #{_lambda_.32} parent=35 // pred_fallthru
        _
    $region36: #{_lambda_.32} parent=5 // pred_fallthru
      _
    %p602 = scmp.le.s32.totalorder 2, %s10
    // Predicated region
    $region53: #{_lambda_.32} parent=5 // pred_check
      %p603 = pneg %p602
    $region54: #{_lambda_.32} parent=5 // pred_check_branch
      %605 = sbr.rel (%p603) target = $region56
    $region55: #{_lambda_.32} parent=5 // pred_region
      %s606 = ssub.s32 %s10, 2
    $region56: #{_lambda_.32} parent=5 // pred_fallthru
      _
  $region6: #{_lambda_.32} parent=0 // loop_footer
    %s14 = sadd.s32 1, %s10
  $region7: #{_lambda_.32} parent=0 // loop_footer_branch
    %9 = sbr.rel target = $region3
  $region8: #{_lambda_.32} parent=0 // loop_exit
    _

</llo_original>
